<compile_context>
chip_gen: v7x
topology: tpu7x:2x2x1
jax: 0.10.0
libtpu: 0.0.40
codegen_flags: <defaults>
</compile_context>

<pallas_src>
import functools

import jax
import jax.numpy as jnp
from jax.experimental import pallas as pl
from jax.experimental.pallas import tpu as pltpu

ALPHA = 0.3     # membrane decay (pa_dict['alpha'])
VTH = 0.3       # spike threshold (pa_dict['Vthres'])
VRESET = 0.0    # reset potential (pa_dict['Vreset'])

_LANE = 128
_CONV_ROW_TILE = 1024
_VMEM_LIMIT = 32 * 1024 * 1024


def _round_up(x, m):
    return ((x + m - 1) // m) * m


def _pick_tile(total, candidates):
    """Largest candidate that divides `total`; fall back to the full extent."""
    for c in candidates:
        if c <= total and total % c == 0:
            return c
    return total


# ---------------------------------------------------------------------------
# Kernel 1: conv2d as im2col matmul (+ bias) on the MXU, bf16 in / f32 acc
# ---------------------------------------------------------------------------
def _conv_matmul_kernel(p_ref, w_ref, b_ref, o_ref):
    # p_ref: (TILE, K*K*Cin) bf16   w_ref: (K*K*Cin, Cpad) bf16   b_ref: (1, Cpad) f32
    acc = jnp.dot(p_ref[...], w_ref[...], preferred_element_type=jnp.float32)
    o_ref[...] = (acc + b_ref[...]).astype(o_ref.dtype)


def conv2d_pallas(x_nhwc, w_oihw, bias, *, padding, stride):
    """x_nhwc: (N, H, W, Cin); w_oihw: PyTorch conv weight (Cout, Cin, kH, kW).

    Returns (out_flat, (ho, wo, cpad)) where out_flat is (N*Ho*Wo, Cpad) bf16,
    rows ordered (n, ho, wo), and channels [cout:cpad] are zero padding.
    """
    n, h, w, cin = x_nhwc.shape
    cout, _, kh, kw = w_oihw.shape
    ho = (h + 2 * padding - kh) // stride + 1
    wo = (w + 2 * padding - kw) // stride + 1
    cpad = _round_up(cout, _LANE)

    xp = jnp.pad(x_nhwc, ((0, 0), (padding, padding), (padding, padding), (0, 0)))

    # im2col (glue, plain JAX): columns ordered (kh, kw, c_in); bf16 to halve DMA.
    cols = []
    for di in range(kh):
        for dj in range(kw):
            cols.append(xp[:, di:di + ho * stride:stride,
                           dj:dj + wo * stride:stride, :])
    patches = jnp.stack(cols, axis=3)                       # (N, Ho, Wo, kh*kw, Cin)
    rows = n * ho * wo
    kcols = kh * kw * cin
    patches = patches.reshape(rows, kcols).astype(jnp.bfloat16)

    rows_pad = _round_up(rows, _CONV_ROW_TILE)
    if rows_pad != rows:
        patches = jnp.pad(patches, ((0, rows_pad - rows), (0, 0)))

    # weight[(kh,kw,ci), co] = w_oihw[co, ci, kh, kw]; zero-pad Cout -> 128 lanes.
    w_mat = jnp.transpose(w_oihw, (2, 3, 1, 0)).reshape(kcols, cout)
    w_mat = jnp.pad(w_mat, ((0, 0), (0, cpad - cout))).astype(jnp.bfloat16)
    b_mat = jnp.pad(bias.reshape(1, cout).astype(jnp.float32),
                    ((0, 0), (0, cpad - cout)))

    grid = (rows_pad // _CONV_ROW_TILE,)
    out = pl.pallas_call(
        _conv_matmul_kernel,
        out_shape=jax.ShapeDtypeStruct((rows_pad, cpad), jnp.bfloat16),
        grid=grid,
        in_specs=[
            pl.BlockSpec((_CONV_ROW_TILE, kcols), lambda i: (i, 0)),
            pl.BlockSpec((kcols, cpad), lambda i: (0, 0)),
            pl.BlockSpec((1, cpad), lambda i: (0, 0)),
        ],
        out_specs=pl.BlockSpec((_CONV_ROW_TILE, cpad), lambda i: (i, 0)),
        compiler_params=pltpu.CompilerParams(
            dimension_semantics=("parallel",),
            vmem_limit_bytes=_VMEM_LIMIT),
    )(patches, w_mat, b_mat)
    return out[:rows], (ho, wo, cpad)


# ---------------------------------------------------------------------------
# Kernel 2: LIF recurrence (ConvIFCell) with the temporal gate folded in.
#   Blocks: gate (T, 1, Cpad) f32, x/out (T, HW_tile, Cpad) bf16.
# ---------------------------------------------------------------------------
def _att_lif_kernel(gate_ref, x_ref, o_ref, *, t_steps):
    u = jnp.zeros(x_ref.shape[1:], jnp.float32)             # (HW_tile, Cpad)
    for t in range(t_steps):                                # small static T -> unrolled
        # gate folded per timestep; no gated copy of the slab is materialized.
        u = ALPHA * u + x_ref[t].astype(jnp.float32) * gate_ref[t]
        s = (u >= VTH).astype(jnp.float32)
        u = jnp.where(s > 0.0, VRESET, u)
        o_ref[t] = s.astype(o_ref.dtype)                    # bf16 0/1, lane-dense store


def att_lif_pallas(gate_btc, x_bthc):
    b, t_steps, hw, cpad = x_bthc.shape
    tile_r = _pick_tile(hw, (1024, 512, 256, 128, 64, 32, 16, 8))
    kernel = functools.partial(_att_lif_kernel, t_steps=t_steps)
    return pl.pallas_call(
        kernel,
        out_shape=jax.ShapeDtypeStruct((b, t_steps, hw, cpad), jnp.bfloat16),
        grid=(b, hw // tile_r),
        in_specs=[
            pl.BlockSpec((None, t_steps, 1, cpad), lambda bi, mi: (bi, 0, 0, 0)),
            pl.BlockSpec((None, t_steps, tile_r, cpad), lambda bi, mi: (bi, 0, mi, 0)),
        ],
        out_specs=pl.BlockSpec((None, t_steps, tile_r, cpad),
                               lambda bi, mi: (bi, 0, mi, 0)),
        compiler_params=pltpu.CompilerParams(
            dimension_semantics=("parallel", "parallel"),
            vmem_limit_bytes=_VMEM_LIMIT),
    )(gate_btc, x_bthc)


# ---------------------------------------------------------------------------
# Full ConvAttLIF forward (onlyLast=False, useBatchNorm=False, pooling=1)
# ---------------------------------------------------------------------------
def conv_att_lif_forward(data, conv_w, conv_b, att_w1, att_w2, *, padding, stride):
    b, t, cin, h, w = data.shape
    cout = conv_w.shape[0]

    # (B, T, C, H, W) -> (B*T, H, W, C)
    x = jnp.transpose(data, (0, 1, 3, 4, 2)).reshape(b * t, h, w, cin)
    conv_flat, (ho, wo, cpad) = conv2d_pallas(
        x, conv_w, conv_b, padding=padding, stride=stride)
    hw = ho * wo
    conv4 = conv_flat.reshape(b, t, hw, cpad)                 # bf16, rows (b,t,hw)

    # --- temporal attention scores (Tlayer): tiny (B, T) -> plain JAX dots ---
    real = conv4[..., :cout].astype(jnp.float32)              # exclude zero-padded chans
    avg = jnp.mean(real, axis=(2, 3))                         # (B, T)
    mx = jnp.max(real, axis=(2, 3))                           # (B, T)

    def shared_mlp(y):                                        # Linear(T,T//r)->ReLU->Linear(T//r,T)
        return jnp.maximum(y @ att_w1.T, 0.0) @ att_w2.T

    score = jax.nn.sigmoid(shared_mlp(avg) + shared_mlp(mx))  # (B, T) f32

    # lane-replicated gate so the kernel multiplies a (1, Cpad) row (no relayout)
    gate_btc = jnp.broadcast_to(score[:, :, None, None].astype(jnp.float32),
                                (b, t, 1, cpad))

    # --- LIF recurrence, tiled over (B, HW) ---
    spikes = att_lif_pallas(gate_btc, conv4)                  # (B, T, HW, Cpad) bf16
    spikes = spikes.reshape(b, t, ho, wo, cpad)[..., :cout]   # drop channel padding
    # (B, T, Ho, Wo, C) -> (B, T, C, Ho, Wo); cast fuses with the transpose copy.
    return jnp.transpose(spikes, (0, 1, 4, 2, 3)).astype(jnp.float32)


if __name__ == "__main__":
    # Small shapes consistent with the module: batch=2, T=8, C_in=4, 16x16,
    # hidden=32, kernel=3, padding=1, stride=1, reduction=4.
    B, T, CIN, H, W = 2, 8, 4, 16, 16
    HIDDEN, K, PAD, STRIDE = 32, 3, 1, 1
    REDUCTION = 4
    TR = T // REDUCTION

    key = jax.random.PRNGKey(0)
    k1, k2, k3, k4, k5 = jax.random.split(key, 5)
    data = jax.random.normal(k1, (B, T, CIN, H, W), jnp.float32)
    conv_w = 0.1 * jax.random.normal(k2, (HIDDEN, CIN, K, K), jnp.float32)
    conv_b = 0.1 * jax.random.normal(k3, (HIDDEN,), jnp.float32)
    att_w1 = 0.2 * jax.random.normal(k4, (TR, T), jnp.float32)   # Linear(T, T//r)
    att_w2 = 0.2 * jax.random.normal(k5, (T, TR), jnp.float32)   # Linear(T//r, T)

    fwd = jax.jit(functools.partial(conv_att_lif_forward, padding=PAD, stride=STRIDE))
    out = jax.block_until_ready(fwd(data, conv_w, conv_b, att_w1, att_w2))

    assert out.shape == (B, T, HIDDEN, H, W), out.shape
    assert out.dtype == jnp.float32
    # LIF output (mode_select='spike') must be binary spikes.
    assert bool(jnp.all((out == 0.0) | (out == 1.0)))
    print("KERNEL_OK")
</pallas_src>

<mosaic_0001>
module attributes {stable_mosaic.version = 11 : i64} {
  func.func @_conv_matmul_kernel(%arg0: i32, %arg1: memref<1024x36xbf16, #tpu.memory_space<vmem>>, %arg2: memref<36x128xbf16, #tpu.memory_space<vmem>>, %arg3: memref<1x128xf32, #tpu.memory_space<vmem>>, %arg4: memref<1024x128xbf16, #tpu.memory_space<vmem>>) attributes {dimension_semantics = [#tpu.dimension_semantics<parallel>], iteration_bounds = array<i64: 4>, scalar_prefetch = 0 : i64, scratch_operands = 0 : i64, tpu.core_type = #tpu.core_type<tc>, window_params = [{transform_indices = @transform_0, window_bounds = array<i64: 1024, 36>}, {pipeline_mode = #tpu.pipeline_mode<synchronous>, transform_indices = @transform_1, window_bounds = array<i64: 36, 128>}, {pipeline_mode = #tpu.pipeline_mode<synchronous>, transform_indices = @transform_2, window_bounds = array<i64: 1, 128>}, {transform_indices = @transform_3, window_bounds = array<i64: 1024, 128>}]} {
    %c0 = arith.constant 0 : index
    %c0_0 = arith.constant 0 : index
    %0 = vector.load %arg1[%c0, %c0_0] : memref<1024x36xbf16, #tpu.memory_space<vmem>>, vector<1024x36xbf16>
    %c0_1 = arith.constant 0 : index
    %c0_2 = arith.constant 0 : index
    %1 = vector.load %arg2[%c0_1, %c0_2] : memref<36x128xbf16, #tpu.memory_space<vmem>>, vector<36x128xbf16>
    %cst = arith.constant dense<0.000000e+00> : vector<1024x128xf32>
    %2 = tpu.matmul %0, %1, %cst {dimension_numbers = #tpu.dot_dimension_numbers<[1], [0], [0], [1], [0, 0, 1, 1], [], []>} : vector<1024x36xbf16>, vector<36x128xbf16>, vector<1024x128xf32> -> vector<1024x128xf32>
    %c0_3 = arith.constant 0 : index
    %c0_4 = arith.constant 0 : index
    %3 = vector.load %arg3[%c0_3, %c0_4] : memref<1x128xf32, #tpu.memory_space<vmem>>, vector<1x128xf32>
    %4 = vector.broadcast %3 : vector<1x128xf32> to vector<1024x128xf32>
    %5 = arith.addf %2, %4 : vector<1024x128xf32>
    %6 = arith.truncf %5 : vector<1024x128xf32> to vector<1024x128xbf16>
    %c0_5 = arith.constant 0 : index
    %c0_6 = arith.constant 0 : index
    %7 = vector.load %arg4[%c0_5, %c0_6] : memref<1024x128xbf16, #tpu.memory_space<vmem>>, vector<1024x128xbf16>
    tpu.vector_store %arg4[%c0_5, %c0_6], %6 {strides = array<i32>} : memref<1024x128xbf16, #tpu.memory_space<vmem>>, vector<1024x128xbf16>,
    return
  }
  func.func @transform_0(%arg0: i32) -> (i32, i32) {
    %c0_i32 = arith.constant 0 : i32
    %c0_i32_0 = arith.constant 0 : i32
    return %arg0, %c0_i32 : i32, i32
  }
  func.func @transform_1(%arg0: i32) -> (i32, i32) {
    %c0_i32 = arith.constant 0 : i32
    %c0_i32_0 = arith.constant 0 : i32
    %c0_i32_1 = arith.constant 0 : i32
    return %c0_i32, %c0_i32_0 : i32, i32
  }
  func.func @transform_2(%arg0: i32) -> (i32, i32) {
    %c0_i32 = arith.constant 0 : i32
    %c0_i32_0 = arith.constant 0 : i32
    %c0_i32_1 = arith.constant 0 : i32
    return %c0_i32, %c0_i32_0 : i32, i32
  }
  func.func @transform_3(%arg0: i32) -> (i32, i32) {
    %c0_i32 = arith.constant 0 : i32
    %c0_i32_0 = arith.constant 0 : i32
    return %arg0, %c0_i32 : i32, i32
  }
}

module attributes {stable_mosaic.version = 11 : i64} {
  func.func @_att_lif_kernel(%arg0: i32, %arg1: i32, %arg2: memref<1x8x1x128xf32, #tpu.memory_space<vmem>>, %arg3: memref<1x8x256x128xbf16, #tpu.memory_space<vmem>>, %arg4: memref<1x8x256x128xbf16, #tpu.memory_space<vmem>>) attributes {dimension_semantics = [#tpu.dimension_semantics<parallel>, #tpu.dimension_semantics<parallel>], iteration_bounds = array<i64: 2, 1>, scalar_prefetch = 0 : i64, scratch_operands = 0 : i64, tpu.core_type = #tpu.core_type<tc>, window_params = [{transform_indices = @transform_0, window_bounds = array<i64: 1, 8, 1, 128>}, {transform_indices = @transform_1, window_bounds = array<i64: 1, 8, 256, 128>}, {transform_indices = @transform_2, window_bounds = array<i64: 1, 8, 256, 128>}]} {
    %cst = arith.constant 0.000000e+00 : f32
    %0 = vector.broadcast %cst : f32 to vector<256x128xf32>
    %cst_0 = arith.constant 3.000000e-01 : f32
    %1 = vector.broadcast %cst_0 : f32 to vector<256x128xf32>
    %2 = arith.mulf %1, %0 : vector<256x128xf32>
    %c0 = arith.constant 0 : index
    %c0_1 = arith.constant 0 : index
    %c0_2 = arith.constant 0 : index
    %c0_3 = arith.constant 0 : index
    %3 = vector.load %arg3[%c0, %c0_1, %c0_2, %c0_3] : memref<1x8x256x128xbf16, #tpu.memory_space<vmem>>, vector<1x1x256x128xbf16>
    %4 = vector.shape_cast %3 : vector<1x1x256x128xbf16> to vector<256x128xbf16>
    %5 = arith.extf %4 : vector<256x128xbf16> to vector<256x128xf32>
    %c0_4 = arith.constant 0 : index
    %c0_5 = arith.constant 0 : index
    %c0_6 = arith.constant 0 : index
    %c0_7 = arith.constant 0 : index
    %6 = vector.load %arg2[%c0_4, %c0_5, %c0_6, %c0_7] : memref<1x8x1x128xf32, #tpu.memory_space<vmem>>, vector<1x1x1x128xf32>
    %7 = vector.shape_cast %6 : vector<1x1x1x128xf32> to vector<1x128xf32>
    %8 = vector.broadcast %7 : vector<1x128xf32> to vector<256x128xf32>
    %9 = arith.mulf %5, %8 : vector<256x128xf32>
    %10 = arith.addf %2, %9 : vector<256x128xf32>
    %cst_8 = arith.constant 3.000000e-01 : f32
    %11 = vector.broadcast %cst_8 : f32 to vector<256x128xf32>
    %12 = arith.cmpf oge, %10, %11 : vector<256x128xf32>
    %13 = arith.extui %12 : vector<256x128xi1> to vector<256x128xi32>
    %14 = arith.sitofp %13 : vector<256x128xi32> to vector<256x128xf32>
    %cst_9 = arith.constant 0.000000e+00 : f32
    %15 = vector.broadcast %cst_9 : f32 to vector<256x128xf32>
    %16 = arith.cmpf ogt, %14, %15 : vector<256x128xf32>
    %cst_10 = arith.constant 0.000000e+00 : f32
    %17 = vector.broadcast %cst_10 : f32 to vector<256x128xf32>
    %18 = arith.select %16, %17, %10 : vector<256x128xi1>, vector<256x128xf32>
    %19 = arith.truncf %14 : vector<256x128xf32> to vector<256x128xbf16>
    %c0_11 = arith.constant 0 : index
    %c0_12 = arith.constant 0 : index
    %c0_13 = arith.constant 0 : index
    %c0_14 = arith.constant 0 : index
    %20 = vector.load %arg4[%c0_11, %c0_12, %c0_13, %c0_14] : memref<1x8x256x128xbf16, #tpu.memory_space<vmem>>, vector<1x1x256x128xbf16>
    %21 = vector.shape_cast %20 : vector<1x1x256x128xbf16> to vector<256x128xbf16>
    %22 = vector.shape_cast %19 : vector<256x128xbf16> to vector<1x1x256x128xbf16>
    tpu.vector_store %arg4[%c0_11, %c0_12, %c0_13, %c0_14], %22 {strides = array<i32>} : memref<1x8x256x128xbf16, #tpu.memory_space<vmem>>, vector<1x1x256x128xbf16>,
    %cst_15 = arith.constant 3.000000e-01 : f32
    %23 = vector.broadcast %cst_15 : f32 to vector<256x128xf32>
    %24 = arith.mulf %23, %18 : vector<256x128xf32>
    %c0_16 = arith.constant 0 : index
    %c1 = arith.constant 1 : index
    %c0_17 = arith.constant 0 : index
    %c0_18 = arith.constant 0 : index
    %25 = vector.load %arg3[%c0_16, %c1, %c0_17, %c0_18] : memref<1x8x256x128xbf16, #tpu.memory_space<vmem>>, vector<1x1x256x128xbf16>
    %26 = vector.shape_cast %25 : vector<1x1x256x128xbf16> to vector<256x128xbf16>
    %27 = arith.extf %26 : vector<256x128xbf16> to vector<256x128xf32>
    %c0_19 = arith.constant 0 : index
    %c1_20 = arith.constant 1 : index
    %c0_21 = arith.constant 0 : index
    %c0_22 = arith.constant 0 : index
    %28 = vector.load %arg2[%c0_19, %c1_20, %c0_21, %c0_22] : memref<1x8x1x128xf32, #tpu.memory_space<vmem>>, vector<1x1x1x128xf32>
    %29 = vector.shape_cast %28 : vector<1x1x1x128xf32> to vector<1x128xf32>
    %30 = vector.broadcast %29 : vector<1x128xf32> to vector<256x128xf32>
    %31 = arith.mulf %27, %30 : vector<256x128xf32>
    %32 = arith.addf %24, %31 : vector<256x128xf32>
    %cst_23 = arith.constant 3.000000e-01 : f32
    %33 = vector.broadcast %cst_23 : f32 to vector<256x128xf32>
    %34 = arith.cmpf oge, %32, %33 : vector<256x128xf32>
    %35 = arith.extui %34 : vector<256x128xi1> to vector<256x128xi32>
    %36 = arith.sitofp %35 : vector<256x128xi32> to vector<256x128xf32>
    %cst_24 = arith.constant 0.000000e+00 : f32
    %37 = vector.broadcast %cst_24 : f32 to vector<256x128xf32>
    %38 = arith.cmpf ogt, %36, %37 : vector<256x128xf32>
    %cst_25 = arith.constant 0.000000e+00 : f32
    %39 = vector.broadcast %cst_25 : f32 to vector<256x128xf32>
    %40 = arith.select %38, %39, %32 : vector<256x128xi1>, vector<256x128xf32>
    %41 = arith.truncf %36 : vector<256x128xf32> to vector<256x128xbf16>
    %c0_26 = arith.constant 0 : index
    %c1_27 = arith.constant 1 : index
    %c0_28 = arith.constant 0 : index
    %c0_29 = arith.constant 0 : index
    %42 = vector.load %arg4[%c0_26, %c1_27, %c0_28, %c0_29] : memref<1x8x256x128xbf16, #tpu.memory_space<vmem>>, vector<1x1x256x128xbf16>
    %43 = vector.shape_cast %42 : vector<1x1x256x128xbf16> to vector<256x128xbf16>
    %44 = vector.shape_cast %41 : vector<256x128xbf16> to vector<1x1x256x128xbf16>
    tpu.vector_store %arg4[%c0_26, %c1_27, %c0_28, %c0_29], %44 {strides = array<i32>} : memref<1x8x256x128xbf16, #tpu.memory_space<vmem>>, vector<1x1x256x128xbf16>,
    %cst_30 = arith.constant 3.000000e-01 : f32
    %45 = vector.broadcast %cst_30 : f32 to vector<256x128xf32>
    %46 = arith.mulf %45, %40 : vector<256x128xf32>
    %c0_31 = arith.constant 0 : index
    %c2 = arith.constant 2 : index
    %c0_32 = arith.constant 0 : index
    %c0_33 = arith.constant 0 : index
    %47 = vector.load %arg3[%c0_31, %c2, %c0_32, %c0_33] : memref<1x8x256x128xbf16, #tpu.memory_space<vmem>>, vector<1x1x256x128xbf16>
    %48 = vector.shape_cast %47 : vector<1x1x256x128xbf16> to vector<256x128xbf16>
    %49 = arith.extf %48 : vector<256x128xbf16> to vector<256x128xf32>
    %c0_34 = arith.constant 0 : index
    %c2_35 = arith.constant 2 : index
    %c0_36 = arith.constant 0 : index
    %c0_37 = arith.constant 0 : index
    %50 = vector.load %arg2[%c0_34, %c2_35, %c0_36, %c0_37] : memref<1x8x1x128xf32, #tpu.memory_space<vmem>>, vector<1x1x1x128xf32>
    %51 = vector.shape_cast %50 : vector<1x1x1x128xf32> to vector<1x128xf32>
    %52 = vector.broadcast %51 : vector<1x128xf32> to vector<256x128xf32>
    %53 = arith.mulf %49, %52 : vector<256x128xf32>
    %54 = arith.addf %46, %53 : vector<256x128xf32>
    %cst_38 = arith.constant 3.000000e-01 : f32
    %55 = vector.broadcast %cst_38 : f32 to vector<256x128xf32>
    %56 = arith.cmpf oge, %54, %55 : vector<256x128xf32>
    %57 = arith.extui %56 : vector<256x128xi1> to vector<256x128xi32>
    %58 = arith.sitofp %57 : vector<256x128xi32> to vector<256x128xf32>
    %cst_39 = arith.constant 0.000000e+00 : f32
    %59 = vector.broadcast %cst_39 : f32 to vector<256x128xf32>
    %60 = arith.cmpf ogt, %58, %59 : vector<256x128xf32>
    %cst_40 = arith.constant 0.000000e+00 : f32
    %61 = vector.broadcast %cst_40 : f32 to vector<256x128xf32>
    %62 = arith.select %60, %61, %54 : vector<256x128xi1>, vector<256x128xf32>
    %63 = arith.truncf %58 : vector<256x128xf32> to vector<256x128xbf16>
    %c0_41 = arith.constant 0 : index
    %c2_42 = arith.constant 2 : index
    %c0_43 = arith.constant 0 : index
    %c0_44 = arith.constant 0 : index
    %64 = vector.load %arg4[%c0_41, %c2_42, %c0_43, %c0_44] : memref<1x8x256x128xbf16, #tpu.memory_space<vmem>>, vector<1x1x256x128xbf16>
    %65 = vector.shape_cast %64 : vector<1x1x256x128xbf16> to vector<256x128xbf16>
    %66 = vector.shape_cast %63 : vector<256x128xbf16> to vector<1x1x256x128xbf16>
    tpu.vector_store %arg4[%c0_41, %c2_42, %c0_43, %c0_44], %66 {strides = array<i32>} : memref<1x8x256x128xbf16, #tpu.memory_space<vmem>>, vector<1x1x256x128xbf16>,
    %cst_45 = arith.constant 3.000000e-01 : f32
    %67 = vector.broadcast %cst_45 : f32 to vector<256x128xf32>
    %68 = arith.mulf %67, %62 : vector<256x128xf32>
    %c0_46 = arith.constant 0 : index
    %c3 = arith.constant 3 : index
    %c0_47 = arith.constant 0 : index
    %c0_48 = arith.constant 0 : index
    %69 = vector.load %arg3[%c0_46, %c3, %c0_47, %c0_48] : memref<1x8x256x128xbf16, #tpu.memory_space<vmem>>, vector<1x1x256x128xbf16>
    %70 = vector.shape_cast %69 : vector<1x1x256x128xbf16> to vector<256x128xbf16>
    %71 = arith.extf %70 : vector<256x128xbf16> to vector<256x128xf32>
    %c0_49 = arith.constant 0 : index
    %c3_50 = arith.constant 3 : index
    %c0_51 = arith.constant 0 : index
    %c0_52 = arith.constant 0 : index
    %72 = vector.load %arg2[%c0_49, %c3_50, %c0_51, %c0_52] : memref<1x8x1x128xf32, #tpu.memory_space<vmem>>, vector<1x1x1x128xf32>
    %73 = vector.shape_cast %72 : vector<1x1x1x128xf32> to vector<1x128xf32>
    %74 = vector.broadcast %73 : vector<1x128xf32> to vector<256x128xf32>
    %75 = arith.mulf %71, %74 : vector<256x128xf32>
    %76 = arith.addf %68, %75 : vector<256x128xf32>
    %cst_53 = arith.constant 3.000000e-01 : f32
    %77 = vector.broadcast %cst_53 : f32 to vector<256x128xf32>
    %78 = arith.cmpf oge, %76, %77 : vector<256x128xf32>
    %79 = arith.extui %78 : vector<256x128xi1> to vector<256x128xi32>
    %80 = arith.sitofp %79 : vector<256x128xi32> to vector<256x128xf32>
    %cst_54 = arith.constant 0.000000e+00 : f32
    %81 = vector.broadcast %cst_54 : f32 to vector<256x128xf32>
    %82 = arith.cmpf ogt, %80, %81 : vector<256x128xf32>
    %cst_55 = arith.constant 0.000000e+00 : f32
    %83 = vector.broadcast %cst_55 : f32 to vector<256x128xf32>
    %84 = arith.select %82, %83, %76 : vector<256x128xi1>, vector<256x128xf32>
    %85 = arith.truncf %80 : vector<256x128xf32> to vector<256x128xbf16>
    %c0_56 = arith.constant 0 : index
    %c3_57 = arith.constant 3 : index
    %c0_58 = arith.constant 0 : index
    %c0_59 = arith.constant 0 : index
    %86 = vector.load %arg4[%c0_56, %c3_57, %c0_58, %c0_59] : memref<1x8x256x128xbf16, #tpu.memory_space<vmem>>, vector<1x1x256x128xbf16>
    %87 = vector.shape_cast %86 : vector<1x1x256x128xbf16> to vector<256x128xbf16>
    %88 = vector.shape_cast %85 : vector<256x128xbf16> to vector<1x1x256x128xbf16>
    tpu.vector_store %arg4[%c0_56, %c3_57, %c0_58, %c0_59], %88 {strides = array<i32>} : memref<1x8x256x128xbf16, #tpu.memory_space<vmem>>, vector<1x1x256x128xbf16>,
    %cst_60 = arith.constant 3.000000e-01 : f32
    %89 = vector.broadcast %cst_60 : f32 to vector<256x128xf32>
    %90 = arith.mulf %89, %84 : vector<256x128xf32>
    %c0_61 = arith.constant 0 : index
    %c4 = arith.constant 4 : index
    %c0_62 = arith.constant 0 : index
    %c0_63 = arith.constant 0 : index
    %91 = vector.load %arg3[%c0_61, %c4, %c0_62, %c0_63] : memref<1x8x256x128xbf16, #tpu.memory_space<vmem>>, vector<1x1x256x128xbf16>
    %92 = vector.shape_cast %91 : vector<1x1x256x128xbf16> to vector<256x128xbf16>
    %93 = arith.extf %92 : vector<256x128xbf16> to vector<256x128xf32>
    %c0_64 = arith.constant 0 : index
    %c4_65 = arith.constant 4 : index
    %c0_66 = arith.constant 0 : index
    %c0_67 = arith.constant 0 : index
    %94 = vector.load %arg2[%c0_64, %c4_65, %c0_66, %c0_67] : memref<1x8x1x128xf32, #tpu.memory_space<vmem>>, vector<1x1x1x128xf32>
    %95 = vector.shape_cast %94 : vector<1x1x1x128xf32> to vector<1x128xf32>
    %96 = vector.broadcast %95 : vector<1x128xf32> to vector<256x128xf32>
    %97 = arith.mulf %93, %96 : vector<256x128xf32>
    %98 = arith.addf %90, %97 : vector<256x128xf32>
    %cst_68 = arith.constant 3.000000e-01 : f32
    %99 = vector.broadcast %cst_68 : f32 to vector<256x128xf32>
    %100 = arith.cmpf oge, %98, %99 : vector<256x128xf32>
    %101 = arith.extui %100 : vector<256x128xi1> to vector<256x128xi32>
    %102 = arith.sitofp %101 : vector<256x128xi32> to vector<256x128xf32>
    %cst_69 = arith.constant 0.000000e+00 : f32
    %103 = vector.broadcast %cst_69 : f32 to vector<256x128xf32>
    %104 = arith.cmpf ogt, %102, %103 : vector<256x128xf32>
    %cst_70 = arith.constant 0.000000e+00 : f32
    %105 = vector.broadcast %cst_70 : f32 to vector<256x128xf32>
    %106 = arith.select %104, %105, %98 : vector<256x128xi1>, vector<256x128xf32>
    %107 = arith.truncf %102 : vector<256x128xf32> to vector<256x128xbf16>
    %c0_71 = arith.constant 0 : index
    %c4_72 = arith.constant 4 : index
    %c0_73 = arith.constant 0 : index
    %c0_74 = arith.constant 0 : index
    %108 = vector.load %arg4[%c0_71, %c4_72, %c0_73, %c0_74] : memref<1x8x256x128xbf16, #tpu.memory_space<vmem>>, vector<1x1x256x128xbf16>
    %109 = vector.shape_cast %108 : vector<1x1x256x128xbf16> to vector<256x128xbf16>
    %110 = vector.shape_cast %107 : vector<256x128xbf16> to vector<1x1x256x128xbf16>
    tpu.vector_store %arg4[%c0_71, %c4_72, %c0_73, %c0_74], %110 {strides = array<i32>} : memref<1x8x256x128xbf16, #tpu.memory_space<vmem>>, vector<1x1x256x128xbf16>,
    %cst_75 = arith.constant 3.000000e-01 : f32
    %111 = vector.broadcast %cst_75 : f32 to vector<256x128xf32>
    %112 = arith.mulf %111, %106 : vector<256x128xf32>
    %c0_76 = arith.constant 0 : index
    %c5 = arith.constant 5 : index
    %c0_77 = arith.constant 0 : index
    %c0_78 = arith.constant 0 : index
    %113 = vector.load %arg3[%c0_76, %c5, %c0_77, %c0_78] : memref<1x8x256x128xbf16, #tpu.memory_space<vmem>>, vector<1x1x256x128xbf16>
    %114 = vector.shape_cast %113 : vector<1x1x256x128xbf16> to vector<256x128xbf16>
    %115 = arith.extf %114 : vector<256x128xbf16> to vector<256x128xf32>
    %c0_79 = arith.constant 0 : index
    %c5_80 = arith.constant 5 : index
    %c0_81 = arith.constant 0 : index
    %c0_82 = arith.constant 0 : index
    %116 = vector.load %arg2[%c0_79, %c5_80, %c0_81, %c0_82] : memref<1x8x1x128xf32, #tpu.memory_space<vmem>>, vector<1x1x1x128xf32>
    %117 = vector.shape_cast %116 : vector<1x1x1x128xf32> to vector<1x128xf32>
    %118 = vector.broadcast %117 : vector<1x128xf32> to vector<256x128xf32>
    %119 = arith.mulf %115, %118 : vector<256x128xf32>
    %120 = arith.addf %112, %119 : vector<256x128xf32>
    %cst_83 = arith.constant 3.000000e-01 : f32
    %121 = vector.broadcast %cst_83 : f32 to vector<256x128xf32>
    %122 = arith.cmpf oge, %120, %121 : vector<256x128xf32>
    %123 = arith.extui %122 : vector<256x128xi1> to vector<256x128xi32>
    %124 = arith.sitofp %123 : vector<256x128xi32> to vector<256x128xf32>
    %cst_84 = arith.constant 0.000000e+00 : f32
    %125 = vector.broadcast %cst_84 : f32 to vector<256x128xf32>
    %126 = arith.cmpf ogt, %124, %125 : vector<256x128xf32>
    %cst_85 = arith.constant 0.000000e+00 : f32
    %127 = vector.broadcast %cst_85 : f32 to vector<256x128xf32>
    %128 = arith.select %126, %127, %120 : vector<256x128xi1>, vector<256x128xf32>
    %129 = arith.truncf %124 : vector<256x128xf32> to vector<256x128xbf16>
    %c0_86 = arith.constant 0 : index
    %c5_87 = arith.constant 5 : index
    %c0_88 = arith.constant 0 : index
    %c0_89 = arith.constant 0 : index
    %130 = vector.load %arg4[%c0_86, %c5_87, %c0_88, %c0_89] : memref<1x8x256x128xbf16, #tpu.memory_space<vmem>>, vector<1x1x256x128xbf16>
    %131 = vector.shape_cast %130 : vector<1x1x256x128xbf16> to vector<256x128xbf16>
    %132 = vector.shape_cast %129 : vector<256x128xbf16> to vector<1x1x256x128xbf16>
    tpu.vector_store %arg4[%c0_86, %c5_87, %c0_88, %c0_89], %132 {strides = array<i32>} : memref<1x8x256x128xbf16, #tpu.memory_space<vmem>>, vector<1x1x256x128xbf16>,
    %cst_90 = arith.constant 3.000000e-01 : f32
    %133 = vector.broadcast %cst_90 : f32 to vector<256x128xf32>
    %134 = arith.mulf %133, %128 : vector<256x128xf32>
    %c0_91 = arith.constant 0 : index
    %c6 = arith.constant 6 : index
    %c0_92 = arith.constant 0 : index
    %c0_93 = arith.constant 0 : index
    %135 = vector.load %arg3[%c0_91, %c6, %c0_92, %c0_93] : memref<1x8x256x128xbf16, #tpu.memory_space<vmem>>, vector<1x1x256x128xbf16>
    %136 = vector.shape_cast %135 : vector<1x1x256x128xbf16> to vector<256x128xbf16>
    %137 = arith.extf %136 : vector<256x128xbf16> to vector<256x128xf32>
    %c0_94 = arith.constant 0 : index
    %c6_95 = arith.constant 6 : index
    %c0_96 = arith.constant 0 : index
    %c0_97 = arith.constant 0 : index
    %138 = vector.load %arg2[%c0_94, %c6_95, %c0_96, %c0_97] : memref<1x8x1x128xf32, #tpu.memory_space<vmem>>, vector<1x1x1x128xf32>
    %139 = vector.shape_cast %138 : vector<1x1x1x128xf32> to vector<1x128xf32>
    %140 = vector.broadcast %139 : vector<1x128xf32> to vector<256x128xf32>
    %141 = arith.mulf %137, %140 : vector<256x128xf32>
    %142 = arith.addf %134, %141 : vector<256x128xf32>
    %cst_98 = arith.constant 3.000000e-01 : f32
    %143 = vector.broadcast %cst_98 : f32 to vector<256x128xf32>
    %144 = arith.cmpf oge, %142, %143 : vector<256x128xf32>
    %145 = arith.extui %144 : vector<256x128xi1> to vector<256x128xi32>
    %146 = arith.sitofp %145 : vector<256x128xi32> to vector<256x128xf32>
    %cst_99 = arith.constant 0.000000e+00 : f32
    %147 = vector.broadcast %cst_99 : f32 to vector<256x128xf32>
    %148 = arith.cmpf ogt, %146, %147 : vector<256x128xf32>
    %cst_100 = arith.constant 0.000000e+00 : f32
    %149 = vector.broadcast %cst_100 : f32 to vector<256x128xf32>
    %150 = arith.select %148, %149, %142 : vector<256x128xi1>, vector<256x128xf32>
    %151 = arith.truncf %146 : vector<256x128xf32> to vector<256x128xbf16>
    %c0_101 = arith.constant 0 : index
    %c6_102 = arith.constant 6 : index
    %c0_103 = arith.constant 0 : index
    %c0_104 = arith.constant 0 : index
    %152 = vector.load %arg4[%c0_101, %c6_102, %c0_103, %c0_104] : memref<1x8x256x128xbf16, #tpu.memory_space<vmem>>, vector<1x1x256x128xbf16>
    %153 = vector.shape_cast %152 : vector<1x1x256x128xbf16> to vector<256x128xbf16>
    %154 = vector.shape_cast %151 : vector<256x128xbf16> to vector<1x1x256x128xbf16>
    tpu.vector_store %arg4[%c0_101, %c6_102, %c0_103, %c0_104], %154 {strides = array<i32>} : memref<1x8x256x128xbf16, #tpu.memory_space<vmem>>, vector<1x1x256x128xbf16>,
    %cst_105 = arith.constant 3.000000e-01 : f32
    %155 = vector.broadcast %cst_105 : f32 to vector<256x128xf32>
    %156 = arith.mulf %155, %150 : vector<256x128xf32>
    %c0_106 = arith.constant 0 : index
    %c7 = arith.constant 7 : index
    %c0_107 = arith.constant 0 : index
    %c0_108 = arith.constant 0 : index
    %157 = vector.load %arg3[%c0_106, %c7, %c0_107, %c0_108] : memref<1x8x256x128xbf16, #tpu.memory_space<vmem>>, vector<1x1x256x128xbf16>
    %158 = vector.shape_cast %157 : vector<1x1x256x128xbf16> to vector<256x128xbf16>
    %159 = arith.extf %158 : vector<256x128xbf16> to vector<256x128xf32>
    %c0_109 = arith.constant 0 : index
    %c7_110 = arith.constant 7 : index
    %c0_111 = arith.constant 0 : index
    %c0_112 = arith.constant 0 : index
    %160 = vector.load %arg2[%c0_109, %c7_110, %c0_111, %c0_112] : memref<1x8x1x128xf32, #tpu.memory_space<vmem>>, vector<1x1x1x128xf32>
    %161 = vector.shape_cast %160 : vector<1x1x1x128xf32> to vector<1x128xf32>
    %162 = vector.broadcast %161 : vector<1x128xf32> to vector<256x128xf32>
    %163 = arith.mulf %159, %162 : vector<256x128xf32>
    %164 = arith.addf %156, %163 : vector<256x128xf32>
    %cst_113 = arith.constant 3.000000e-01 : f32
    %165 = vector.broadcast %cst_113 : f32 to vector<256x128xf32>
    %166 = arith.cmpf oge, %164, %165 : vector<256x128xf32>
    %167 = arith.extui %166 : vector<256x128xi1> to vector<256x128xi32>
    %168 = arith.sitofp %167 : vector<256x128xi32> to vector<256x128xf32>
    %169 = arith.truncf %168 : vector<256x128xf32> to vector<256x128xbf16>
    %c0_114 = arith.constant 0 : index
    %c7_115 = arith.constant 7 : index
    %c0_116 = arith.constant 0 : index
    %c0_117 = arith.constant 0 : index
    %170 = vector.load %arg4[%c0_114, %c7_115, %c0_116, %c0_117] : memref<1x8x256x128xbf16, #tpu.memory_space<vmem>>, vector<1x1x256x128xbf16>
    %171 = vector.shape_cast %170 : vector<1x1x256x128xbf16> to vector<256x128xbf16>
    %172 = vector.shape_cast %169 : vector<256x128xbf16> to vector<1x1x256x128xbf16>
    tpu.vector_store %arg4[%c0_114, %c7_115, %c0_116, %c0_117], %172 {strides = array<i32>} : memref<1x8x256x128xbf16, #tpu.memory_space<vmem>>, vector<1x1x256x128xbf16>,
    return
  }
  func.func @transform_0(%arg0: i32, %arg1: i32) -> (i32, i32, i32, i32) {
    %c0_i32 = arith.constant 0 : i32
    %c0_i32_0 = arith.constant 0 : i32
    %c0_i32_1 = arith.constant 0 : i32
    %c0_i32_2 = arith.constant 0 : i32
    return %arg0, %c0_i32, %c0_i32_0, %c0_i32_1 : i32, i32, i32, i32
  }
  func.func @transform_1(%arg0: i32, %arg1: i32) -> (i32, i32, i32, i32) {
    %c0_i32 = arith.constant 0 : i32
    %c0_i32_0 = arith.constant 0 : i32
    %c0_i32_1 = arith.constant 0 : i32
    return %arg0, %c0_i32, %arg1, %c0_i32_0 : i32, i32, i32, i32
  }
  func.func @transform_2(%arg0: i32, %arg1: i32) -> (i32, i32, i32, i32) {
    %c0_i32 = arith.constant 0 : i32
    %c0_i32_0 = arith.constant 0 : i32
    %c0_i32_1 = arith.constant 0 : i32
    return %arg0, %c0_i32, %arg1, %c0_i32_0 : i32, i32, i32, i32
  }
}

</mosaic_0001>

<llo_original>
// kernel: conv_att_lif_forward.2
$region0: #{conv_att_lif_forward.2}
  #allocation0 [shape = 'u32[]', space=smem, size = 0x4, offset = 0x4, fixed_abs, tag = 'smem constant byte address 0x4 - core index']
  #allocation1 [shape = 'u32[144,128]{1,0:T(1,128)}', space=vmem, size = 0x12000, scoped, tag = 'internal scratch']
  %s0 = inlined_call_operand.vmem [shape: bf16[4096,36], index: 0, kind: input, shape index: {}]
  %s1 = inlined_call_operand.vmem [shape: bf16[36,128], index: 1, kind: input, shape index: {}]
  %s2 = inlined_call_operand.vmem [shape: f32[1,128], index: 2, kind: input, shape index: {}]
  %s3 = inlined_call_operand.vmem [shape: bf16[4096,128], index: 3, kind: output, shape index: {}]
  %s4 = sld [smem:[#allocation0]]
  $region45: #{conv_att_lif_forward.2} parent=0
    _
  %s6 = ssub.s32 1, %s4
  %s7 = scalar_select 0, %s6, %s4
  loop: start=0, step=1, limit=6
  $region2: #{conv_att_lif_forward.2} parent=0 // loop_pre_header
    _
  $region3: #{conv_att_lif_forward.2} parent=0 // loop_header
    %s9 = sphi 0, %s13
    %p10 = scmp.ge.s32.totalorder %s9, 6
    %s19 = sphi 0, %s21
    %s22 = sphi 0, %s19
    %s23 = sphi 0, %s22
    %s39 = sphi 0, %s23
    %s43 = sphi 0, %s43
    %s45 = sphi 0, %s43
    %s46 = sphi 0, %s45
    %s60 = sphi 0, %s46
    %s64 = sphi 0, %s64
    %s66 = sphi 0, %s64
    %s67 = sphi 0, %s66
    %s81 = sphi 0, %s67
    %s87 = sphi 0, %s89
    %s90 = sphi 0, %s87
    %s91 = sphi 0, %s90
    %s107 = sphi 0, %s91
  $region4: #{conv_att_lif_forward.2} parent=0 // loop_header_branch
    %12 = sbr.rel (%p10) target = $region8
  $region5: #{conv_att_lif_forward.2} parent=0 // loop_body
    %s14 = ssub.s32 %s9, 1
    %s15 = ssub.s32 %s9, 2
    %s16 = sadd.s32 %s9, 1
    %s17 = ssub.s32 %s9, %s16
    %p18 = scmp.eq.s32.totalorder %s17, 0
    %s20 = sadd.s32 %s19, 1
    %s21 = scalar_select %p18, %s19, %s20
    %p24 = pneg %p18
    %p25 = scmp.eq.s32.totalorder %s9, 3
    %p26 = por %p24, %p25
    %p27 = scmp.ne.s32.totalorder %s19, %s22
    %p28 = scmp.eq.s32.totalorder %s9, 0
    %p29 = por %p27, %p28
    %p30 = scmp.ne.s32.totalorder %s19, %s22
    %p31 = scmp.eq.s32.totalorder %s14, 3
    %p32 = por %p30, %p31
    %p33 = scmp.ne.s32.totalorder %s22, %s23
    %p34 = scmp.eq.s32.totalorder %s14, 0
    %p35 = por %p33, %p34
    %p36 = scmp.ne.s32.totalorder %s22, %s23
    %p37 = scmp.eq.s32.totalorder %s15, 3
    %p38 = por %p36, %p37
    %p40 = scmp.ne.s32.totalorder %s23, %s39
    %p41 = scmp.eq.s32.totalorder %s15, 0
    %p42 = por %p40, %p41
    %s44 = sadd.s32 %s43, 1
    %p47 = scmp.eq.s32.totalorder %s9, 3
    %p48 = scmp.ne.s32.totalorder %s43, %s45
    %p49 = scmp.eq.s32.totalorder %s9, 0
    %p50 = por %p48, %p49
    %p51 = scmp.ne.s32.totalorder %s43, %s45
    %p52 = scmp.eq.s32.totalorder %s14, 3
    %p53 = por %p51, %p52
    %p54 = scmp.ne.s32.totalorder %s45, %s46
    %p55 = scmp.eq.s32.totalorder %s14, 0
    %p56 = por %p54, %p55
    %p57 = scmp.ne.s32.totalorder %s45, %s46
    %p58 = scmp.eq.s32.totalorder %s15, 3
    %p59 = por %p57, %p58
    %p61 = scmp.ne.s32.totalorder %s46, %s60
    %p62 = scmp.eq.s32.totalorder %s15, 0
    %p63 = por %p61, %p62
    %s65 = sadd.s32 %s64, 1
    %p68 = scmp.eq.s32.totalorder %s9, 3
    %p69 = scmp.ne.s32.totalorder %s64, %s66
    %p70 = scmp.eq.s32.totalorder %s9, 0
    %p71 = por %p69, %p70
    %p72 = scmp.ne.s32.totalorder %s64, %s66
    %p73 = scmp.eq.s32.totalorder %s14, 3
    %p74 = por %p72, %p73
    %p75 = scmp.ne.s32.totalorder %s66, %s67
    %p76 = scmp.eq.s32.totalorder %s14, 0
    %p77 = por %p75, %p76
    %p78 = scmp.ne.s32.totalorder %s66, %s67
    %p79 = scmp.eq.s32.totalorder %s15, 3
    %p80 = por %p78, %p79
    %p82 = scmp.ne.s32.totalorder %s67, %s81
    %p83 = scmp.eq.s32.totalorder %s15, 0
    %p84 = por %p82, %p83
    %s85 = ssub.s32 %s9, %s16
    %p86 = scmp.eq.s32.totalorder %s85, 0
    %s88 = sadd.s32 %s87, 1
    %s89 = scalar_select %p86, %s87, %s88
    %p92 = pneg %p86
    %p93 = scmp.eq.s32.totalorder %s9, 3
    %p94 = por %p92, %p93
    %p95 = scmp.ne.s32.totalorder %s87, %s90
    %p96 = scmp.eq.s32.totalorder %s9, 0
    %p97 = por %p95, %p96
    %p98 = scmp.ne.s32.totalorder %s87, %s90
    %p99 = scmp.eq.s32.totalorder %s14, 3
    %p100 = por %p98, %p99
    %p101 = scmp.ne.s32.totalorder %s90, %s91
    %p102 = scmp.eq.s32.totalorder %s14, 0
    %p103 = por %p101, %p102
    %p104 = scmp.ne.s32.totalorder %s90, %s91
    %p105 = scmp.eq.s32.totalorder %s15, 3
    %p106 = por %p104, %p105
    %p108 = scmp.ne.s32.totalorder %s91, %s107
    %p109 = scmp.eq.s32.totalorder %s15, 0
    %p110 = por %p108, %p109
    %p111 = scmp.le.s32.totalorder 1, %s9
    %p112 = scmp.lt.s32.totalorder %s9, 5
    %p113 = pnand %p111, %p112
    %p114 = pneg %p113
    // Predicated region
    $region9: #{conv_att_lif_forward.2} parent=5 // pred_check
      _
    $region10: #{conv_att_lif_forward.2} parent=5 // pred_check_branch
      %116 = sbr.rel (%p113) target = $region12
    $region11: #{conv_att_lif_forward.2} parent=5 // pred_region
      %s117 = ssub.s32 %s9, 1
      // Predicated region
      $region13: #{conv_att_lif_forward.2} parent=11 // pred_check
        %p118 = pneg %p56
      $region14: #{conv_att_lif_forward.2} parent=11 // pred_check_branch
        %120 = sbr.rel (%p118) target = $region16
      $region15: #{conv_att_lif_forward.2} parent=11 // pred_region
        _
      $region16: #{conv_att_lif_forward.2} parent=11 // pred_fallthru
        _
      // Predicated region
      $region17: #{conv_att_lif_forward.2} parent=11 // pred_check
        %p121 = pneg %p77
      $region18: #{conv_att_lif_forward.2} parent=11 // pred_check_branch
        %123 = sbr.rel (%p121) target = $region20
      $region19: #{conv_att_lif_forward.2} parent=11 // pred_region
        _
      $region20: #{conv_att_lif_forward.2} parent=11 // pred_fallthru
        _
    $region12: #{conv_att_lif_forward.2} parent=5 // pred_fallthru
      _
    %p124 = scmp.lt.s32.totalorder %s9, 4
    // Predicated region
    $region21: #{conv_att_lif_forward.2} parent=5 // pred_check
      %p125 = pneg %p124
    $region22: #{conv_att_lif_forward.2} parent=5 // pred_check_branch
      %127 = sbr.rel (%p125) target = $region24
    $region23: #{conv_att_lif_forward.2} parent=5 // pred_region
      // Predicated region
      $region25: #{conv_att_lif_forward.2} parent=23 // pred_check
        %p128 = pneg %p29
      $region26: #{conv_att_lif_forward.2} parent=23 // pred_check_branch
        %130 = sbr.rel (%p128) target = $region28
      $region27: #{conv_att_lif_forward.2} parent=23 // pred_region
        %s131 = smul.u32 128, %s9
        %p132 = scmp.lt.s32.totalorder %s131, 511
        %s133 = scalar_select %p132, %s131, 511
        %s134 = smul.addr %s133, 4
        %s135 = scalar_lea.vmem %s0, %s134
        %s136 = smul.u32 128, %s9
      $region28: #{conv_att_lif_forward.2} parent=23 // pred_fallthru
        _
    $region24: #{conv_att_lif_forward.2} parent=5 // pred_fallthru
      _
    %p137 = scmp.le.s32.totalorder 1, %s9
    %p138 = scmp.lt.s32.totalorder %s9, 5
    %p139 = pnand %p137, %p138
    %p140 = pneg %p139
    // Predicated region
    $region29: #{conv_att_lif_forward.2} parent=5 // pred_check
      _
    $region30: #{conv_att_lif_forward.2} parent=5 // pred_check_branch
      %142 = sbr.rel (%p139) target = $region32
    $region31: #{conv_att_lif_forward.2} parent=5 // pred_region
      %s143 = ssub.s32 %s9, 1
      %s144 = smul.u32 128, %s14
      %p145 = scmp.lt.s32.totalorder %s144, 511
      %s146 = scalar_select %p145, %s144, 511
      %s147 = smul.addr %s146, 4
      %s148 = scalar_lea.vmem %s0, %s147
      %p149 = pneg %p35
      %p150 = pneg %p32
      %p151 = pneg %p56
      %p152 = pneg %p53
      %p153 = pneg %p77
      %p154 = pneg %p74
      %p155 = pneg %p103
      %p156 = pneg %p100
      %s157 = smul.u32 128, %s14
      %p158 = scmp.lt.s32.totalorder %s157, 511
      %s159 = scalar_select %p158, %s157, 511
      %s160 = smul.addr %s159, 4
      %s161 = scalar_lea.vmem %s3, %s160
      %s162 = smul.u32 128, %s14
      %p163 = scmp.lt.s32.totalorder %s162, 511
      %s164 = scalar_select %p163, %s162, 511
      %s165 = smul.addr %s164, 4
      %s166 = scalar_lea.vmem %s0, %s165
      %s167 = smul.u32 128, %s14
      %s168 = smul.u32 128, %s14
      %p169 = scmp.lt.s32.totalorder %s168, 511
      %s170 = scalar_select %p169, %s168, 511
      %s171 = smul.addr %s170, 4
      %s172 = scalar_lea.vmem %s3, %s171
      %s173 = smul.u32 128, %s14
      %v175 = vld [vmem:[%s166] sm:$0xf]
      %v176 = vld [vmem:[%s166 + $0x4] sm:$0xf]
      %v177 = vld [vmem:[%s166 + $0x8] sm:$0xf]
      %v178 = vld [vmem:[%s166 + $0xc] sm:$0xf]
      %v179 = vld [vmem:[%s166 + $0x10] sm:$0xf]
      %v180 = vld [vmem:[%s166 + $0x14] sm:$0xf]
      %v181 = vld [vmem:[%s166 + $0x18] sm:$0xf]
      %v182 = vld [vmem:[%s166 + $0x1c] sm:$0xf]
      %v183 = vld [vmem:[%s166 + $0x20] sm:$0xf]
      %v184 = vld [vmem:[%s166 + $0x24] sm:$0xf]
      %v185 = vld [vmem:[%s166 + $0x28] sm:$0xf]
      %v186 = vld [vmem:[%s166 + $0x2c] sm:$0xf]
      %v187 = vld [vmem:[%s166 + $0x30] sm:$0xf]
      %v188 = vld [vmem:[%s166 + $0x34] sm:$0xf]
      %v189 = vld [vmem:[%s166 + $0x38] sm:$0xf]
      %v190 = vld [vmem:[%s166 + $0x3c] sm:$0xf]
      %v191 = vld [vmem:[%s166 + $0x40] sm:$0xf]
      %v192 = vld [vmem:[%s166 + $0x44] sm:$0xf]
      %v193 = vld [vmem:[%s166 + $0x48] sm:$0xf]
      %v194 = vld [vmem:[%s166 + $0x4c] sm:$0xf]
      %v195 = vld [vmem:[%s166 + $0x50] sm:$0xf]
      %v196 = vld [vmem:[%s166 + $0x54] sm:$0xf]
      %v197 = vld [vmem:[%s166 + $0x58] sm:$0xf]
      %v198 = vld [vmem:[%s166 + $0x5c] sm:$0xf]
      %v199 = vld [vmem:[%s166 + $0x60] sm:$0xf]
      %v200 = vld [vmem:[%s166 + $0x64] sm:$0xf]
      %v201 = vld [vmem:[%s166 + $0x68] sm:$0xf]
      %v202 = vld [vmem:[%s166 + $0x6c] sm:$0xf]
      %v203 = vld [vmem:[%s166 + $0x70] sm:$0xf]
      %v204 = vld [vmem:[%s166 + $0x74] sm:$0xf]
      %v205 = vld [vmem:[%s166 + $0x78] sm:$0xf]
      %v206 = vld [vmem:[%s166 + $0x7c] sm:$0xf]
      %v207 = vld [vmem:[%s166 + $0x80] sm:$0xf]
      %v208 = vld [vmem:[%s166 + $0x84] sm:$0xf]
      %v209 = vld [vmem:[%s166 + $0x88] sm:$0xf]
      %v210 = vld [vmem:[%s166 + $0x8c] sm:$0xf]
      %v211 = vld [vmem:[%s166 + $0x90] sm:$0xf]
      %v212 = vld [vmem:[%s166 + $0x94] sm:$0xf]
      %v213 = vld [vmem:[%s166 + $0x98] sm:$0xf]
      %v214 = vld [vmem:[%s166 + $0x9c] sm:$0xf]
      %v215 = vld [vmem:[%s166 + $0xa0] sm:$0xf]
      %v216 = vld [vmem:[%s166 + $0xa4] sm:$0xf]
      %v217 = vld [vmem:[%s166 + $0xa8] sm:$0xf]
      %v218 = vld [vmem:[%s166 + $0xac] sm:$0xf]
      %v219 = vld [vmem:[%s166 + $0xb0] sm:$0xf]
      %v220 = vld [vmem:[%s166 + $0xb4] sm:$0xf]
      %v221 = vld [vmem:[%s166 + $0xb8] sm:$0xf]
      %v222 = vld [vmem:[%s166 + $0xbc] sm:$0xf]
      %v223 = vld [vmem:[%s166 + $0xc0] sm:$0xf]
      %v224 = vld [vmem:[%s166 + $0xc4] sm:$0xf]
      %v225 = vld [vmem:[%s166 + $0xc8] sm:$0xf]
      %v226 = vld [vmem:[%s166 + $0xcc] sm:$0xf]
      %v227 = vld [vmem:[%s166 + $0xd0] sm:$0xf]
      %v228 = vld [vmem:[%s166 + $0xd4] sm:$0xf]
      %v229 = vld [vmem:[%s166 + $0xd8] sm:$0xf]
      %v230 = vld [vmem:[%s166 + $0xdc] sm:$0xf]
      %v231 = vld [vmem:[%s166 + $0xe0] sm:$0xf]
      %v232 = vld [vmem:[%s166 + $0xe4] sm:$0xf]
      %v233 = vld [vmem:[%s166 + $0xe8] sm:$0xf]
      %v234 = vld [vmem:[%s166 + $0xec] sm:$0xf]
      %v235 = vld [vmem:[%s166 + $0xf0] sm:$0xf]
      %v236 = vld [vmem:[%s166 + $0xf4] sm:$0xf]
      %v237 = vld [vmem:[%s166 + $0xf8] sm:$0xf]
      %v238 = vld [vmem:[%s166 + $0xfc] sm:$0xf]
      %v239 = vld [vmem:[%s166 + $0x100] sm:$0xf]
      %v240 = vld [vmem:[%s166 + $0x104] sm:$0xf]
      %v241 = vld [vmem:[%s166 + $0x108] sm:$0xf]
      %v242 = vld [vmem:[%s166 + $0x10c] sm:$0xf]
      %v243 = vld [vmem:[%s166 + $0x110] sm:$0xf]
      %v244 = vld [vmem:[%s166 + $0x114] sm:$0xf]
      %v245 = vld [vmem:[%s166 + $0x118] sm:$0xf]
      %v246 = vld [vmem:[%s166 + $0x11c] sm:$0xf]
      %v247 = vld [vmem:[%s166 + $0x120] sm:$0xf]
      %v248 = vld [vmem:[%s166 + $0x124] sm:$0xf]
      %v249 = vld [vmem:[%s166 + $0x128] sm:$0xf]
      %v250 = vld [vmem:[%s166 + $0x12c] sm:$0xf]
      %v251 = vld [vmem:[%s166 + $0x130] sm:$0xf]
      %v252 = vld [vmem:[%s166 + $0x134] sm:$0xf]
      %v253 = vld [vmem:[%s166 + $0x138] sm:$0xf]
      %v254 = vld [vmem:[%s166 + $0x13c] sm:$0xf]
      %v255 = vld [vmem:[%s166 + $0x140] sm:$0xf]
      %v256 = vld [vmem:[%s166 + $0x144] sm:$0xf]
      %v257 = vld [vmem:[%s166 + $0x148] sm:$0xf]
      %v258 = vld [vmem:[%s166 + $0x14c] sm:$0xf]
      %v259 = vld [vmem:[%s166 + $0x150] sm:$0xf]
      %v260 = vld [vmem:[%s166 + $0x154] sm:$0xf]
      %v261 = vld [vmem:[%s166 + $0x158] sm:$0xf]
      %v262 = vld [vmem:[%s166 + $0x15c] sm:$0xf]
      %v263 = vld [vmem:[%s166 + $0x160] sm:$0xf]
      %v264 = vld [vmem:[%s166 + $0x164] sm:$0xf]
      %v265 = vld [vmem:[%s166 + $0x168] sm:$0xf]
      %v266 = vld [vmem:[%s166 + $0x16c] sm:$0xf]
      %v267 = vld [vmem:[%s166 + $0x170] sm:$0xf]
      %v268 = vld [vmem:[%s166 + $0x174] sm:$0xf]
      %v269 = vld [vmem:[%s166 + $0x178] sm:$0xf]
      %v270 = vld [vmem:[%s166 + $0x17c] sm:$0xf]
      %v271 = vld [vmem:[%s166 + $0x180] sm:$0xf]
      %v272 = vld [vmem:[%s166 + $0x184] sm:$0xf]
      %v273 = vld [vmem:[%s166 + $0x188] sm:$0xf]
      %v274 = vld [vmem:[%s166 + $0x18c] sm:$0xf]
      %v275 = vld [vmem:[%s166 + $0x190] sm:$0xf]
      %v276 = vld [vmem:[%s166 + $0x194] sm:$0xf]
      %v277 = vld [vmem:[%s166 + $0x198] sm:$0xf]
      %v278 = vld [vmem:[%s166 + $0x19c] sm:$0xf]
      %v279 = vld [vmem:[%s166 + $0x1a0] sm:$0xf]
      %v280 = vld [vmem:[%s166 + $0x1a4] sm:$0xf]
      %v281 = vld [vmem:[%s166 + $0x1a8] sm:$0xf]
      %v282 = vld [vmem:[%s166 + $0x1ac] sm:$0xf]
      %v283 = vld [vmem:[%s166 + $0x1b0] sm:$0xf]
      %v284 = vld [vmem:[%s166 + $0x1b4] sm:$0xf]
      %v285 = vld [vmem:[%s166 + $0x1b8] sm:$0xf]
      %v286 = vld [vmem:[%s166 + $0x1bc] sm:$0xf]
      %v287 = vld [vmem:[%s166 + $0x1c0] sm:$0xf]
      %v288 = vld [vmem:[%s166 + $0x1c4] sm:$0xf]
      %v289 = vld [vmem:[%s166 + $0x1c8] sm:$0xf]
      %v290 = vld [vmem:[%s166 + $0x1cc] sm:$0xf]
      %v291 = vld [vmem:[%s166 + $0x1d0] sm:$0xf]
      %v292 = vld [vmem:[%s166 + $0x1d4] sm:$0xf]
      %v293 = vld [vmem:[%s166 + $0x1d8] sm:$0xf]
      %v294 = vld [vmem:[%s166 + $0x1dc] sm:$0xf]
      %v295 = vld [vmem:[%s166 + $0x1e0] sm:$0xf]
      %v296 = vld [vmem:[%s166 + $0x1e4] sm:$0xf]
      %v297 = vld [vmem:[%s166 + $0x1e8] sm:$0xf]
      %v298 = vld [vmem:[%s166 + $0x1ec] sm:$0xf]
      %v299 = vld [vmem:[%s166 + $0x1f0] sm:$0xf]
      %v300 = vld [vmem:[%s166 + $0x1f4] sm:$0xf]
      %v301 = vld [vmem:[%s166 + $0x1f8] sm:$0xf]
      %v302 = vld [vmem:[%s166 + $0x1fc] sm:$0xf]
      %v303 = vld [vmem:[%s1] sm:$0xf]
      %v304 = vld [vmem:[%s1 + $0x4] sm:$0xf]
      %v305 = vld [vmem:[%s1 + $0x8] sm:$0xf]
      %v306 = vld [vmem:[%s1 + $0xc] sm:$0xf]
      %v307 = vld [vmem:[%s1 + $0x10] sm:$0x3]
      %v308 = vld [vmem:[%s2] sm:$0x1]
      %v310 = vlaneseq
      %v311 = vshrl.u32 %v310, 7
      %v312 = vsub.s32 0, %v311
      %v313 = vrot.slane %v308, %v312
      %v443 = vunpack.c.l.b16 %v175
      %v444 = vunpack.c.l.b16 %v176
      %v445 = vunpack.c.l.b16 %v177
      %v446 = vunpack.c.l.b16 %v178
      %v447 = vunpack.c.l.b16 %v179
      %v448 = vunpack.c.l.b16 %v180
      %v449 = vunpack.c.l.b16 %v181
      %v450 = vunpack.c.l.b16 %v182
      %v451 = vunpack.c.l.b16 %v183
      %v452 = vunpack.c.l.b16 %v184
      %v453 = vunpack.c.l.b16 %v185
      %v454 = vunpack.c.l.b16 %v186
      %v455 = vunpack.c.l.b16 %v187
      %v456 = vunpack.c.l.b16 %v188
      %v457 = vunpack.c.l.b16 %v189
      %v458 = vunpack.c.l.b16 %v190
      %v459 = vunpack.c.l.b16 %v191
      %v460 = vunpack.c.l.b16 %v192
      %v461 = vunpack.c.l.b16 %v193
      %v462 = vunpack.c.l.b16 %v194
      %v463 = vunpack.c.l.b16 %v195
      %v464 = vunpack.c.l.b16 %v196
      %v465 = vunpack.c.l.b16 %v197
      %v466 = vunpack.c.l.b16 %v198
      %v467 = vunpack.c.l.b16 %v199
      %v468 = vunpack.c.l.b16 %v200
      %v469 = vunpack.c.l.b16 %v201
      %v470 = vunpack.c.l.b16 %v202
      %v471 = vunpack.c.l.b16 %v203
      %v472 = vunpack.c.l.b16 %v204
      %v473 = vunpack.c.l.b16 %v205
      %v474 = vunpack.c.l.b16 %v206
      %v475 = vunpack.c.l.b16 %v207
      %v476 = vunpack.c.l.b16 %v208
      %v477 = vunpack.c.l.b16 %v209
      %v478 = vunpack.c.l.b16 %v210
      %v479 = vunpack.c.l.b16 %v211
      %v480 = vunpack.c.l.b16 %v212
      %v481 = vunpack.c.l.b16 %v213
      %v482 = vunpack.c.l.b16 %v214
      %v483 = vunpack.c.l.b16 %v215
      %v484 = vunpack.c.l.b16 %v216
      %v485 = vunpack.c.l.b16 %v217
      %v486 = vunpack.c.l.b16 %v218
      %v487 = vunpack.c.l.b16 %v219
      %v488 = vunpack.c.l.b16 %v220
      %v489 = vunpack.c.l.b16 %v221
      %v490 = vunpack.c.l.b16 %v222
      %v491 = vunpack.c.l.b16 %v223
      %v492 = vunpack.c.l.b16 %v224
      %v493 = vunpack.c.l.b16 %v225
      %v494 = vunpack.c.l.b16 %v226
      %v495 = vunpack.c.l.b16 %v227
      %v496 = vunpack.c.l.b16 %v228
      %v497 = vunpack.c.l.b16 %v229
      %v498 = vunpack.c.l.b16 %v230
      %v499 = vunpack.c.l.b16 %v231
      %v500 = vunpack.c.l.b16 %v232
      %v501 = vunpack.c.l.b16 %v233
      %v502 = vunpack.c.l.b16 %v234
      %v503 = vunpack.c.l.b16 %v235
      %v504 = vunpack.c.l.b16 %v236
      %v505 = vunpack.c.l.b16 %v237
      %v506 = vunpack.c.l.b16 %v238
      %v507 = vunpack.c.l.b16 %v239
      %v508 = vunpack.c.l.b16 %v240
      %v509 = vunpack.c.l.b16 %v241
      %v510 = vunpack.c.l.b16 %v242
      %v511 = vunpack.c.l.b16 %v243
      %v512 = vunpack.c.l.b16 %v244
      %v513 = vunpack.c.l.b16 %v245
      %v514 = vunpack.c.l.b16 %v246
      %v515 = vunpack.c.l.b16 %v247
      %v516 = vunpack.c.l.b16 %v248
      %v517 = vunpack.c.l.b16 %v249
      %v518 = vunpack.c.l.b16 %v250
      %v519 = vunpack.c.l.b16 %v251
      %v520 = vunpack.c.l.b16 %v252
      %v521 = vunpack.c.l.b16 %v253
      %v522 = vunpack.c.l.b16 %v254
      %v523 = vunpack.c.l.b16 %v255
      %v524 = vunpack.c.l.b16 %v256
      %v525 = vunpack.c.l.b16 %v257
      %v526 = vunpack.c.l.b16 %v258
      %v527 = vunpack.c.l.b16 %v259
      %v528 = vunpack.c.l.b16 %v260
      %v529 = vunpack.c.l.b16 %v261
      %v530 = vunpack.c.l.b16 %v262
      %v531 = vunpack.c.l.b16 %v263
      %v532 = vunpack.c.l.b16 %v264
      %v533 = vunpack.c.l.b16 %v265
      %v534 = vunpack.c.l.b16 %v266
      %v535 = vunpack.c.l.b16 %v267
      %v536 = vunpack.c.l.b16 %v268
      %v537 = vunpack.c.l.b16 %v269
      %v538 = vunpack.c.l.b16 %v270
      %v539 = vunpack.c.l.b16 %v271
      %v540 = vunpack.c.l.b16 %v272
      %v541 = vunpack.c.l.b16 %v273
      %v542 = vunpack.c.l.b16 %v274
      %v543 = vunpack.c.l.b16 %v275
      %v544 = vunpack.c.l.b16 %v276
      %v545 = vunpack.c.l.b16 %v277
      %v546 = vunpack.c.l.b16 %v278
      %v547 = vunpack.c.l.b16 %v279
      %v548 = vunpack.c.l.b16 %v280
      %v549 = vunpack.c.l.b16 %v281
      %v550 = vunpack.c.l.b16 %v282
      %v551 = vunpack.c.l.b16 %v283
      %v552 = vunpack.c.l.b16 %v284
      %v553 = vunpack.c.l.b16 %v285
      %v554 = vunpack.c.l.b16 %v286
      %v555 = vunpack.c.l.b16 %v287
      %v556 = vunpack.c.l.b16 %v288
      %v557 = vunpack.c.l.b16 %v289
      %v558 = vunpack.c.l.b16 %v290
      %v559 = vunpack.c.l.b16 %v291
      %v560 = vunpack.c.l.b16 %v292
      %v561 = vunpack.c.l.b16 %v293
      %v562 = vunpack.c.l.b16 %v294
      %v563 = vunpack.c.l.b16 %v295
      %v564 = vunpack.c.l.b16 %v296
      %v565 = vunpack.c.l.b16 %v297
      %v566 = vunpack.c.l.b16 %v298
      %v567 = vunpack.c.l.b16 %v299
      %v568 = vunpack.c.l.b16 %v300
      %v569 = vunpack.c.l.b16 %v301
      %v570 = vunpack.c.l.b16 %v302
      %v571 = vpack.c.b16 %v444, %v443
      %v572 = vpack.c.b16 %v446, %v445
      %v573 = vpack.c.b16 %v448, %v447
      %v574 = vpack.c.b16 %v450, %v449
      %v575 = vpack.c.b16 %v452, %v451
      %v576 = vpack.c.b16 %v454, %v453
      %v577 = vpack.c.b16 %v456, %v455
      %v578 = vpack.c.b16 %v458, %v457
      %v579 = vpack.c.b16 %v460, %v459
      %v580 = vpack.c.b16 %v462, %v461
      %v581 = vpack.c.b16 %v464, %v463
      %v582 = vpack.c.b16 %v466, %v465
      %v583 = vpack.c.b16 %v468, %v467
      %v584 = vpack.c.b16 %v470, %v469
      %v585 = vpack.c.b16 %v472, %v471
      %v586 = vpack.c.b16 %v474, %v473
      %v587 = vpack.c.b16 %v476, %v475
      %v588 = vpack.c.b16 %v478, %v477
      %v589 = vpack.c.b16 %v480, %v479
      %v590 = vpack.c.b16 %v482, %v481
      %v591 = vpack.c.b16 %v484, %v483
      %v592 = vpack.c.b16 %v486, %v485
      %v593 = vpack.c.b16 %v488, %v487
      %v594 = vpack.c.b16 %v490, %v489
      %v595 = vpack.c.b16 %v492, %v491
      %v596 = vpack.c.b16 %v494, %v493
      %v597 = vpack.c.b16 %v496, %v495
      %v598 = vpack.c.b16 %v498, %v497
      %v599 = vpack.c.b16 %v500, %v499
      %v600 = vpack.c.b16 %v502, %v501
      %v601 = vpack.c.b16 %v504, %v503
      %v602 = vpack.c.b16 %v506, %v505
      %v603 = vpack.c.b16 %v508, %v507
      %v604 = vpack.c.b16 %v510, %v509
      %v605 = vpack.c.b16 %v512, %v511
      %v606 = vpack.c.b16 %v514, %v513
      %v607 = vpack.c.b16 %v516, %v515
      %v608 = vpack.c.b16 %v518, %v517
      %v609 = vpack.c.b16 %v520, %v519
      %v610 = vpack.c.b16 %v522, %v521
      %v611 = vpack.c.b16 %v524, %v523
      %v612 = vpack.c.b16 %v526, %v525
      %v613 = vpack.c.b16 %v528, %v527
      %v614 = vpack.c.b16 %v530, %v529
      %v615 = vpack.c.b16 %v532, %v531
      %v616 = vpack.c.b16 %v534, %v533
      %v617 = vpack.c.b16 %v536, %v535
      %v618 = vpack.c.b16 %v538, %v537
      %v619 = vpack.c.b16 %v540, %v539
      %v620 = vpack.c.b16 %v542, %v541
      %v621 = vpack.c.b16 %v544, %v543
      %v622 = vpack.c.b16 %v546, %v545
      %v623 = vpack.c.b16 %v548, %v547
      %v624 = vpack.c.b16 %v550, %v549
      %v625 = vpack.c.b16 %v552, %v551
      %v626 = vpack.c.b16 %v554, %v553
      %v627 = vpack.c.b16 %v556, %v555
      %v628 = vpack.c.b16 %v558, %v557
      %v629 = vpack.c.b16 %v560, %v559
      %v630 = vpack.c.b16 %v562, %v561
      %v631 = vpack.c.b16 %v564, %v563
      %v632 = vpack.c.b16 %v566, %v565
      %v633 = vpack.c.b16 %v568, %v567
      %v634 = vpack.c.b16 %v570, %v569
      %v640 = vunpack.c.l.b16 %v303
      %v641 = vunpack.c.l.b16 %v304
      %v642 = vunpack.c.l.b16 %v305
      %v643 = vunpack.c.l.b16 %v306
      %v644 = vunpack.c.l.b16 %v307
      %v645 = vpack.c.b16 %v641, %v640
      %v646 = vpack.c.b16 %v643, %v642
      %v647 = vpack.c.b16 %v644, %v644
      %vm650 = vcmask 293888
      %v652 = vsel %vm650, %v571, 0
      %v655 = vsel %vm650, %v572, 0
      %v658 = vsel %vm650, %v573, 0
      %v661 = vsel %vm650, %v574, 0
      %v664 = vsel %vm650, %v575, 0
      %v667 = vsel %vm650, %v576, 0
      %v670 = vsel %vm650, %v577, 0
      %v673 = vsel %vm650, %v578, 0
      %v676 = vsel %vm650, %v579, 0
      %v679 = vsel %vm650, %v580, 0
      %v682 = vsel %vm650, %v581, 0
      %v685 = vsel %vm650, %v582, 0
      %v688 = vsel %vm650, %v583, 0
      %v691 = vsel %vm650, %v584, 0
      %v694 = vsel %vm650, %v585, 0
      %v697 = vsel %vm650, %v586, 0
      %v700 = vsel %vm650, %v587, 0
      %v703 = vsel %vm650, %v588, 0
      %v706 = vsel %vm650, %v589, 0
      %v709 = vsel %vm650, %v590, 0
      %v712 = vsel %vm650, %v591, 0
      %v715 = vsel %vm650, %v592, 0
      %v718 = vsel %vm650, %v593, 0
      %v721 = vsel %vm650, %v594, 0
      %v724 = vsel %vm650, %v595, 0
      %v727 = vsel %vm650, %v596, 0
      %v730 = vsel %vm650, %v597, 0
      %v733 = vsel %vm650, %v598, 0
      %v736 = vsel %vm650, %v599, 0
      %v739 = vsel %vm650, %v600, 0
      %v742 = vsel %vm650, %v601, 0
      %v745 = vsel %vm650, %v602, 0
      %v748 = vsel %vm650, %v603, 0
      %v751 = vsel %vm650, %v604, 0
      %v754 = vsel %vm650, %v605, 0
      %v757 = vsel %vm650, %v606, 0
      %v760 = vsel %vm650, %v607, 0
      %v763 = vsel %vm650, %v608, 0
      %v766 = vsel %vm650, %v609, 0
      %v769 = vsel %vm650, %v610, 0
      %v772 = vsel %vm650, %v611, 0
      %v775 = vsel %vm650, %v612, 0
      %v778 = vsel %vm650, %v613, 0
      %v781 = vsel %vm650, %v614, 0
      %v784 = vsel %vm650, %v615, 0
      %v787 = vsel %vm650, %v616, 0
      %v790 = vsel %vm650, %v617, 0
      %v793 = vsel %vm650, %v618, 0
      %v796 = vsel %vm650, %v619, 0
      %v799 = vsel %vm650, %v620, 0
      %v802 = vsel %vm650, %v621, 0
      %v805 = vsel %vm650, %v622, 0
      %v808 = vsel %vm650, %v623, 0
      %v811 = vsel %vm650, %v624, 0
      %v814 = vsel %vm650, %v625, 0
      %v817 = vsel %vm650, %v626, 0
      %v820 = vsel %vm650, %v627, 0
      %v823 = vsel %vm650, %v628, 0
      %v826 = vsel %vm650, %v629, 0
      %v829 = vsel %vm650, %v630, 0
      %v832 = vsel %vm650, %v631, 0
      %v835 = vsel %vm650, %v632, 0
      %v838 = vsel %vm650, %v633, 0
      %v841 = vsel %vm650, %v634, 0
      %vm843 = vcmask 1041408
      %v845 = vsel %vm843, %v647, 0
      %847 = vmatprep.subr.bf16.mxu0 0
      %848 = vmatpush1.bf16.msra.mxu0 %v645
      %849 = vmatprep.subr.bf16.mxu0 0
      %850 = vmatpush1.bf16.msra.mxu0 %v646
      %851 = vmatprep.subr.bf16.mxu0 0
      %852 = vmatpush1.bf16.msra.mxu0 %v845
      %853 = vmatprep.subr.bf16.mxu0 0
      %854 = vmatpush1.bf16.msra.mxu0 0
      %855 = vmatprep.subr.bf16.mxu0 0
      %856 = vmatpush1.bf16.msra.mxu0 0
      %857 = vmatprep.subr.bf16.mxu0 0
      %858 = vmatpush1.bf16.msra.mxu0 0
      %859 = vmatprep.subr.bf16.mxu0 0
      %860 = vmatpush1.bf16.msra.mxu0 0
      %861 = vmatprep.subr.bf16.mxu0 0
      %862 = vmatpush1.bf16.msra.mxu0 0
      %863 = vmatprep.subr.bf16.mxu0 0
      %864 = vmatpush1.bf16.msra.mxu0 0
      %865 = vmatprep.subr.bf16.mxu0 0
      %866 = vmatpush1.bf16.msra.mxu0 0
      %867 = vmatprep.subr.bf16.mxu0 0
      %868 = vmatpush1.bf16.msra.mxu0 0
      %869 = vmatprep.subr.bf16.mxu0 0
      %870 = vmatpush1.bf16.msra.mxu0 0
      %871 = vmatprep.subr.bf16.mxu0 0
      %872 = vmatpush1.bf16.msra.mxu0 0
      %873 = vmatprep.subr.bf16.mxu0 0
      %874 = vmatpush1.bf16.msra.mxu0 0
      %875 = vmatprep.subr.bf16.mxu0 0
      %876 = vmatpush1.bf16.msra.mxu0 0
      %877 = vmatprep.subr.bf16.mxu0 0
      %878 = vmatpush1.bf16.msra.mxu0 0
      %879 = vmatprep.mubr.bf16.mxu0 0
      %880 = vmatmul.mubr.bf16.gmra.mrb[0].mxu0 %v652
      %v881 = vpop.f32.mrb[0].mxu0
      %v882 = vadd.f32 %v313, %v881
      %v883 = vpop.f32.mrb[0].mxu0
      %v884 = vpop.f32.mrb[0].mxu0
      %v885 = vadd.f32 %v313, %v884
      %v886 = vpop.f32.mrb[0].mxu0
      %887 = vmatprep.mubr.bf16.mxu0 0
      %888 = vmatmul.mubr.bf16.gmra.mrb[0].mxu0 %v655
      %v889 = vpop.f32.mrb[0].mxu0
      %v890 = vadd.f32 %v313, %v889
      %v891 = vpop.f32.mrb[0].mxu0
      %v892 = vpop.f32.mrb[0].mxu0
      %v893 = vadd.f32 %v313, %v892
      %v894 = vpop.f32.mrb[0].mxu0
      %895 = vmatprep.mubr.bf16.mxu0 0
      %896 = vmatmul.mubr.bf16.gmra.mrb[0].mxu0 %v658
      %v897 = vpop.f32.mrb[0].mxu0
      %v898 = vadd.f32 %v313, %v897
      %v899 = vpop.f32.mrb[0].mxu0
      %v900 = vpop.f32.mrb[0].mxu0
      %v901 = vadd.f32 %v313, %v900
      %v902 = vpop.f32.mrb[0].mxu0
      %903 = vmatprep.mubr.bf16.mxu0 0
      %904 = vmatmul.mubr.bf16.gmra.mrb[0].mxu0 %v661
      %v905 = vpop.f32.mrb[0].mxu0
      %v906 = vadd.f32 %v313, %v905
      %v907 = vpop.f32.mrb[0].mxu0
      %v908 = vpop.f32.mrb[0].mxu0
      %v909 = vadd.f32 %v313, %v908
      %v910 = vpop.f32.mrb[0].mxu0
      %911 = vmatprep.mubr.bf16.mxu0 0
      %912 = vmatmul.mubr.bf16.gmra.mrb[0].mxu0 %v664
      %v913 = vpop.f32.mrb[0].mxu0
      %v914 = vadd.f32 %v313, %v913
      %v915 = vpop.f32.mrb[0].mxu0
      %v916 = vpop.f32.mrb[0].mxu0
      %v917 = vadd.f32 %v313, %v916
      %v918 = vpop.f32.mrb[0].mxu0
      %919 = vmatprep.mubr.bf16.mxu0 0
      %920 = vmatmul.mubr.bf16.gmra.mrb[0].mxu0 %v667
      %v921 = vpop.f32.mrb[0].mxu0
      %v922 = vadd.f32 %v313, %v921
      %v923 = vpop.f32.mrb[0].mxu0
      %v924 = vpop.f32.mrb[0].mxu0
      %v925 = vadd.f32 %v313, %v924
      %v926 = vpop.f32.mrb[0].mxu0
      %927 = vmatprep.mubr.bf16.mxu0 0
      %928 = vmatmul.mubr.bf16.gmra.mrb[0].mxu0 %v670
      %v929 = vpop.f32.mrb[0].mxu0
      %v930 = vadd.f32 %v313, %v929
      %v931 = vpop.f32.mrb[0].mxu0
      %v932 = vpop.f32.mrb[0].mxu0
      %v933 = vadd.f32 %v313, %v932
      %v934 = vpop.f32.mrb[0].mxu0
      %935 = vmatprep.mubr.bf16.mxu0 0
      %936 = vmatmul.mubr.bf16.gmra.mrb[0].mxu0 %v673
      %v937 = vpop.f32.mrb[0].mxu0
      %v938 = vadd.f32 %v313, %v937
      %v939 = vpop.f32.mrb[0].mxu0
      %v940 = vpop.f32.mrb[0].mxu0
      %v941 = vadd.f32 %v313, %v940
      %v942 = vpop.f32.mrb[0].mxu0
      %943 = vmatprep.mubr.bf16.mxu0 0
      %944 = vmatmul.mubr.bf16.gmra.mrb[0].mxu0 %v676
      %v945 = vpop.f32.mrb[0].mxu0
      %v946 = vadd.f32 %v313, %v945
      %v947 = vpop.f32.mrb[0].mxu0
      %v948 = vpop.f32.mrb[0].mxu0
      %v949 = vadd.f32 %v313, %v948
      %v950 = vpop.f32.mrb[0].mxu0
      %951 = vmatprep.mubr.bf16.mxu0 0
      %952 = vmatmul.mubr.bf16.gmra.mrb[0].mxu0 %v679
      %v953 = vpop.f32.mrb[0].mxu0
      %v954 = vadd.f32 %v313, %v953
      %v955 = vpop.f32.mrb[0].mxu0
      %v956 = vpop.f32.mrb[0].mxu0
      %v957 = vadd.f32 %v313, %v956
      %v958 = vpop.f32.mrb[0].mxu0
      %959 = vmatprep.mubr.bf16.mxu0 0
      %960 = vmatmul.mubr.bf16.gmra.mrb[0].mxu0 %v682
      %v961 = vpop.f32.mrb[0].mxu0
      %v962 = vadd.f32 %v313, %v961
      %v963 = vpop.f32.mrb[0].mxu0
      %v964 = vpop.f32.mrb[0].mxu0
      %v965 = vadd.f32 %v313, %v964
      %v966 = vpop.f32.mrb[0].mxu0
      %967 = vmatprep.mubr.bf16.mxu0 0
      %968 = vmatmul.mubr.bf16.gmra.mrb[0].mxu0 %v685
      %v969 = vpop.f32.mrb[0].mxu0
      %v970 = vadd.f32 %v313, %v969
      %v971 = vpop.f32.mrb[0].mxu0
      %v972 = vpop.f32.mrb[0].mxu0
      %v973 = vadd.f32 %v313, %v972
      %v974 = vpop.f32.mrb[0].mxu0
      %975 = vmatprep.mubr.bf16.mxu0 0
      %976 = vmatmul.mubr.bf16.gmra.mrb[0].mxu0 %v688
      %v977 = vpop.f32.mrb[0].mxu0
      %v978 = vadd.f32 %v313, %v977
      %v979 = vpop.f32.mrb[0].mxu0
      %v980 = vpop.f32.mrb[0].mxu0
      %v981 = vadd.f32 %v313, %v980
      %v982 = vpop.f32.mrb[0].mxu0
      %983 = vmatprep.mubr.bf16.mxu0 0
      %984 = vmatmul.mubr.bf16.gmra.mrb[0].mxu0 %v691
      %v985 = vpop.f32.mrb[0].mxu0
      %v986 = vadd.f32 %v313, %v985
      %v987 = vpop.f32.mrb[0].mxu0
      %v988 = vpop.f32.mrb[0].mxu0
      %v989 = vadd.f32 %v313, %v988
      %v990 = vpop.f32.mrb[0].mxu0
      %991 = vmatprep.mubr.bf16.mxu0 0
      %992 = vmatmul.mubr.bf16.gmra.mrb[0].mxu0 %v694
      %v993 = vpop.f32.mrb[0].mxu0
      %v994 = vadd.f32 %v313, %v993
      %v995 = vpop.f32.mrb[0].mxu0
      %v996 = vpop.f32.mrb[0].mxu0
      %v997 = vadd.f32 %v313, %v996
      %v998 = vpop.f32.mrb[0].mxu0
      %999 = vmatprep.mubr.bf16.mxu0 0
      %1000 = vmatmul.mubr.bf16.gmra.mrb[0].mxu0 %v697
      %v1001 = vpop.f32.mrb[0].mxu0
      %v1002 = vadd.f32 %v313, %v1001
      %v1003 = vpop.f32.mrb[0].mxu0
      %v1004 = vpop.f32.mrb[0].mxu0
      %v1005 = vadd.f32 %v313, %v1004
      %v1006 = vpop.f32.mrb[0].mxu0
      %1007 = vmatprep.mubr.bf16.mxu0 0
      %1008 = vmatmul.mubr.bf16.gmra.mrb[0].mxu0 %v700
      %v1009 = vpop.f32.mrb[0].mxu0
      %v1010 = vadd.f32 %v313, %v1009
      %v1011 = vpop.f32.mrb[0].mxu0
      %v1012 = vpop.f32.mrb[0].mxu0
      %v1013 = vadd.f32 %v313, %v1012
      %v1014 = vpop.f32.mrb[0].mxu0
      %1015 = vmatprep.mubr.bf16.mxu0 0
      %1016 = vmatmul.mubr.bf16.gmra.mrb[0].mxu0 %v703
      %v1017 = vpop.f32.mrb[0].mxu0
      %v1018 = vadd.f32 %v313, %v1017
      %v1019 = vpop.f32.mrb[0].mxu0
      %v1020 = vpop.f32.mrb[0].mxu0
      %v1021 = vadd.f32 %v313, %v1020
      %v1022 = vpop.f32.mrb[0].mxu0
      %1023 = vmatprep.mubr.bf16.mxu0 0
      %1024 = vmatmul.mubr.bf16.gmra.mrb[0].mxu0 %v706
      %v1025 = vpop.f32.mrb[0].mxu0
      %v1026 = vadd.f32 %v313, %v1025
      %v1027 = vpop.f32.mrb[0].mxu0
      %v1028 = vpop.f32.mrb[0].mxu0
      %v1029 = vadd.f32 %v313, %v1028
      %v1030 = vpop.f32.mrb[0].mxu0
      %1031 = vmatprep.mubr.bf16.mxu0 0
      %1032 = vmatmul.mubr.bf16.gmra.mrb[0].mxu0 %v709
      %v1033 = vpop.f32.mrb[0].mxu0
      %v1034 = vadd.f32 %v313, %v1033
      %v1035 = vpop.f32.mrb[0].mxu0
      %v1036 = vpop.f32.mrb[0].mxu0
      %v1037 = vadd.f32 %v313, %v1036
      %v1038 = vpop.f32.mrb[0].mxu0
      %1039 = vmatprep.mubr.bf16.mxu0 0
      %1040 = vmatmul.mubr.bf16.gmra.mrb[0].mxu0 %v712
      %v1041 = vpop.f32.mrb[0].mxu0
      %v1042 = vadd.f32 %v313, %v1041
      %v1043 = vpop.f32.mrb[0].mxu0
      %v1044 = vpop.f32.mrb[0].mxu0
      %v1045 = vadd.f32 %v313, %v1044
      %v1046 = vpop.f32.mrb[0].mxu0
      %1047 = vmatprep.mubr.bf16.mxu0 0
      %1048 = vmatmul.mubr.bf16.gmra.mrb[0].mxu0 %v715
      %v1049 = vpop.f32.mrb[0].mxu0
      %v1050 = vadd.f32 %v313, %v1049
      %v1051 = vpop.f32.mrb[0].mxu0
      %v1052 = vpop.f32.mrb[0].mxu0
      %v1053 = vadd.f32 %v313, %v1052
      %v1054 = vpop.f32.mrb[0].mxu0
      %1055 = vmatprep.mubr.bf16.mxu0 0
      %1056 = vmatmul.mubr.bf16.gmra.mrb[0].mxu0 %v718
      %v1057 = vpop.f32.mrb[0].mxu0
      %v1058 = vadd.f32 %v313, %v1057
      %v1059 = vpop.f32.mrb[0].mxu0
      %v1060 = vpop.f32.mrb[0].mxu0
      %v1061 = vadd.f32 %v313, %v1060
      %v1062 = vpop.f32.mrb[0].mxu0
      %1063 = vmatprep.mubr.bf16.mxu0 0
      %1064 = vmatmul.mubr.bf16.gmra.mrb[0].mxu0 %v721
      %v1065 = vpop.f32.mrb[0].mxu0
      %v1066 = vadd.f32 %v313, %v1065
      %v1067 = vpop.f32.mrb[0].mxu0
      %v1068 = vpop.f32.mrb[0].mxu0
      %v1069 = vadd.f32 %v313, %v1068
      %v1070 = vpop.f32.mrb[0].mxu0
      %1071 = vmatprep.mubr.bf16.mxu0 0
      %1072 = vmatmul.mubr.bf16.gmra.mrb[0].mxu0 %v724
      %v1073 = vpop.f32.mrb[0].mxu0
      %v1074 = vadd.f32 %v313, %v1073
      %v1075 = vpop.f32.mrb[0].mxu0
      %v1076 = vpop.f32.mrb[0].mxu0
      %v1077 = vadd.f32 %v313, %v1076
      %v1078 = vpop.f32.mrb[0].mxu0
      %1079 = vmatprep.mubr.bf16.mxu0 0
      %1080 = vmatmul.mubr.bf16.gmra.mrb[0].mxu0 %v727
      %v1081 = vpop.f32.mrb[0].mxu0
      %v1082 = vadd.f32 %v313, %v1081
      %v1083 = vpop.f32.mrb[0].mxu0
      %v1084 = vpop.f32.mrb[0].mxu0
      %v1085 = vadd.f32 %v313, %v1084
      %v1086 = vpop.f32.mrb[0].mxu0
      %1087 = vmatprep.mubr.bf16.mxu0 0
      %1088 = vmatmul.mubr.bf16.gmra.mrb[0].mxu0 %v730
      %v1089 = vpop.f32.mrb[0].mxu0
      %v1090 = vadd.f32 %v313, %v1089
      %v1091 = vpop.f32.mrb[0].mxu0
      %v1092 = vpop.f32.mrb[0].mxu0
      %v1093 = vadd.f32 %v313, %v1092
      %v1094 = vpop.f32.mrb[0].mxu0
      %1095 = vmatprep.mubr.bf16.mxu0 0
      %1096 = vmatmul.mubr.bf16.gmra.mrb[0].mxu0 %v733
      %v1097 = vpop.f32.mrb[0].mxu0
      %v1098 = vadd.f32 %v313, %v1097
      %v1099 = vpop.f32.mrb[0].mxu0
      %v1100 = vpop.f32.mrb[0].mxu0
      %v1101 = vadd.f32 %v313, %v1100
      %v1102 = vpop.f32.mrb[0].mxu0
      %1103 = vmatprep.mubr.bf16.mxu0 0
      %1104 = vmatmul.mubr.bf16.gmra.mrb[0].mxu0 %v736
      %v1105 = vpop.f32.mrb[0].mxu0
      %v1106 = vadd.f32 %v313, %v1105
      %v1107 = vpop.f32.mrb[0].mxu0
      %v1108 = vpop.f32.mrb[0].mxu0
      %v1109 = vadd.f32 %v313, %v1108
      %v1110 = vpop.f32.mrb[0].mxu0
      %1111 = vmatprep.mubr.bf16.mxu0 0
      %1112 = vmatmul.mubr.bf16.gmra.mrb[0].mxu0 %v739
      %v1113 = vpop.f32.mrb[0].mxu0
      %v1114 = vadd.f32 %v313, %v1113
      %v1115 = vpop.f32.mrb[0].mxu0
      %v1116 = vpop.f32.mrb[0].mxu0
      %v1117 = vadd.f32 %v313, %v1116
      %v1118 = vpop.f32.mrb[0].mxu0
      %1119 = vmatprep.mubr.bf16.mxu0 0
      %1120 = vmatmul.mubr.bf16.gmra.mrb[0].mxu0 %v742
      %v1121 = vpop.f32.mrb[0].mxu0
      %v1122 = vadd.f32 %v313, %v1121
      %v1123 = vpop.f32.mrb[0].mxu0
      %v1124 = vpop.f32.mrb[0].mxu0
      %v1125 = vadd.f32 %v313, %v1124
      %v1126 = vpop.f32.mrb[0].mxu0
      %1127 = vmatprep.mubr.bf16.mxu0 0
      %1128 = vmatmul.mubr.bf16.gmra.mrb[0].mxu0 %v745
      %v1129 = vpop.f32.mrb[0].mxu0
      %v1130 = vadd.f32 %v313, %v1129
      %v1131 = vpop.f32.mrb[0].mxu0
      %v1132 = vpop.f32.mrb[0].mxu0
      %v1133 = vadd.f32 %v313, %v1132
      %v1134 = vpop.f32.mrb[0].mxu0
      %1135 = vmatprep.mubr.bf16.mxu0 0
      %1136 = vmatmul.mubr.bf16.gmra.mrb[0].mxu0 %v748
      %v1137 = vpop.f32.mrb[0].mxu0
      %v1138 = vadd.f32 %v313, %v1137
      %v1139 = vpop.f32.mrb[0].mxu0
      %v1140 = vpop.f32.mrb[0].mxu0
      %v1141 = vadd.f32 %v313, %v1140
      %v1142 = vpop.f32.mrb[0].mxu0
      %1143 = vmatprep.mubr.bf16.mxu0 0
      %1144 = vmatmul.mubr.bf16.gmra.mrb[0].mxu0 %v751
      %v1145 = vpop.f32.mrb[0].mxu0
      %v1146 = vadd.f32 %v313, %v1145
      %v1147 = vpop.f32.mrb[0].mxu0
      %v1148 = vpop.f32.mrb[0].mxu0
      %v1149 = vadd.f32 %v313, %v1148
      %v1150 = vpop.f32.mrb[0].mxu0
      %1151 = vmatprep.mubr.bf16.mxu0 0
      %1152 = vmatmul.mubr.bf16.gmra.mrb[0].mxu0 %v754
      %v1153 = vpop.f32.mrb[0].mxu0
      %v1154 = vadd.f32 %v313, %v1153
      %v1155 = vpop.f32.mrb[0].mxu0
      %v1156 = vpop.f32.mrb[0].mxu0
      %v1157 = vadd.f32 %v313, %v1156
      %v1158 = vpop.f32.mrb[0].mxu0
      %1159 = vmatprep.mubr.bf16.mxu0 0
      %1160 = vmatmul.mubr.bf16.gmra.mrb[0].mxu0 %v757
      %v1161 = vpop.f32.mrb[0].mxu0
      %v1162 = vadd.f32 %v313, %v1161
      %v1163 = vpop.f32.mrb[0].mxu0
      %v1164 = vpop.f32.mrb[0].mxu0
      %v1165 = vadd.f32 %v313, %v1164
      %v1166 = vpop.f32.mrb[0].mxu0
      %1167 = vmatprep.mubr.bf16.mxu0 0
      %1168 = vmatmul.mubr.bf16.gmra.mrb[0].mxu0 %v760
      %v1169 = vpop.f32.mrb[0].mxu0
      %v1170 = vadd.f32 %v313, %v1169
      %v1171 = vpop.f32.mrb[0].mxu0
      %v1172 = vpop.f32.mrb[0].mxu0
      %v1173 = vadd.f32 %v313, %v1172
      %v1174 = vpop.f32.mrb[0].mxu0
      %1175 = vmatprep.mubr.bf16.mxu0 0
      %1176 = vmatmul.mubr.bf16.gmra.mrb[0].mxu0 %v763
      %v1177 = vpop.f32.mrb[0].mxu0
      %v1178 = vadd.f32 %v313, %v1177
      %v1179 = vpop.f32.mrb[0].mxu0
      %v1180 = vpop.f32.mrb[0].mxu0
      %v1181 = vadd.f32 %v313, %v1180
      %v1182 = vpop.f32.mrb[0].mxu0
      %1183 = vmatprep.mubr.bf16.mxu0 0
      %1184 = vmatmul.mubr.bf16.gmra.mrb[0].mxu0 %v766
      %v1185 = vpop.f32.mrb[0].mxu0
      %v1186 = vadd.f32 %v313, %v1185
      %v1187 = vpop.f32.mrb[0].mxu0
      %v1188 = vpop.f32.mrb[0].mxu0
      %v1189 = vadd.f32 %v313, %v1188
      %v1190 = vpop.f32.mrb[0].mxu0
      %1191 = vmatprep.mubr.bf16.mxu0 0
      %1192 = vmatmul.mubr.bf16.gmra.mrb[0].mxu0 %v769
      %v1193 = vpop.f32.mrb[0].mxu0
      %v1194 = vadd.f32 %v313, %v1193
      %v1195 = vpop.f32.mrb[0].mxu0
      %v1196 = vpop.f32.mrb[0].mxu0
      %v1197 = vadd.f32 %v313, %v1196
      %v1198 = vpop.f32.mrb[0].mxu0
      %1199 = vmatprep.mubr.bf16.mxu0 0
      %1200 = vmatmul.mubr.bf16.gmra.mrb[0].mxu0 %v772
      %v1201 = vpop.f32.mrb[0].mxu0
      %v1202 = vadd.f32 %v313, %v1201
      %v1203 = vpop.f32.mrb[0].mxu0
      %v1204 = vpop.f32.mrb[0].mxu0
      %v1205 = vadd.f32 %v313, %v1204
      %v1206 = vpop.f32.mrb[0].mxu0
      %1207 = vmatprep.mubr.bf16.mxu0 0
      %1208 = vmatmul.mubr.bf16.gmra.mrb[0].mxu0 %v775
      %v1209 = vpop.f32.mrb[0].mxu0
      %v1210 = vadd.f32 %v313, %v1209
      %v1211 = vpop.f32.mrb[0].mxu0
      %v1212 = vpop.f32.mrb[0].mxu0
      %v1213 = vadd.f32 %v313, %v1212
      %v1214 = vpop.f32.mrb[0].mxu0
      %1215 = vmatprep.mubr.bf16.mxu0 0
      %1216 = vmatmul.mubr.bf16.gmra.mrb[0].mxu0 %v778
      %v1217 = vpop.f32.mrb[0].mxu0
      %v1218 = vadd.f32 %v313, %v1217
      %v1219 = vpop.f32.mrb[0].mxu0
      %v1220 = vpop.f32.mrb[0].mxu0
      %v1221 = vadd.f32 %v313, %v1220
      %v1222 = vpop.f32.mrb[0].mxu0
      %1223 = vmatprep.mubr.bf16.mxu0 0
      %1224 = vmatmul.mubr.bf16.gmra.mrb[0].mxu0 %v781
      %v1225 = vpop.f32.mrb[0].mxu0
      %v1226 = vadd.f32 %v313, %v1225
      %v1227 = vpop.f32.mrb[0].mxu0
      %v1228 = vpop.f32.mrb[0].mxu0
      %v1229 = vadd.f32 %v313, %v1228
      %v1230 = vpop.f32.mrb[0].mxu0
      %1231 = vmatprep.mubr.bf16.mxu0 0
      %1232 = vmatmul.mubr.bf16.gmra.mrb[0].mxu0 %v784
      %v1233 = vpop.f32.mrb[0].mxu0
      %v1234 = vadd.f32 %v313, %v1233
      %v1235 = vpop.f32.mrb[0].mxu0
      %v1236 = vpop.f32.mrb[0].mxu0
      %v1237 = vadd.f32 %v313, %v1236
      %v1238 = vpop.f32.mrb[0].mxu0
      %1239 = vmatprep.mubr.bf16.mxu0 0
      %1240 = vmatmul.mubr.bf16.gmra.mrb[0].mxu0 %v787
      %v1241 = vpop.f32.mrb[0].mxu0
      %v1242 = vadd.f32 %v313, %v1241
      %v1243 = vpop.f32.mrb[0].mxu0
      %v1244 = vpop.f32.mrb[0].mxu0
      %v1245 = vadd.f32 %v313, %v1244
      %v1246 = vpop.f32.mrb[0].mxu0
      %1247 = vmatprep.mubr.bf16.mxu0 0
      %1248 = vmatmul.mubr.bf16.gmra.mrb[0].mxu0 %v790
      %v1249 = vpop.f32.mrb[0].mxu0
      %v1250 = vadd.f32 %v313, %v1249
      %v1251 = vpop.f32.mrb[0].mxu0
      %v1252 = vpop.f32.mrb[0].mxu0
      %v1253 = vadd.f32 %v313, %v1252
      %v1254 = vpop.f32.mrb[0].mxu0
      %1255 = vmatprep.mubr.bf16.mxu0 0
      %1256 = vmatmul.mubr.bf16.gmra.mrb[0].mxu0 %v793
      %v1257 = vpop.f32.mrb[0].mxu0
      %v1258 = vadd.f32 %v313, %v1257
      %v1259 = vpop.f32.mrb[0].mxu0
      %v1260 = vpop.f32.mrb[0].mxu0
      %v1261 = vadd.f32 %v313, %v1260
      %v1262 = vpop.f32.mrb[0].mxu0
      %1263 = vmatprep.mubr.bf16.mxu0 0
      %1264 = vmatmul.mubr.bf16.gmra.mrb[0].mxu0 %v796
      %v1265 = vpop.f32.mrb[0].mxu0
      %v1266 = vadd.f32 %v313, %v1265
      %v1267 = vpop.f32.mrb[0].mxu0
      %v1268 = vpop.f32.mrb[0].mxu0
      %v1269 = vadd.f32 %v313, %v1268
      %v1270 = vpop.f32.mrb[0].mxu0
      %1271 = vmatprep.mubr.bf16.mxu0 0
      %1272 = vmatmul.mubr.bf16.gmra.mrb[0].mxu0 %v799
      %v1273 = vpop.f32.mrb[0].mxu0
      %v1274 = vadd.f32 %v313, %v1273
      %v1275 = vpop.f32.mrb[0].mxu0
      %v1276 = vpop.f32.mrb[0].mxu0
      %v1277 = vadd.f32 %v313, %v1276
      %v1278 = vpop.f32.mrb[0].mxu0
      %1279 = vmatprep.mubr.bf16.mxu0 0
      %1280 = vmatmul.mubr.bf16.gmra.mrb[0].mxu0 %v802
      %v1281 = vpop.f32.mrb[0].mxu0
      %v1282 = vadd.f32 %v313, %v1281
      %v1283 = vpop.f32.mrb[0].mxu0
      %v1284 = vpop.f32.mrb[0].mxu0
      %v1285 = vadd.f32 %v313, %v1284
      %v1286 = vpop.f32.mrb[0].mxu0
      %1287 = vmatprep.mubr.bf16.mxu0 0
      %1288 = vmatmul.mubr.bf16.gmra.mrb[0].mxu0 %v805
      %v1289 = vpop.f32.mrb[0].mxu0
      %v1290 = vadd.f32 %v313, %v1289
      %v1291 = vpop.f32.mrb[0].mxu0
      %v1292 = vpop.f32.mrb[0].mxu0
      %v1293 = vadd.f32 %v313, %v1292
      %v1294 = vpop.f32.mrb[0].mxu0
      %1295 = vmatprep.mubr.bf16.mxu0 0
      %1296 = vmatmul.mubr.bf16.gmra.mrb[0].mxu0 %v808
      %v1297 = vpop.f32.mrb[0].mxu0
      %v1298 = vadd.f32 %v313, %v1297
      %v1299 = vpop.f32.mrb[0].mxu0
      %v1300 = vpop.f32.mrb[0].mxu0
      %v1301 = vadd.f32 %v313, %v1300
      %v1302 = vpop.f32.mrb[0].mxu0
      %1303 = vmatprep.mubr.bf16.mxu0 0
      %1304 = vmatmul.mubr.bf16.gmra.mrb[0].mxu0 %v811
      %v1305 = vpop.f32.mrb[0].mxu0
      %v1306 = vadd.f32 %v313, %v1305
      %v1307 = vpop.f32.mrb[0].mxu0
      %v1308 = vpop.f32.mrb[0].mxu0
      %v1309 = vadd.f32 %v313, %v1308
      %v1310 = vpop.f32.mrb[0].mxu0
      %1311 = vmatprep.mubr.bf16.mxu0 0
      %1312 = vmatmul.mubr.bf16.gmra.mrb[0].mxu0 %v814
      %v1313 = vpop.f32.mrb[0].mxu0
      %v1314 = vadd.f32 %v313, %v1313
      %v1315 = vpop.f32.mrb[0].mxu0
      %v1316 = vpop.f32.mrb[0].mxu0
      %v1317 = vadd.f32 %v313, %v1316
      %v1318 = vpop.f32.mrb[0].mxu0
      %1319 = vmatprep.mubr.bf16.mxu0 0
      %1320 = vmatmul.mubr.bf16.gmra.mrb[0].mxu0 %v817
      %v1321 = vpop.f32.mrb[0].mxu0
      %v1322 = vadd.f32 %v313, %v1321
      %v1323 = vpop.f32.mrb[0].mxu0
      %v1324 = vpop.f32.mrb[0].mxu0
      %v1325 = vadd.f32 %v313, %v1324
      %v1326 = vpop.f32.mrb[0].mxu0
      %1327 = vmatprep.mubr.bf16.mxu0 0
      %1328 = vmatmul.mubr.bf16.gmra.mrb[0].mxu0 %v820
      %v1329 = vpop.f32.mrb[0].mxu0
      %v1330 = vadd.f32 %v313, %v1329
      %v1331 = vpop.f32.mrb[0].mxu0
      %v1332 = vpop.f32.mrb[0].mxu0
      %v1333 = vadd.f32 %v313, %v1332
      %v1334 = vpop.f32.mrb[0].mxu0
      %1335 = vmatprep.mubr.bf16.mxu0 0
      %1336 = vmatmul.mubr.bf16.gmra.mrb[0].mxu0 %v823
      %v1337 = vpop.f32.mrb[0].mxu0
      %v1338 = vadd.f32 %v313, %v1337
      %v1339 = vpop.f32.mrb[0].mxu0
      %v1340 = vpop.f32.mrb[0].mxu0
      %v1341 = vadd.f32 %v313, %v1340
      %v1342 = vpop.f32.mrb[0].mxu0
      %1343 = vmatprep.mubr.bf16.mxu0 0
      %1344 = vmatmul.mubr.bf16.gmra.mrb[0].mxu0 %v826
      %v1345 = vpop.f32.mrb[0].mxu0
      %v1346 = vadd.f32 %v313, %v1345
      %v1347 = vpop.f32.mrb[0].mxu0
      %v1348 = vpop.f32.mrb[0].mxu0
      %v1349 = vadd.f32 %v313, %v1348
      %v1350 = vpop.f32.mrb[0].mxu0
      %1351 = vmatprep.mubr.bf16.mxu0 0
      %1352 = vmatmul.mubr.bf16.gmra.mrb[0].mxu0 %v829
      %v1353 = vpop.f32.mrb[0].mxu0
      %v1354 = vadd.f32 %v313, %v1353
      %v1355 = vpop.f32.mrb[0].mxu0
      %v1356 = vpop.f32.mrb[0].mxu0
      %v1357 = vadd.f32 %v313, %v1356
      %v1358 = vpop.f32.mrb[0].mxu0
      %1359 = vmatprep.mubr.bf16.mxu0 0
      %1360 = vmatmul.mubr.bf16.gmra.mrb[0].mxu0 %v832
      %v1361 = vpop.f32.mrb[0].mxu0
      %v1362 = vadd.f32 %v313, %v1361
      %v1363 = vpop.f32.mrb[0].mxu0
      %v1364 = vpop.f32.mrb[0].mxu0
      %v1365 = vadd.f32 %v313, %v1364
      %v1366 = vpop.f32.mrb[0].mxu0
      %1367 = vmatprep.mubr.bf16.mxu0 0
      %1368 = vmatmul.mubr.bf16.gmra.mrb[0].mxu0 %v835
      %v1369 = vpop.f32.mrb[0].mxu0
      %v1370 = vadd.f32 %v313, %v1369
      %v1371 = vpop.f32.mrb[0].mxu0
      %v1372 = vpop.f32.mrb[0].mxu0
      %v1373 = vadd.f32 %v313, %v1372
      %v1374 = vpop.f32.mrb[0].mxu0
      %1375 = vmatprep.mubr.bf16.mxu0 0
      %1376 = vmatmul.mubr.bf16.gmra.mrb[0].mxu0 %v838
      %v1377 = vpop.f32.mrb[0].mxu0
      %v1378 = vadd.f32 %v313, %v1377
      %v1379 = vpop.f32.mrb[0].mxu0
      %v1380 = vpop.f32.mrb[0].mxu0
      %v1381 = vadd.f32 %v313, %v1380
      %v1382 = vpop.f32.mrb[0].mxu0
      %1383 = vmatprep.mubr.bf16.mxu0 0
      %1384 = vmatmul.mubr.bf16.gmra.mrb[0].mxu0 %v841
      %v1385 = vpop.f32.mrb[0].mxu0
      %v1386 = vadd.f32 %v313, %v1385
      %v1387 = vpop.f32.mrb[0].mxu0
      %v1388 = vpop.f32.mrb[0].mxu0
      %v1389 = vadd.f32 %v313, %v1388
      %v1390 = vpop.f32.mrb[0].mxu0
      %1391 = vdwg.mxu0
      %v1392 = vpack.c.bf16 %v885, %v882
      %v1393 = vpack.c.bf16 %v893, %v890
      %v1394 = vpack.c.bf16 %v901, %v898
      %v1395 = vpack.c.bf16 %v909, %v906
      %v1396 = vpack.c.bf16 %v917, %v914
      %v1397 = vpack.c.bf16 %v925, %v922
      %v1398 = vpack.c.bf16 %v933, %v930
      %v1399 = vpack.c.bf16 %v941, %v938
      %v1400 = vpack.c.bf16 %v949, %v946
      %v1401 = vpack.c.bf16 %v957, %v954
      %v1402 = vpack.c.bf16 %v965, %v962
      %v1403 = vpack.c.bf16 %v973, %v970
      %v1404 = vpack.c.bf16 %v981, %v978
      %v1405 = vpack.c.bf16 %v989, %v986
      %v1406 = vpack.c.bf16 %v997, %v994
      %v1407 = vpack.c.bf16 %v1005, %v1002
      %v1408 = vpack.c.bf16 %v1013, %v1010
      %v1409 = vpack.c.bf16 %v1021, %v1018
      %v1410 = vpack.c.bf16 %v1029, %v1026
      %v1411 = vpack.c.bf16 %v1037, %v1034
      %v1412 = vpack.c.bf16 %v1045, %v1042
      %v1413 = vpack.c.bf16 %v1053, %v1050
      %v1414 = vpack.c.bf16 %v1061, %v1058
      %v1415 = vpack.c.bf16 %v1069, %v1066
      %v1416 = vpack.c.bf16 %v1077, %v1074
      %v1417 = vpack.c.bf16 %v1085, %v1082
      %v1418 = vpack.c.bf16 %v1093, %v1090
      %v1419 = vpack.c.bf16 %v1101, %v1098
      %v1420 = vpack.c.bf16 %v1109, %v1106
      %v1421 = vpack.c.bf16 %v1117, %v1114
      %v1422 = vpack.c.bf16 %v1125, %v1122
      %v1423 = vpack.c.bf16 %v1133, %v1130
      %v1424 = vpack.c.bf16 %v1141, %v1138
      %v1425 = vpack.c.bf16 %v1149, %v1146
      %v1426 = vpack.c.bf16 %v1157, %v1154
      %v1427 = vpack.c.bf16 %v1165, %v1162
      %v1428 = vpack.c.bf16 %v1173, %v1170
      %v1429 = vpack.c.bf16 %v1181, %v1178
      %v1430 = vpack.c.bf16 %v1189, %v1186
      %v1431 = vpack.c.bf16 %v1197, %v1194
      %v1432 = vpack.c.bf16 %v1205, %v1202
      %v1433 = vpack.c.bf16 %v1213, %v1210
      %v1434 = vpack.c.bf16 %v1221, %v1218
      %v1435 = vpack.c.bf16 %v1229, %v1226
      %v1436 = vpack.c.bf16 %v1237, %v1234
      %v1437 = vpack.c.bf16 %v1245, %v1242
      %v1438 = vpack.c.bf16 %v1253, %v1250
      %v1439 = vpack.c.bf16 %v1261, %v1258
      %v1440 = vpack.c.bf16 %v1269, %v1266
      %v1441 = vpack.c.bf16 %v1277, %v1274
      %v1442 = vpack.c.bf16 %v1285, %v1282
      %v1443 = vpack.c.bf16 %v1293, %v1290
      %v1444 = vpack.c.bf16 %v1301, %v1298
      %v1445 = vpack.c.bf16 %v1309, %v1306
      %v1446 = vpack.c.bf16 %v1317, %v1314
      %v1447 = vpack.c.bf16 %v1325, %v1322
      %v1448 = vpack.c.bf16 %v1333, %v1330
      %v1449 = vpack.c.bf16 %v1341, %v1338
      %v1450 = vpack.c.bf16 %v1349, %v1346
      %v1451 = vpack.c.bf16 %v1357, %v1354
      %v1452 = vpack.c.bf16 %v1365, %v1362
      %v1453 = vpack.c.bf16 %v1373, %v1370
      %v1454 = vpack.c.bf16 %v1381, %v1378
      %v1455 = vpack.c.bf16 %v1389, %v1386
      %v1520 = vunpack.c.l.b16 %v1392
      %v1521 = vunpack.c.h.b16 %v1392
      %v1522 = vunpack.c.l.b16 %v1393
      %v1523 = vunpack.c.h.b16 %v1393
      %v1524 = vunpack.c.l.b16 %v1394
      %v1525 = vunpack.c.h.b16 %v1394
      %v1526 = vunpack.c.l.b16 %v1395
      %v1527 = vunpack.c.h.b16 %v1395
      %v1528 = vunpack.c.l.b16 %v1396
      %v1529 = vunpack.c.h.b16 %v1396
      %v1530 = vunpack.c.l.b16 %v1397
      %v1531 = vunpack.c.h.b16 %v1397
      %v1532 = vunpack.c.l.b16 %v1398
      %v1533 = vunpack.c.h.b16 %v1398
      %v1534 = vunpack.c.l.b16 %v1399
      %v1535 = vunpack.c.h.b16 %v1399
      %v1536 = vunpack.c.l.b16 %v1400
      %v1537 = vunpack.c.h.b16 %v1400
      %v1538 = vunpack.c.l.b16 %v1401
      %v1539 = vunpack.c.h.b16 %v1401
      %v1540 = vunpack.c.l.b16 %v1402
      %v1541 = vunpack.c.h.b16 %v1402
      %v1542 = vunpack.c.l.b16 %v1403
      %v1543 = vunpack.c.h.b16 %v1403
      %v1544 = vunpack.c.l.b16 %v1404
      %v1545 = vunpack.c.h.b16 %v1404
      %v1546 = vunpack.c.l.b16 %v1405
      %v1547 = vunpack.c.h.b16 %v1405
      %v1548 = vunpack.c.l.b16 %v1406
      %v1549 = vunpack.c.h.b16 %v1406
      %v1550 = vunpack.c.l.b16 %v1407
      %v1551 = vunpack.c.h.b16 %v1407
      %v1552 = vunpack.c.l.b16 %v1408
      %v1553 = vunpack.c.h.b16 %v1408
      %v1554 = vunpack.c.l.b16 %v1409
      %v1555 = vunpack.c.h.b16 %v1409
      %v1556 = vunpack.c.l.b16 %v1410
      %v1557 = vunpack.c.h.b16 %v1410
      %v1558 = vunpack.c.l.b16 %v1411
      %v1559 = vunpack.c.h.b16 %v1411
      %v1560 = vunpack.c.l.b16 %v1412
      %v1561 = vunpack.c.h.b16 %v1412
      %v1562 = vunpack.c.l.b16 %v1413
      %v1563 = vunpack.c.h.b16 %v1413
      %v1564 = vunpack.c.l.b16 %v1414
      %v1565 = vunpack.c.h.b16 %v1414
      %v1566 = vunpack.c.l.b16 %v1415
      %v1567 = vunpack.c.h.b16 %v1415
      %v1568 = vunpack.c.l.b16 %v1416
      %v1569 = vunpack.c.h.b16 %v1416
      %v1570 = vunpack.c.l.b16 %v1417
      %v1571 = vunpack.c.h.b16 %v1417
      %v1572 = vunpack.c.l.b16 %v1418
      %v1573 = vunpack.c.h.b16 %v1418
      %v1574 = vunpack.c.l.b16 %v1419
      %v1575 = vunpack.c.h.b16 %v1419
      %v1576 = vunpack.c.l.b16 %v1420
      %v1577 = vunpack.c.h.b16 %v1420
      %v1578 = vunpack.c.l.b16 %v1421
      %v1579 = vunpack.c.h.b16 %v1421
      %v1580 = vunpack.c.l.b16 %v1422
      %v1581 = vunpack.c.h.b16 %v1422
      %v1582 = vunpack.c.l.b16 %v1423
      %v1583 = vunpack.c.h.b16 %v1423
      %v1584 = vunpack.c.l.b16 %v1424
      %v1585 = vunpack.c.h.b16 %v1424
      %v1586 = vunpack.c.l.b16 %v1425
      %v1587 = vunpack.c.h.b16 %v1425
      %v1588 = vunpack.c.l.b16 %v1426
      %v1589 = vunpack.c.h.b16 %v1426
      %v1590 = vunpack.c.l.b16 %v1427
      %v1591 = vunpack.c.h.b16 %v1427
      %v1592 = vunpack.c.l.b16 %v1428
      %v1593 = vunpack.c.h.b16 %v1428
      %v1594 = vunpack.c.l.b16 %v1429
      %v1595 = vunpack.c.h.b16 %v1429
      %v1596 = vunpack.c.l.b16 %v1430
      %v1597 = vunpack.c.h.b16 %v1430
      %v1598 = vunpack.c.l.b16 %v1431
      %v1599 = vunpack.c.h.b16 %v1431
      %v1600 = vunpack.c.l.b16 %v1432
      %v1601 = vunpack.c.h.b16 %v1432
      %v1602 = vunpack.c.l.b16 %v1433
      %v1603 = vunpack.c.h.b16 %v1433
      %v1604 = vunpack.c.l.b16 %v1434
      %v1605 = vunpack.c.h.b16 %v1434
      %v1606 = vunpack.c.l.b16 %v1435
      %v1607 = vunpack.c.h.b16 %v1435
      %v1608 = vunpack.c.l.b16 %v1436
      %v1609 = vunpack.c.h.b16 %v1436
      %v1610 = vunpack.c.l.b16 %v1437
      %v1611 = vunpack.c.h.b16 %v1437
      %v1612 = vunpack.c.l.b16 %v1438
      %v1613 = vunpack.c.h.b16 %v1438
      %v1614 = vunpack.c.l.b16 %v1439
      %v1615 = vunpack.c.h.b16 %v1439
      %v1616 = vunpack.c.l.b16 %v1440
      %v1617 = vunpack.c.h.b16 %v1440
      %v1618 = vunpack.c.l.b16 %v1441
      %v1619 = vunpack.c.h.b16 %v1441
      %v1620 = vunpack.c.l.b16 %v1442
      %v1621 = vunpack.c.h.b16 %v1442
      %v1622 = vunpack.c.l.b16 %v1443
      %v1623 = vunpack.c.h.b16 %v1443
      %v1624 = vunpack.c.l.b16 %v1444
      %v1625 = vunpack.c.h.b16 %v1444
      %v1626 = vunpack.c.l.b16 %v1445
      %v1627 = vunpack.c.h.b16 %v1445
      %v1628 = vunpack.c.l.b16 %v1446
      %v1629 = vunpack.c.h.b16 %v1446
      %v1630 = vunpack.c.l.b16 %v1447
      %v1631 = vunpack.c.h.b16 %v1447
      %v1632 = vunpack.c.l.b16 %v1448
      %v1633 = vunpack.c.h.b16 %v1448
      %v1634 = vunpack.c.l.b16 %v1449
      %v1635 = vunpack.c.h.b16 %v1449
      %v1636 = vunpack.c.l.b16 %v1450
      %v1637 = vunpack.c.h.b16 %v1450
      %v1638 = vunpack.c.l.b16 %v1451
      %v1639 = vunpack.c.h.b16 %v1451
      %v1640 = vunpack.c.l.b16 %v1452
      %v1641 = vunpack.c.h.b16 %v1452
      %v1642 = vunpack.c.l.b16 %v1453
      %v1643 = vunpack.c.h.b16 %v1453
      %v1644 = vunpack.c.l.b16 %v1454
      %v1645 = vunpack.c.h.b16 %v1454
      %v1646 = vunpack.c.l.b16 %v1455
      %v1647 = vunpack.c.h.b16 %v1455
      %v1648 = vpack.c.b16 %v1520, %v1520
      %v1649 = vpack.c.b16 %v1521, %v1521
      %v1650 = vpack.c.b16 %v1522, %v1522
      %v1651 = vpack.c.b16 %v1523, %v1523
      %v1652 = vpack.c.b16 %v1524, %v1524
      %v1653 = vpack.c.b16 %v1525, %v1525
      %v1654 = vpack.c.b16 %v1526, %v1526
      %v1655 = vpack.c.b16 %v1527, %v1527
      %v1656 = vpack.c.b16 %v1528, %v1528
      %v1657 = vpack.c.b16 %v1529, %v1529
      %v1658 = vpack.c.b16 %v1530, %v1530
      %v1659 = vpack.c.b16 %v1531, %v1531
      %v1660 = vpack.c.b16 %v1532, %v1532
      %v1661 = vpack.c.b16 %v1533, %v1533
      %v1662 = vpack.c.b16 %v1534, %v1534
      %v1663 = vpack.c.b16 %v1535, %v1535
      %v1664 = vpack.c.b16 %v1536, %v1536
      %v1665 = vpack.c.b16 %v1537, %v1537
      %v1666 = vpack.c.b16 %v1538, %v1538
      %v1667 = vpack.c.b16 %v1539, %v1539
      %v1668 = vpack.c.b16 %v1540, %v1540
      %v1669 = vpack.c.b16 %v1541, %v1541
      %v1670 = vpack.c.b16 %v1542, %v1542
      %v1671 = vpack.c.b16 %v1543, %v1543
      %v1672 = vpack.c.b16 %v1544, %v1544
      %v1673 = vpack.c.b16 %v1545, %v1545
      %v1674 = vpack.c.b16 %v1546, %v1546
      %v1675 = vpack.c.b16 %v1547, %v1547
      %v1676 = vpack.c.b16 %v1548, %v1548
      %v1677 = vpack.c.b16 %v1549, %v1549
      %v1678 = vpack.c.b16 %v1550, %v1550
      %v1679 = vpack.c.b16 %v1551, %v1551
      %v1680 = vpack.c.b16 %v1552, %v1552
      %v1681 = vpack.c.b16 %v1553, %v1553
      %v1682 = vpack.c.b16 %v1554, %v1554
      %v1683 = vpack.c.b16 %v1555, %v1555
      %v1684 = vpack.c.b16 %v1556, %v1556
      %v1685 = vpack.c.b16 %v1557, %v1557
      %v1686 = vpack.c.b16 %v1558, %v1558
      %v1687 = vpack.c.b16 %v1559, %v1559
      %v1688 = vpack.c.b16 %v1560, %v1560
      %v1689 = vpack.c.b16 %v1561, %v1561
      %v1690 = vpack.c.b16 %v1562, %v1562
      %v1691 = vpack.c.b16 %v1563, %v1563
      %v1692 = vpack.c.b16 %v1564, %v1564
      %v1693 = vpack.c.b16 %v1565, %v1565
      %v1694 = vpack.c.b16 %v1566, %v1566
      %v1695 = vpack.c.b16 %v1567, %v1567
      %v1696 = vpack.c.b16 %v1568, %v1568
      %v1697 = vpack.c.b16 %v1569, %v1569
      %v1698 = vpack.c.b16 %v1570, %v1570
      %v1699 = vpack.c.b16 %v1571, %v1571
      %v1700 = vpack.c.b16 %v1572, %v1572
      %v1701 = vpack.c.b16 %v1573, %v1573
      %v1702 = vpack.c.b16 %v1574, %v1574
      %v1703 = vpack.c.b16 %v1575, %v1575
      %v1704 = vpack.c.b16 %v1576, %v1576
      %v1705 = vpack.c.b16 %v1577, %v1577
      %v1706 = vpack.c.b16 %v1578, %v1578
      %v1707 = vpack.c.b16 %v1579, %v1579
      %v1708 = vpack.c.b16 %v1580, %v1580
      %v1709 = vpack.c.b16 %v1581, %v1581
      %v1710 = vpack.c.b16 %v1582, %v1582
      %v1711 = vpack.c.b16 %v1583, %v1583
      %v1712 = vpack.c.b16 %v1584, %v1584
      %v1713 = vpack.c.b16 %v1585, %v1585
      %v1714 = vpack.c.b16 %v1586, %v1586
      %v1715 = vpack.c.b16 %v1587, %v1587
      %v1716 = vpack.c.b16 %v1588, %v1588
      %v1717 = vpack.c.b16 %v1589, %v1589
      %v1718 = vpack.c.b16 %v1590, %v1590
      %v1719 = vpack.c.b16 %v1591, %v1591
      %v1720 = vpack.c.b16 %v1592, %v1592
      %v1721 = vpack.c.b16 %v1593, %v1593
      %v1722 = vpack.c.b16 %v1594, %v1594
      %v1723 = vpack.c.b16 %v1595, %v1595
      %v1724 = vpack.c.b16 %v1596, %v1596
      %v1725 = vpack.c.b16 %v1597, %v1597
      %v1726 = vpack.c.b16 %v1598, %v1598
      %v1727 = vpack.c.b16 %v1599, %v1599
      %v1728 = vpack.c.b16 %v1600, %v1600
      %v1729 = vpack.c.b16 %v1601, %v1601
      %v1730 = vpack.c.b16 %v1602, %v1602
      %v1731 = vpack.c.b16 %v1603, %v1603
      %v1732 = vpack.c.b16 %v1604, %v1604
      %v1733 = vpack.c.b16 %v1605, %v1605
      %v1734 = vpack.c.b16 %v1606, %v1606
      %v1735 = vpack.c.b16 %v1607, %v1607
      %v1736 = vpack.c.b16 %v1608, %v1608
      %v1737 = vpack.c.b16 %v1609, %v1609
      %v1738 = vpack.c.b16 %v1610, %v1610
      %v1739 = vpack.c.b16 %v1611, %v1611
      %v1740 = vpack.c.b16 %v1612, %v1612
      %v1741 = vpack.c.b16 %v1613, %v1613
      %v1742 = vpack.c.b16 %v1614, %v1614
      %v1743 = vpack.c.b16 %v1615, %v1615
      %v1744 = vpack.c.b16 %v1616, %v1616
      %v1745 = vpack.c.b16 %v1617, %v1617
      %v1746 = vpack.c.b16 %v1618, %v1618
      %v1747 = vpack.c.b16 %v1619, %v1619
      %v1748 = vpack.c.b16 %v1620, %v1620
      %v1749 = vpack.c.b16 %v1621, %v1621
      %v1750 = vpack.c.b16 %v1622, %v1622
      %v1751 = vpack.c.b16 %v1623, %v1623
      %v1752 = vpack.c.b16 %v1624, %v1624
      %v1753 = vpack.c.b16 %v1625, %v1625
      %v1754 = vpack.c.b16 %v1626, %v1626
      %v1755 = vpack.c.b16 %v1627, %v1627
      %v1756 = vpack.c.b16 %v1628, %v1628
      %v1757 = vpack.c.b16 %v1629, %v1629
      %v1758 = vpack.c.b16 %v1630, %v1630
      %v1759 = vpack.c.b16 %v1631, %v1631
      %v1760 = vpack.c.b16 %v1632, %v1632
      %v1761 = vpack.c.b16 %v1633, %v1633
      %v1762 = vpack.c.b16 %v1634, %v1634
      %v1763 = vpack.c.b16 %v1635, %v1635
      %v1764 = vpack.c.b16 %v1636, %v1636
      %v1765 = vpack.c.b16 %v1637, %v1637
      %v1766 = vpack.c.b16 %v1638, %v1638
      %v1767 = vpack.c.b16 %v1639, %v1639
      %v1768 = vpack.c.b16 %v1640, %v1640
      %v1769 = vpack.c.b16 %v1641, %v1641
      %v1770 = vpack.c.b16 %v1642, %v1642
      %v1771 = vpack.c.b16 %v1643, %v1643
      %v1772 = vpack.c.b16 %v1644, %v1644
      %v1773 = vpack.c.b16 %v1645, %v1645
      %v1774 = vpack.c.b16 %v1646, %v1646
      %v1775 = vpack.c.b16 %v1647, %v1647
      %1904 = vst [vmem:[%s172] sm:$0xf] %v1648
      %1905 = vst [vmem:[%s172 + $0x4] sm:$0xf] %v1649
      %1906 = vst [vmem:[%s172 + $0x8] sm:$0xf] %v1650
      %1907 = vst [vmem:[%s172 + $0xc] sm:$0xf] %v1651
      %1908 = vst [vmem:[%s172 + $0x10] sm:$0xf] %v1652
      %1909 = vst [vmem:[%s172 + $0x14] sm:$0xf] %v1653
      %1910 = vst [vmem:[%s172 + $0x18] sm:$0xf] %v1654
      %1911 = vst [vmem:[%s172 + $0x1c] sm:$0xf] %v1655
      %1912 = vst [vmem:[%s172 + $0x20] sm:$0xf] %v1656
      %1913 = vst [vmem:[%s172 + $0x24] sm:$0xf] %v1657
      %1914 = vst [vmem:[%s172 + $0x28] sm:$0xf] %v1658
      %1915 = vst [vmem:[%s172 + $0x2c] sm:$0xf] %v1659
      %1916 = vst [vmem:[%s172 + $0x30] sm:$0xf] %v1660
      %1917 = vst [vmem:[%s172 + $0x34] sm:$0xf] %v1661
      %1918 = vst [vmem:[%s172 + $0x38] sm:$0xf] %v1662
      %1919 = vst [vmem:[%s172 + $0x3c] sm:$0xf] %v1663
      %1920 = vst [vmem:[%s172 + $0x40] sm:$0xf] %v1664
      %1921 = vst [vmem:[%s172 + $0x44] sm:$0xf] %v1665
      %1922 = vst [vmem:[%s172 + $0x48] sm:$0xf] %v1666
      %1923 = vst [vmem:[%s172 + $0x4c] sm:$0xf] %v1667
      %1924 = vst [vmem:[%s172 + $0x50] sm:$0xf] %v1668
      %1925 = vst [vmem:[%s172 + $0x54] sm:$0xf] %v1669
      %1926 = vst [vmem:[%s172 + $0x58] sm:$0xf] %v1670
      %1927 = vst [vmem:[%s172 + $0x5c] sm:$0xf] %v1671
      %1928 = vst [vmem:[%s172 + $0x60] sm:$0xf] %v1672
      %1929 = vst [vmem:[%s172 + $0x64] sm:$0xf] %v1673
      %1930 = vst [vmem:[%s172 + $0x68] sm:$0xf] %v1674
      %1931 = vst [vmem:[%s172 + $0x6c] sm:$0xf] %v1675
      %1932 = vst [vmem:[%s172 + $0x70] sm:$0xf] %v1676
      %1933 = vst [vmem:[%s172 + $0x74] sm:$0xf] %v1677
      %1934 = vst [vmem:[%s172 + $0x78] sm:$0xf] %v1678
      %1935 = vst [vmem:[%s172 + $0x7c] sm:$0xf] %v1679
      %1936 = vst [vmem:[%s172 + $0x80] sm:$0xf] %v1680
      %1937 = vst [vmem:[%s172 + $0x84] sm:$0xf] %v1681
      %1938 = vst [vmem:[%s172 + $0x88] sm:$0xf] %v1682
      %1939 = vst [vmem:[%s172 + $0x8c] sm:$0xf] %v1683
      %1940 = vst [vmem:[%s172 + $0x90] sm:$0xf] %v1684
      %1941 = vst [vmem:[%s172 + $0x94] sm:$0xf] %v1685
      %1942 = vst [vmem:[%s172 + $0x98] sm:$0xf] %v1686
      %1943 = vst [vmem:[%s172 + $0x9c] sm:$0xf] %v1687
      %1944 = vst [vmem:[%s172 + $0xa0] sm:$0xf] %v1688
      %1945 = vst [vmem:[%s172 + $0xa4] sm:$0xf] %v1689
      %1946 = vst [vmem:[%s172 + $0xa8] sm:$0xf] %v1690
      %1947 = vst [vmem:[%s172 + $0xac] sm:$0xf] %v1691
      %1948 = vst [vmem:[%s172 + $0xb0] sm:$0xf] %v1692
      %1949 = vst [vmem:[%s172 + $0xb4] sm:$0xf] %v1693
      %1950 = vst [vmem:[%s172 + $0xb8] sm:$0xf] %v1694
      %1951 = vst [vmem:[%s172 + $0xbc] sm:$0xf] %v1695
      %1952 = vst [vmem:[%s172 + $0xc0] sm:$0xf] %v1696
      %1953 = vst [vmem:[%s172 + $0xc4] sm:$0xf] %v1697
      %1954 = vst [vmem:[%s172 + $0xc8] sm:$0xf] %v1698
      %1955 = vst [vmem:[%s172 + $0xcc] sm:$0xf] %v1699
      %1956 = vst [vmem:[%s172 + $0xd0] sm:$0xf] %v1700
      %1957 = vst [vmem:[%s172 + $0xd4] sm:$0xf] %v1701
      %1958 = vst [vmem:[%s172 + $0xd8] sm:$0xf] %v1702
      %1959 = vst [vmem:[%s172 + $0xdc] sm:$0xf] %v1703
      %1960 = vst [vmem:[%s172 + $0xe0] sm:$0xf] %v1704
      %1961 = vst [vmem:[%s172 + $0xe4] sm:$0xf] %v1705
      %1962 = vst [vmem:[%s172 + $0xe8] sm:$0xf] %v1706
      %1963 = vst [vmem:[%s172 + $0xec] sm:$0xf] %v1707
      %1964 = vst [vmem:[%s172 + $0xf0] sm:$0xf] %v1708
      %1965 = vst [vmem:[%s172 + $0xf4] sm:$0xf] %v1709
      %1966 = vst [vmem:[%s172 + $0xf8] sm:$0xf] %v1710
      %1967 = vst [vmem:[%s172 + $0xfc] sm:$0xf] %v1711
      %1968 = vst [vmem:[%s172 + $0x100] sm:$0xf] %v1712
      %1969 = vst [vmem:[%s172 + $0x104] sm:$0xf] %v1713
      %1970 = vst [vmem:[%s172 + $0x108] sm:$0xf] %v1714
      %1971 = vst [vmem:[%s172 + $0x10c] sm:$0xf] %v1715
      %1972 = vst [vmem:[%s172 + $0x110] sm:$0xf] %v1716
      %1973 = vst [vmem:[%s172 + $0x114] sm:$0xf] %v1717
      %1974 = vst [vmem:[%s172 + $0x118] sm:$0xf] %v1718
      %1975 = vst [vmem:[%s172 + $0x11c] sm:$0xf] %v1719
      %1976 = vst [vmem:[%s172 + $0x120] sm:$0xf] %v1720
      %1977 = vst [vmem:[%s172 + $0x124] sm:$0xf] %v1721
      %1978 = vst [vmem:[%s172 + $0x128] sm:$0xf] %v1722
      %1979 = vst [vmem:[%s172 + $0x12c] sm:$0xf] %v1723
      %1980 = vst [vmem:[%s172 + $0x130] sm:$0xf] %v1724
      %1981 = vst [vmem:[%s172 + $0x134] sm:$0xf] %v1725
      %1982 = vst [vmem:[%s172 + $0x138] sm:$0xf] %v1726
      %1983 = vst [vmem:[%s172 + $0x13c] sm:$0xf] %v1727
      %1984 = vst [vmem:[%s172 + $0x140] sm:$0xf] %v1728
      %1985 = vst [vmem:[%s172 + $0x144] sm:$0xf] %v1729
      %1986 = vst [vmem:[%s172 + $0x148] sm:$0xf] %v1730
      %1987 = vst [vmem:[%s172 + $0x14c] sm:$0xf] %v1731
      %1988 = vst [vmem:[%s172 + $0x150] sm:$0xf] %v1732
      %1989 = vst [vmem:[%s172 + $0x154] sm:$0xf] %v1733
      %1990 = vst [vmem:[%s172 + $0x158] sm:$0xf] %v1734
      %1991 = vst [vmem:[%s172 + $0x15c] sm:$0xf] %v1735
      %1992 = vst [vmem:[%s172 + $0x160] sm:$0xf] %v1736
      %1993 = vst [vmem:[%s172 + $0x164] sm:$0xf] %v1737
      %1994 = vst [vmem:[%s172 + $0x168] sm:$0xf] %v1738
      %1995 = vst [vmem:[%s172 + $0x16c] sm:$0xf] %v1739
      %1996 = vst [vmem:[%s172 + $0x170] sm:$0xf] %v1740
      %1997 = vst [vmem:[%s172 + $0x174] sm:$0xf] %v1741
      %1998 = vst [vmem:[%s172 + $0x178] sm:$0xf] %v1742
      %1999 = vst [vmem:[%s172 + $0x17c] sm:$0xf] %v1743
      %2000 = vst [vmem:[%s172 + $0x180] sm:$0xf] %v1744
      %2001 = vst [vmem:[%s172 + $0x184] sm:$0xf] %v1745
      %2002 = vst [vmem:[%s172 + $0x188] sm:$0xf] %v1746
      %2003 = vst [vmem:[%s172 + $0x18c] sm:$0xf] %v1747
      %2004 = vst [vmem:[%s172 + $0x190] sm:$0xf] %v1748
      %2005 = vst [vmem:[%s172 + $0x194] sm:$0xf] %v1749
      %2006 = vst [vmem:[%s172 + $0x198] sm:$0xf] %v1750
      %2007 = vst [vmem:[%s172 + $0x19c] sm:$0xf] %v1751
      %2008 = vst [vmem:[%s172 + $0x1a0] sm:$0xf] %v1752
      %2009 = vst [vmem:[%s172 + $0x1a4] sm:$0xf] %v1753
      %2010 = vst [vmem:[%s172 + $0x1a8] sm:$0xf] %v1754
      %2011 = vst [vmem:[%s172 + $0x1ac] sm:$0xf] %v1755
      %2012 = vst [vmem:[%s172 + $0x1b0] sm:$0xf] %v1756
      %2013 = vst [vmem:[%s172 + $0x1b4] sm:$0xf] %v1757
      %2014 = vst [vmem:[%s172 + $0x1b8] sm:$0xf] %v1758
      %2015 = vst [vmem:[%s172 + $0x1bc] sm:$0xf] %v1759
      %2016 = vst [vmem:[%s172 + $0x1c0] sm:$0xf] %v1760
      %2017 = vst [vmem:[%s172 + $0x1c4] sm:$0xf] %v1761
      %2018 = vst [vmem:[%s172 + $0x1c8] sm:$0xf] %v1762
      %2019 = vst [vmem:[%s172 + $0x1cc] sm:$0xf] %v1763
      %2020 = vst [vmem:[%s172 + $0x1d0] sm:$0xf] %v1764
      %2021 = vst [vmem:[%s172 + $0x1d4] sm:$0xf] %v1765
      %2022 = vst [vmem:[%s172 + $0x1d8] sm:$0xf] %v1766
      %2023 = vst [vmem:[%s172 + $0x1dc] sm:$0xf] %v1767
      %2024 = vst [vmem:[%s172 + $0x1e0] sm:$0xf] %v1768
      %2025 = vst [vmem:[%s172 + $0x1e4] sm:$0xf] %v1769
      %2026 = vst [vmem:[%s172 + $0x1e8] sm:$0xf] %v1770
      %2027 = vst [vmem:[%s172 + $0x1ec] sm:$0xf] %v1771
      %2028 = vst [vmem:[%s172 + $0x1f0] sm:$0xf] %v1772
      %2029 = vst [vmem:[%s172 + $0x1f4] sm:$0xf] %v1773
      %2030 = vst [vmem:[%s172 + $0x1f8] sm:$0xf] %v1774
      %2031 = vst [vmem:[%s172 + $0x1fc] sm:$0xf] %v1775
      %s2032 = smul.u32 128, %s14
      %p2033 = scmp.lt.s32.totalorder %s2032, 511
      %s2034 = scalar_select %p2033, %s2032, 511
      %s2035 = smul.addr %s2034, 4
      %s2036 = scalar_lea.vmem %s3, %s2035
      // Predicated region
      $region33: #{conv_att_lif_forward.2} parent=31 // pred_check
        %p2037 = pneg %p100
      $region34: #{conv_att_lif_forward.2} parent=31 // pred_check_branch
        %2039 = sbr.rel (%p2037) target = $region36
      $region35: #{conv_att_lif_forward.2} parent=31 // pred_region
        %s2040 = smul.u32 128, %s14
      $region36: #{conv_att_lif_forward.2} parent=31 // pred_fallthru
        _
    $region32: #{conv_att_lif_forward.2} parent=5 // pred_fallthru
      _
    %p2041 = scmp.le.s32.totalorder 2, %s9
    // Predicated region
    $region37: #{conv_att_lif_forward.2} parent=5 // pred_check
      %p2042 = pneg %p2041
    $region38: #{conv_att_lif_forward.2} parent=5 // pred_check_branch
      %2044 = sbr.rel (%p2042) target = $region40
    $region39: #{conv_att_lif_forward.2} parent=5 // pred_region
      %s2045 = ssub.s32 %s9, 2
      // Predicated region
      $region41: #{conv_att_lif_forward.2} parent=39 // pred_check
        %p2046 = pneg %p106
      $region42: #{conv_att_lif_forward.2} parent=39 // pred_check_branch
        %2048 = sbr.rel (%p2046) target = $region44
      $region43: #{conv_att_lif_forward.2} parent=39 // pred_region
        %s2049 = smul.u32 128, %s15
        %p2050 = scmp.lt.s32.totalorder %s2049, 511
        %s2051 = scalar_select %p2050, %s2049, 511
        %s2052 = smul.addr %s2051, 4
        %s2053 = scalar_lea.vmem %s3, %s2052
      $region44: #{conv_att_lif_forward.2} parent=39 // pred_fallthru
        _
    $region40: #{conv_att_lif_forward.2} parent=5 // pred_fallthru
      _
  $region6: #{conv_att_lif_forward.2} parent=0 // loop_footer
    %s13 = sadd.s32 1, %s9
  $region7: #{conv_att_lif_forward.2} parent=0 // loop_footer_branch
    %8 = sbr.rel target = $region3
  $region8: #{conv_att_lif_forward.2} parent=0 // loop_exit
    _

// kernel: conv_att_lif_forward.3
$region0: #{conv_att_lif_forward.3}
  #allocation0 [shape = 'u32[]', space=smem, size = 0x4, offset = 0x4, fixed_abs, tag = 'smem constant byte address 0x4 - core index']
  #allocation1 [shape = 'u32[144,128]{1,0:T(1,128)}', space=vmem, size = 0x12000, scoped, tag = 'internal scratch']
  %s0 = inlined_call_operand.vmem [shape: f32[2,8,1,128], index: 0, kind: input, shape index: {}]
  %s1 = inlined_call_operand.vmem [shape: bf16[2,8,256,128], index: 1, kind: input, shape index: {}]
  %s2 = inlined_call_operand.vmem [shape: bf16[2,8,256,128], index: 2, kind: output, shape index: {}]
  %s3 = sld [smem:[#allocation0]]
  $region41: #{conv_att_lif_forward.3} parent=0
    _
  %s5 = ssub.s32 1, %s3
  %s6 = scalar_select 0, %s5, %s3
  loop: start=0, step=1, limit=4
  $region2: #{conv_att_lif_forward.3} parent=0 // loop_pre_header
    _
  $region3: #{conv_att_lif_forward.3} parent=0 // loop_header
    %s8 = sphi 0, %s12
    %p9 = scmp.ge.s32.totalorder %s8, 4
    %s15 = sphi 0, %s27
    %s16 = sphi 0, %s23
    %s17 = sphi 0, %s15
    %s18 = sphi 0, %s16
    %s19 = sphi 0, %s17
    %s20 = sphi 0, %s18
    %s30 = sphi 0, %s32
    %s33 = sphi 0, %s30
    %s34 = sphi 0, %s33
    %s50 = sphi 0, %s34
    %s58 = sphi 0, %s60
    %s61 = sphi 0, %s58
    %s62 = sphi 0, %s61
    %s78 = sphi 0, %s62
    %s86 = sphi 0, %s88
    %s89 = sphi 0, %s86
    %s90 = sphi 0, %s89
    %s106 = sphi 0, %s90
  $region4: #{conv_att_lif_forward.3} parent=0 // loop_header_branch
    %11 = sbr.rel (%p9) target = $region8
  $region5: #{conv_att_lif_forward.3} parent=0 // loop_body
    %s13 = ssub.s32 %s8, 1
    %s14 = ssub.s32 %s8, 2
    %s21 = sadd.s32 1, %s16
    %p22 = scmp.ge.s32.totalorder %s21, 1
    %s23 = scalar_select %p22, 0, %s21
    %s24 = sadd.s32 1, %s15
    %s25 = scalar_select %p22, %s24, %s15
    %p26 = scmp.ge.s32.totalorder %s25, 2
    %s27 = scalar_select %p26, 0, %s25
    %s28 = ssub.s32 %s15, %s27
    %p29 = scmp.eq.s32.totalorder %s28, 0
    %s31 = sadd.s32 %s30, 1
    %s32 = scalar_select %p29, %s30, %s31
    %p35 = pneg %p29
    %p36 = scmp.eq.s32.totalorder %s8, 1
    %p37 = por %p35, %p36
    %p38 = scmp.ne.s32.totalorder %s30, %s33
    %p39 = scmp.eq.s32.totalorder %s8, 0
    %p40 = por %p38, %p39
    %p41 = scmp.ne.s32.totalorder %s30, %s33
    %p42 = scmp.eq.s32.totalorder %s13, 1
    %p43 = por %p41, %p42
    %p44 = scmp.ne.s32.totalorder %s33, %s34
    %p45 = scmp.eq.s32.totalorder %s13, 0
    %p46 = por %p44, %p45
    %p47 = scmp.ne.s32.totalorder %s33, %s34
    %p48 = scmp.eq.s32.totalorder %s14, 1
    %p49 = por %p47, %p48
    %p51 = scmp.ne.s32.totalorder %s34, %s50
    %p52 = scmp.eq.s32.totalorder %s14, 0
    %p53 = por %p51, %p52
    %s54 = ssub.s32 %s15, %s27
    %s55 = ssub.s32 %s16, %s23
    %s56 = sor.u32 %s54, %s55
    %p57 = scmp.eq.s32.totalorder %s56, 0
    %s59 = sadd.s32 %s58, 1
    %s60 = scalar_select %p57, %s58, %s59
    %p63 = pneg %p57
    %p64 = scmp.eq.s32.totalorder %s8, 1
    %p65 = por %p63, %p64
    %p66 = scmp.ne.s32.totalorder %s58, %s61
    %p67 = scmp.eq.s32.totalorder %s8, 0
    %p68 = por %p66, %p67
    %p69 = scmp.ne.s32.totalorder %s58, %s61
    %p70 = scmp.eq.s32.totalorder %s13, 1
    %p71 = por %p69, %p70
    %p72 = scmp.ne.s32.totalorder %s61, %s62
    %p73 = scmp.eq.s32.totalorder %s13, 0
    %p74 = por %p72, %p73
    %p75 = scmp.ne.s32.totalorder %s61, %s62
    %p76 = scmp.eq.s32.totalorder %s14, 1
    %p77 = por %p75, %p76
    %p79 = scmp.ne.s32.totalorder %s62, %s78
    %p80 = scmp.eq.s32.totalorder %s14, 0
    %p81 = por %p79, %p80
    %s82 = ssub.s32 %s15, %s27
    %s83 = ssub.s32 %s16, %s23
    %s84 = sor.u32 %s82, %s83
    %p85 = scmp.eq.s32.totalorder %s84, 0
    %s87 = sadd.s32 %s86, 1
    %s88 = scalar_select %p85, %s86, %s87
    %p91 = pneg %p85
    %p92 = scmp.eq.s32.totalorder %s8, 1
    %p93 = por %p91, %p92
    %p94 = scmp.ne.s32.totalorder %s86, %s89
    %p95 = scmp.eq.s32.totalorder %s8, 0
    %p96 = por %p94, %p95
    %p97 = scmp.ne.s32.totalorder %s86, %s89
    %p98 = scmp.eq.s32.totalorder %s13, 1
    %p99 = por %p97, %p98
    %p100 = scmp.ne.s32.totalorder %s89, %s90
    %p101 = scmp.eq.s32.totalorder %s13, 0
    %p102 = por %p100, %p101
    %p103 = scmp.ne.s32.totalorder %s89, %s90
    %p104 = scmp.eq.s32.totalorder %s14, 1
    %p105 = por %p103, %p104
    %p107 = scmp.ne.s32.totalorder %s90, %s106
    %p108 = scmp.eq.s32.totalorder %s14, 0
    %p109 = por %p107, %p108
    %p110 = scmp.le.s32.totalorder 1, %s8
    %p111 = scmp.lt.s32.totalorder %s8, 3
    %p112 = pnand %p110, %p111
    %p113 = pneg %p112
    // Predicated region
    $region9: #{conv_att_lif_forward.3} parent=5 // pred_check
      _
    $region10: #{conv_att_lif_forward.3} parent=5 // pred_check_branch
      %115 = sbr.rel (%p112) target = $region12
    $region11: #{conv_att_lif_forward.3} parent=5 // pred_region
      %s116 = ssub.s32 %s8, 1
    $region12: #{conv_att_lif_forward.3} parent=5 // pred_fallthru
      _
    %p117 = scmp.lt.s32.totalorder %s8, 2
    // Predicated region
    $region13: #{conv_att_lif_forward.3} parent=5 // pred_check
      %p118 = pneg %p117
    $region14: #{conv_att_lif_forward.3} parent=5 // pred_check_branch
      %120 = sbr.rel (%p118) target = $region16
    $region15: #{conv_att_lif_forward.3} parent=5 // pred_region
      // Predicated region
      $region17: #{conv_att_lif_forward.3} parent=15 // pred_check
        %p121 = pneg %p40
      $region18: #{conv_att_lif_forward.3} parent=15 // pred_check_branch
        %123 = sbr.rel (%p121) target = $region20
      $region19: #{conv_att_lif_forward.3} parent=15 // pred_region
        %p124 = scmp.lt.s32.totalorder %s15, 1
        %s125 = scalar_select %p124, %s15, 1
        %s126 = smul.addr %s125, 8
        %s127 = scalar_lea.vmem %s0, %s126
      $region20: #{conv_att_lif_forward.3} parent=15 // pred_fallthru
        _
      // Predicated region
      $region21: #{conv_att_lif_forward.3} parent=15 // pred_check
        %p128 = pneg %p68
      $region22: #{conv_att_lif_forward.3} parent=15 // pred_check_branch
        %130 = sbr.rel (%p128) target = $region24
      $region23: #{conv_att_lif_forward.3} parent=15 // pred_region
        %s131 = smul.u32 32, %s16
        %p132 = scmp.lt.s32.totalorder %s15, 1
        %s133 = scalar_select %p132, %s15, 1
        %p134 = scmp.lt.s32.totalorder %s131, 31
        %s135 = scalar_select %p134, %s131, 31
        %s136 = smul.addr %s133, 256
        %s137 = sadd.s32 %s135, %s136
        %s138 = smul.addr %s137, 4
        %s139 = scalar_lea.vmem %s1, %s138
        %s140 = smul.u32 32, %s16
      $region24: #{conv_att_lif_forward.3} parent=15 // pred_fallthru
        _
    $region16: #{conv_att_lif_forward.3} parent=5 // pred_fallthru
      _
    %p141 = scmp.le.s32.totalorder 1, %s8
    %p142 = scmp.lt.s32.totalorder %s8, 3
    %p143 = pnand %p141, %p142
    %p144 = pneg %p143
    // Predicated region
    $region25: #{conv_att_lif_forward.3} parent=5 // pred_check
      _
    $region26: #{conv_att_lif_forward.3} parent=5 // pred_check_branch
      %146 = sbr.rel (%p143) target = $region28
    $region27: #{conv_att_lif_forward.3} parent=5 // pred_region
      %s147 = ssub.s32 %s8, 1
      %p148 = scmp.lt.s32.totalorder %s17, 1
      %s149 = scalar_select %p148, %s17, 1
      %s150 = smul.addr %s149, 8
      %s151 = scalar_lea.vmem %s0, %s150
      %p152 = pneg %p46
      %p153 = pneg %p43
      %s154 = smul.u32 32, %s18
      %p155 = scmp.lt.s32.totalorder %s17, 1
      %s156 = scalar_select %p155, %s17, 1
      %p157 = scmp.lt.s32.totalorder %s154, 31
      %s158 = scalar_select %p157, %s154, 31
      %s159 = smul.addr %s156, 256
      %s160 = sadd.s32 %s158, %s159
      %s161 = smul.addr %s160, 4
      %s162 = scalar_lea.vmem %s1, %s161
      %p163 = pneg %p74
      %p164 = pneg %p71
      %p165 = pneg %p102
      %p166 = pneg %p99
      %s167 = smul.u32 32, %s18
      %p168 = scmp.lt.s32.totalorder %s17, 1
      %s169 = scalar_select %p168, %s17, 1
      %p170 = scmp.lt.s32.totalorder %s167, 31
      %s171 = scalar_select %p170, %s167, 31
      %s172 = smul.addr %s169, 256
      %s173 = sadd.s32 %s171, %s172
      %s174 = smul.addr %s173, 4
      %s175 = scalar_lea.vmem %s2, %s174
      %p176 = scmp.lt.s32.totalorder %s17, 1
      %s177 = scalar_select %p176, %s17, 1
      %s178 = smul.addr %s177, 8
      %s179 = scalar_lea.vmem %s0, %s178
      %s180 = smul.u32 32, %s18
      %p181 = scmp.lt.s32.totalorder %s17, 1
      %s182 = scalar_select %p181, %s17, 1
      %p183 = scmp.lt.s32.totalorder %s180, 31
      %s184 = scalar_select %p183, %s180, 31
      %s185 = smul.addr %s182, 256
      %s186 = sadd.s32 %s184, %s185
      %s187 = smul.addr %s186, 4
      %s188 = scalar_lea.vmem %s1, %s187
      %s189 = smul.u32 32, %s18
      %s190 = smul.u32 32, %s18
      %p191 = scmp.lt.s32.totalorder %s17, 1
      %s192 = scalar_select %p191, %s17, 1
      %p193 = scmp.lt.s32.totalorder %s190, 31
      %s194 = scalar_select %p193, %s190, 31
      %s195 = smul.addr %s192, 256
      %s196 = sadd.s32 %s194, %s195
      %s197 = smul.addr %s196, 4
      %s198 = scalar_lea.vmem %s2, %s197
      %s199 = smul.u32 32, %s18
      %v200 = vld [vmem:[%s188] sm:$0xf]
      %v201 = vld [vmem:[%s188 + $0x4] sm:$0xf]
      %v202 = vld [vmem:[%s188 + $0x8] sm:$0xf]
      %v203 = vld [vmem:[%s188 + $0xc] sm:$0xf]
      %v204 = vld [vmem:[%s188 + $0x10] sm:$0xf]
      %v205 = vld [vmem:[%s188 + $0x14] sm:$0xf]
      %v206 = vld [vmem:[%s188 + $0x18] sm:$0xf]
      %v207 = vld [vmem:[%s188 + $0x1c] sm:$0xf]
      %v208 = vld [vmem:[%s188 + $0x20] sm:$0xf]
      %v209 = vld [vmem:[%s188 + $0x24] sm:$0xf]
      %v210 = vld [vmem:[%s188 + $0x28] sm:$0xf]
      %v211 = vld [vmem:[%s188 + $0x2c] sm:$0xf]
      %v212 = vld [vmem:[%s188 + $0x30] sm:$0xf]
      %v213 = vld [vmem:[%s188 + $0x34] sm:$0xf]
      %v214 = vld [vmem:[%s188 + $0x38] sm:$0xf]
      %v215 = vld [vmem:[%s188 + $0x3c] sm:$0xf]
      %v216 = vld [vmem:[%s188 + $0x40] sm:$0xf]
      %v217 = vld [vmem:[%s188 + $0x44] sm:$0xf]
      %v218 = vld [vmem:[%s188 + $0x48] sm:$0xf]
      %v219 = vld [vmem:[%s188 + $0x4c] sm:$0xf]
      %v220 = vld [vmem:[%s188 + $0x50] sm:$0xf]
      %v221 = vld [vmem:[%s188 + $0x54] sm:$0xf]
      %v222 = vld [vmem:[%s188 + $0x58] sm:$0xf]
      %v223 = vld [vmem:[%s188 + $0x5c] sm:$0xf]
      %v224 = vld [vmem:[%s188 + $0x60] sm:$0xf]
      %v225 = vld [vmem:[%s188 + $0x64] sm:$0xf]
      %v226 = vld [vmem:[%s188 + $0x68] sm:$0xf]
      %v227 = vld [vmem:[%s188 + $0x6c] sm:$0xf]
      %v228 = vld [vmem:[%s188 + $0x70] sm:$0xf]
      %v229 = vld [vmem:[%s188 + $0x74] sm:$0xf]
      %v230 = vld [vmem:[%s188 + $0x78] sm:$0xf]
      %v231 = vld [vmem:[%s188 + $0x7c] sm:$0xf]
      %v232 = vunpack.c.l.bf16 %v200
      %v233 = vunpack.c.l.bf16 %v201
      %v234 = vunpack.c.l.bf16 %v202
      %v235 = vunpack.c.l.bf16 %v203
      %v236 = vunpack.c.l.bf16 %v204
      %v237 = vunpack.c.l.bf16 %v205
      %v238 = vunpack.c.l.bf16 %v206
      %v239 = vunpack.c.l.bf16 %v207
      %v240 = vunpack.c.l.bf16 %v208
      %v241 = vunpack.c.l.bf16 %v209
      %v242 = vunpack.c.l.bf16 %v210
      %v243 = vunpack.c.l.bf16 %v211
      %v244 = vunpack.c.l.bf16 %v212
      %v245 = vunpack.c.l.bf16 %v213
      %v246 = vunpack.c.l.bf16 %v214
      %v247 = vunpack.c.l.bf16 %v215
      %v248 = vunpack.c.l.bf16 %v216
      %v249 = vunpack.c.l.bf16 %v217
      %v250 = vunpack.c.l.bf16 %v218
      %v251 = vunpack.c.l.bf16 %v219
      %v252 = vunpack.c.l.bf16 %v220
      %v253 = vunpack.c.l.bf16 %v221
      %v254 = vunpack.c.l.bf16 %v222
      %v255 = vunpack.c.l.bf16 %v223
      %v256 = vunpack.c.l.bf16 %v224
      %v257 = vunpack.c.l.bf16 %v225
      %v258 = vunpack.c.l.bf16 %v226
      %v259 = vunpack.c.l.bf16 %v227
      %v260 = vunpack.c.l.bf16 %v228
      %v261 = vunpack.c.l.bf16 %v229
      %v262 = vunpack.c.l.bf16 %v230
      %v263 = vunpack.c.l.bf16 %v231
      %v264 = vld [vmem:[%s179] sm:$0x1]
      %v266 = vlaneseq
      %v267 = vshrl.u32 %v266, 7
      %v268 = vsub.s32 0, %v267
      %v269 = vrot.slane %v264, %v268
      %v271 = vmul.f32 %v232, %v269
      %v272 = vmul.f32 %v233, %v269
      %v273 = vmul.f32 %v234, %v269
      %v274 = vmul.f32 %v235, %v269
      %v275 = vmul.f32 %v236, %v269
      %v276 = vmul.f32 %v237, %v269
      %v277 = vmul.f32 %v238, %v269
      %v278 = vmul.f32 %v239, %v269
      %v279 = vmul.f32 %v240, %v269
      %v280 = vmul.f32 %v241, %v269
      %v281 = vmul.f32 %v242, %v269
      %v282 = vmul.f32 %v243, %v269
      %v283 = vmul.f32 %v244, %v269
      %v284 = vmul.f32 %v245, %v269
      %v285 = vmul.f32 %v246, %v269
      %v286 = vmul.f32 %v247, %v269
      %v287 = vmul.f32 %v248, %v269
      %v288 = vmul.f32 %v249, %v269
      %v289 = vmul.f32 %v250, %v269
      %v290 = vmul.f32 %v251, %v269
      %v291 = vmul.f32 %v252, %v269
      %v292 = vmul.f32 %v253, %v269
      %v293 = vmul.f32 %v254, %v269
      %v294 = vmul.f32 %v255, %v269
      %v295 = vmul.f32 %v256, %v269
      %v296 = vmul.f32 %v257, %v269
      %v297 = vmul.f32 %v258, %v269
      %v298 = vmul.f32 %v259, %v269
      %v299 = vmul.f32 %v260, %v269
      %v300 = vmul.f32 %v261, %v269
      %v301 = vmul.f32 %v262, %v269
      %v302 = vmul.f32 %v263, %v269
      %v303 = vadd.f32 %v271, 0.0
      %v304 = vadd.f32 %v272, 0.0
      %v305 = vadd.f32 %v273, 0.0
      %v306 = vadd.f32 %v274, 0.0
      %v307 = vadd.f32 %v275, 0.0
      %v308 = vadd.f32 %v276, 0.0
      %v309 = vadd.f32 %v277, 0.0
      %v310 = vadd.f32 %v278, 0.0
      %v311 = vadd.f32 %v279, 0.0
      %v312 = vadd.f32 %v280, 0.0
      %v313 = vadd.f32 %v281, 0.0
      %v314 = vadd.f32 %v282, 0.0
      %v315 = vadd.f32 %v283, 0.0
      %v316 = vadd.f32 %v284, 0.0
      %v317 = vadd.f32 %v285, 0.0
      %v318 = vadd.f32 %v286, 0.0
      %v319 = vadd.f32 %v287, 0.0
      %v320 = vadd.f32 %v288, 0.0
      %v321 = vadd.f32 %v289, 0.0
      %v322 = vadd.f32 %v290, 0.0
      %v323 = vadd.f32 %v291, 0.0
      %v324 = vadd.f32 %v292, 0.0
      %v325 = vadd.f32 %v293, 0.0
      %v326 = vadd.f32 %v294, 0.0
      %v327 = vadd.f32 %v295, 0.0
      %v328 = vadd.f32 %v296, 0.0
      %v329 = vadd.f32 %v297, 0.0
      %v330 = vadd.f32 %v298, 0.0
      %v331 = vadd.f32 %v299, 0.0
      %v332 = vadd.f32 %v300, 0.0
      %v333 = vadd.f32 %v301, 0.0
      %v334 = vadd.f32 %v302, 0.0
      %vm335 = vcmp.ge.f32.partialorder %v303, 0.3
      %vm336 = vcmp.ge.f32.partialorder %v304, 0.3
      %vm337 = vcmp.ge.f32.partialorder %v305, 0.3
      %vm338 = vcmp.ge.f32.partialorder %v306, 0.3
      %vm339 = vcmp.ge.f32.partialorder %v307, 0.3
      %vm340 = vcmp.ge.f32.partialorder %v308, 0.3
      %vm341 = vcmp.ge.f32.partialorder %v309, 0.3
      %vm342 = vcmp.ge.f32.partialorder %v310, 0.3
      %vm343 = vcmp.ge.f32.partialorder %v311, 0.3
      %vm344 = vcmp.ge.f32.partialorder %v312, 0.3
      %vm345 = vcmp.ge.f32.partialorder %v313, 0.3
      %vm346 = vcmp.ge.f32.partialorder %v314, 0.3
      %vm347 = vcmp.ge.f32.partialorder %v315, 0.3
      %vm348 = vcmp.ge.f32.partialorder %v316, 0.3
      %vm349 = vcmp.ge.f32.partialorder %v317, 0.3
      %vm350 = vcmp.ge.f32.partialorder %v318, 0.3
      %vm351 = vcmp.ge.f32.partialorder %v319, 0.3
      %vm352 = vcmp.ge.f32.partialorder %v320, 0.3
      %vm353 = vcmp.ge.f32.partialorder %v321, 0.3
      %vm354 = vcmp.ge.f32.partialorder %v322, 0.3
      %vm355 = vcmp.ge.f32.partialorder %v323, 0.3
      %vm356 = vcmp.ge.f32.partialorder %v324, 0.3
      %vm357 = vcmp.ge.f32.partialorder %v325, 0.3
      %vm358 = vcmp.ge.f32.partialorder %v326, 0.3
      %vm359 = vcmp.ge.f32.partialorder %v327, 0.3
      %vm360 = vcmp.ge.f32.partialorder %v328, 0.3
      %vm361 = vcmp.ge.f32.partialorder %v329, 0.3
      %vm362 = vcmp.ge.f32.partialorder %v330, 0.3
      %vm363 = vcmp.ge.f32.partialorder %v331, 0.3
      %vm364 = vcmp.ge.f32.partialorder %v332, 0.3
      %vm365 = vcmp.ge.f32.partialorder %v333, 0.3
      %vm366 = vcmp.ge.f32.partialorder %v334, 0.3
      %v367 = vsel %vm335, 1, 0
      %v368 = vsel %vm336, 1, 0
      %v369 = vsel %vm337, 1, 0
      %v370 = vsel %vm338, 1, 0
      %v371 = vsel %vm339, 1, 0
      %v372 = vsel %vm340, 1, 0
      %v373 = vsel %vm341, 1, 0
      %v374 = vsel %vm342, 1, 0
      %v375 = vsel %vm343, 1, 0
      %v376 = vsel %vm344, 1, 0
      %v377 = vsel %vm345, 1, 0
      %v378 = vsel %vm346, 1, 0
      %v379 = vsel %vm347, 1, 0
      %v380 = vsel %vm348, 1, 0
      %v381 = vsel %vm349, 1, 0
      %v382 = vsel %vm350, 1, 0
      %v383 = vsel %vm351, 1, 0
      %v384 = vsel %vm352, 1, 0
      %v385 = vsel %vm353, 1, 0
      %v386 = vsel %vm354, 1, 0
      %v387 = vsel %vm355, 1, 0
      %v388 = vsel %vm356, 1, 0
      %v389 = vsel %vm357, 1, 0
      %v390 = vsel %vm358, 1, 0
      %v391 = vsel %vm359, 1, 0
      %v392 = vsel %vm360, 1, 0
      %v393 = vsel %vm361, 1, 0
      %v394 = vsel %vm362, 1, 0
      %v395 = vsel %vm363, 1, 0
      %v396 = vsel %vm364, 1, 0
      %v397 = vsel %vm365, 1, 0
      %v398 = vsel %vm366, 1, 0
      %v399 = vcvt.s32.f32 %v367
      %v400 = vcvt.s32.f32 %v368
      %v401 = vcvt.s32.f32 %v369
      %v402 = vcvt.s32.f32 %v370
      %v403 = vcvt.s32.f32 %v371
      %v404 = vcvt.s32.f32 %v372
      %v405 = vcvt.s32.f32 %v373
      %v406 = vcvt.s32.f32 %v374
      %v407 = vcvt.s32.f32 %v375
      %v408 = vcvt.s32.f32 %v376
      %v409 = vcvt.s32.f32 %v377
      %v410 = vcvt.s32.f32 %v378
      %v411 = vcvt.s32.f32 %v379
      %v412 = vcvt.s32.f32 %v380
      %v413 = vcvt.s32.f32 %v381
      %v414 = vcvt.s32.f32 %v382
      %v415 = vcvt.s32.f32 %v383
      %v416 = vcvt.s32.f32 %v384
      %v417 = vcvt.s32.f32 %v385
      %v418 = vcvt.s32.f32 %v386
      %v419 = vcvt.s32.f32 %v387
      %v420 = vcvt.s32.f32 %v388
      %v421 = vcvt.s32.f32 %v389
      %v422 = vcvt.s32.f32 %v390
      %v423 = vcvt.s32.f32 %v391
      %v424 = vcvt.s32.f32 %v392
      %v425 = vcvt.s32.f32 %v393
      %v426 = vcvt.s32.f32 %v394
      %v427 = vcvt.s32.f32 %v395
      %v428 = vcvt.s32.f32 %v396
      %v429 = vcvt.s32.f32 %v397
      %v430 = vcvt.s32.f32 %v398
      %vm431 = vcmp.gt.f32.partialorder %v399, 0.0
      %vm432 = vcmp.gt.f32.partialorder %v400, 0.0
      %vm433 = vcmp.gt.f32.partialorder %v401, 0.0
      %vm434 = vcmp.gt.f32.partialorder %v402, 0.0
      %vm435 = vcmp.gt.f32.partialorder %v403, 0.0
      %vm436 = vcmp.gt.f32.partialorder %v404, 0.0
      %vm437 = vcmp.gt.f32.partialorder %v405, 0.0
      %vm438 = vcmp.gt.f32.partialorder %v406, 0.0
      %vm439 = vcmp.gt.f32.partialorder %v407, 0.0
      %vm440 = vcmp.gt.f32.partialorder %v408, 0.0
      %vm441 = vcmp.gt.f32.partialorder %v409, 0.0
      %vm442 = vcmp.gt.f32.partialorder %v410, 0.0
      %vm443 = vcmp.gt.f32.partialorder %v411, 0.0
      %vm444 = vcmp.gt.f32.partialorder %v412, 0.0
      %vm445 = vcmp.gt.f32.partialorder %v413, 0.0
      %vm446 = vcmp.gt.f32.partialorder %v414, 0.0
      %vm447 = vcmp.gt.f32.partialorder %v415, 0.0
      %vm448 = vcmp.gt.f32.partialorder %v416, 0.0
      %vm449 = vcmp.gt.f32.partialorder %v417, 0.0
      %vm450 = vcmp.gt.f32.partialorder %v418, 0.0
      %vm451 = vcmp.gt.f32.partialorder %v419, 0.0
      %vm452 = vcmp.gt.f32.partialorder %v420, 0.0
      %vm453 = vcmp.gt.f32.partialorder %v421, 0.0
      %vm454 = vcmp.gt.f32.partialorder %v422, 0.0
      %vm455 = vcmp.gt.f32.partialorder %v423, 0.0
      %vm456 = vcmp.gt.f32.partialorder %v424, 0.0
      %vm457 = vcmp.gt.f32.partialorder %v425, 0.0
      %vm458 = vcmp.gt.f32.partialorder %v426, 0.0
      %vm459 = vcmp.gt.f32.partialorder %v427, 0.0
      %vm460 = vcmp.gt.f32.partialorder %v428, 0.0
      %vm461 = vcmp.gt.f32.partialorder %v429, 0.0
      %vm462 = vcmp.gt.f32.partialorder %v430, 0.0
      %v463 = vsel %vm431, 0.0, %v303
      %v464 = vsel %vm432, 0.0, %v304
      %v465 = vsel %vm433, 0.0, %v305
      %v466 = vsel %vm434, 0.0, %v306
      %v467 = vsel %vm435, 0.0, %v307
      %v468 = vsel %vm436, 0.0, %v308
      %v469 = vsel %vm437, 0.0, %v309
      %v470 = vsel %vm438, 0.0, %v310
      %v471 = vsel %vm439, 0.0, %v311
      %v472 = vsel %vm440, 0.0, %v312
      %v473 = vsel %vm441, 0.0, %v313
      %v474 = vsel %vm442, 0.0, %v314
      %v475 = vsel %vm443, 0.0, %v315
      %v476 = vsel %vm444, 0.0, %v316
      %v477 = vsel %vm445, 0.0, %v317
      %v478 = vsel %vm446, 0.0, %v318
      %v479 = vsel %vm447, 0.0, %v319
      %v480 = vsel %vm448, 0.0, %v320
      %v481 = vsel %vm449, 0.0, %v321
      %v482 = vsel %vm450, 0.0, %v322
      %v483 = vsel %vm451, 0.0, %v323
      %v484 = vsel %vm452, 0.0, %v324
      %v485 = vsel %vm453, 0.0, %v325
      %v486 = vsel %vm454, 0.0, %v326
      %v487 = vsel %vm455, 0.0, %v327
      %v488 = vsel %vm456, 0.0, %v328
      %v489 = vsel %vm457, 0.0, %v329
      %v490 = vsel %vm458, 0.0, %v330
      %v491 = vsel %vm459, 0.0, %v331
      %v492 = vsel %vm460, 0.0, %v332
      %v493 = vsel %vm461, 0.0, %v333
      %v494 = vsel %vm462, 0.0, %v334
      %v495 = vpack.c.bf16 %v400, %v399
      %v496 = vpack.c.bf16 %v402, %v401
      %v497 = vpack.c.bf16 %v404, %v403
      %v498 = vpack.c.bf16 %v406, %v405
      %v499 = vpack.c.bf16 %v408, %v407
      %v500 = vpack.c.bf16 %v410, %v409
      %v501 = vpack.c.bf16 %v412, %v411
      %v502 = vpack.c.bf16 %v414, %v413
      %v503 = vpack.c.bf16 %v416, %v415
      %v504 = vpack.c.bf16 %v418, %v417
      %v505 = vpack.c.bf16 %v420, %v419
      %v506 = vpack.c.bf16 %v422, %v421
      %v507 = vpack.c.bf16 %v424, %v423
      %v508 = vpack.c.bf16 %v426, %v425
      %v509 = vpack.c.bf16 %v428, %v427
      %v510 = vpack.c.bf16 %v430, %v429
      %v527 = vunpack.c.l.b16 %v495
      %v528 = vunpack.c.h.b16 %v495
      %v529 = vunpack.c.l.b16 %v496
      %v530 = vunpack.c.h.b16 %v496
      %v531 = vunpack.c.l.b16 %v497
      %v532 = vunpack.c.h.b16 %v497
      %v533 = vunpack.c.l.b16 %v498
      %v534 = vunpack.c.h.b16 %v498
      %v535 = vunpack.c.l.b16 %v499
      %v536 = vunpack.c.h.b16 %v499
      %v537 = vunpack.c.l.b16 %v500
      %v538 = vunpack.c.h.b16 %v500
      %v539 = vunpack.c.l.b16 %v501
      %v540 = vunpack.c.h.b16 %v501
      %v541 = vunpack.c.l.b16 %v502
      %v542 = vunpack.c.h.b16 %v502
      %v543 = vunpack.c.l.b16 %v503
      %v544 = vunpack.c.h.b16 %v503
      %v545 = vunpack.c.l.b16 %v504
      %v546 = vunpack.c.h.b16 %v504
      %v547 = vunpack.c.l.b16 %v505
      %v548 = vunpack.c.h.b16 %v505
      %v549 = vunpack.c.l.b16 %v506
      %v550 = vunpack.c.h.b16 %v506
      %v551 = vunpack.c.l.b16 %v507
      %v552 = vunpack.c.h.b16 %v507
      %v553 = vunpack.c.l.b16 %v508
      %v554 = vunpack.c.h.b16 %v508
      %v555 = vunpack.c.l.b16 %v509
      %v556 = vunpack.c.h.b16 %v509
      %v557 = vunpack.c.l.b16 %v510
      %v558 = vunpack.c.h.b16 %v510
      %v559 = vpack.c.b16 %v527, %v527
      %v560 = vpack.c.b16 %v528, %v528
      %v561 = vpack.c.b16 %v529, %v529
      %v562 = vpack.c.b16 %v530, %v530
      %v563 = vpack.c.b16 %v531, %v531
      %v564 = vpack.c.b16 %v532, %v532
      %v565 = vpack.c.b16 %v533, %v533
      %v566 = vpack.c.b16 %v534, %v534
      %v567 = vpack.c.b16 %v535, %v535
      %v568 = vpack.c.b16 %v536, %v536
      %v569 = vpack.c.b16 %v537, %v537
      %v570 = vpack.c.b16 %v538, %v538
      %v571 = vpack.c.b16 %v539, %v539
      %v572 = vpack.c.b16 %v540, %v540
      %v573 = vpack.c.b16 %v541, %v541
      %v574 = vpack.c.b16 %v542, %v542
      %v575 = vpack.c.b16 %v543, %v543
      %v576 = vpack.c.b16 %v544, %v544
      %v577 = vpack.c.b16 %v545, %v545
      %v578 = vpack.c.b16 %v546, %v546
      %v579 = vpack.c.b16 %v547, %v547
      %v580 = vpack.c.b16 %v548, %v548
      %v581 = vpack.c.b16 %v549, %v549
      %v582 = vpack.c.b16 %v550, %v550
      %v583 = vpack.c.b16 %v551, %v551
      %v584 = vpack.c.b16 %v552, %v552
      %v585 = vpack.c.b16 %v553, %v553
      %v586 = vpack.c.b16 %v554, %v554
      %v587 = vpack.c.b16 %v555, %v555
      %v588 = vpack.c.b16 %v556, %v556
      %v589 = vpack.c.b16 %v557, %v557
      %v590 = vpack.c.b16 %v558, %v558
      %623 = vst [vmem:[%s198] sm:$0xf] %v559
      %624 = vst [vmem:[%s198 + $0x4] sm:$0xf] %v560
      %625 = vst [vmem:[%s198 + $0x8] sm:$0xf] %v561
      %626 = vst [vmem:[%s198 + $0xc] sm:$0xf] %v562
      %627 = vst [vmem:[%s198 + $0x10] sm:$0xf] %v563
      %628 = vst [vmem:[%s198 + $0x14] sm:$0xf] %v564
      %629 = vst [vmem:[%s198 + $0x18] sm:$0xf] %v565
      %630 = vst [vmem:[%s198 + $0x1c] sm:$0xf] %v566
      %631 = vst [vmem:[%s198 + $0x20] sm:$0xf] %v567
      %632 = vst [vmem:[%s198 + $0x24] sm:$0xf] %v568
      %633 = vst [vmem:[%s198 + $0x28] sm:$0xf] %v569
      %634 = vst [vmem:[%s198 + $0x2c] sm:$0xf] %v570
      %635 = vst [vmem:[%s198 + $0x30] sm:$0xf] %v571
      %636 = vst [vmem:[%s198 + $0x34] sm:$0xf] %v572
      %637 = vst [vmem:[%s198 + $0x38] sm:$0xf] %v573
      %638 = vst [vmem:[%s198 + $0x3c] sm:$0xf] %v574
      %639 = vst [vmem:[%s198 + $0x40] sm:$0xf] %v575
      %640 = vst [vmem:[%s198 + $0x44] sm:$0xf] %v576
      %641 = vst [vmem:[%s198 + $0x48] sm:$0xf] %v577
      %642 = vst [vmem:[%s198 + $0x4c] sm:$0xf] %v578
      %643 = vst [vmem:[%s198 + $0x50] sm:$0xf] %v579
      %644 = vst [vmem:[%s198 + $0x54] sm:$0xf] %v580
      %645 = vst [vmem:[%s198 + $0x58] sm:$0xf] %v581
      %646 = vst [vmem:[%s198 + $0x5c] sm:$0xf] %v582
      %647 = vst [vmem:[%s198 + $0x60] sm:$0xf] %v583
      %648 = vst [vmem:[%s198 + $0x64] sm:$0xf] %v584
      %649 = vst [vmem:[%s198 + $0x68] sm:$0xf] %v585
      %650 = vst [vmem:[%s198 + $0x6c] sm:$0xf] %v586
      %651 = vst [vmem:[%s198 + $0x70] sm:$0xf] %v587
      %652 = vst [vmem:[%s198 + $0x74] sm:$0xf] %v588
      %653 = vst [vmem:[%s198 + $0x78] sm:$0xf] %v589
      %654 = vst [vmem:[%s198 + $0x7c] sm:$0xf] %v590
      %v655 = vmul.f32 %v463, 0.3
      %v656 = vmul.f32 %v464, 0.3
      %v657 = vmul.f32 %v465, 0.3
      %v658 = vmul.f32 %v466, 0.3
      %v659 = vmul.f32 %v467, 0.3
      %v660 = vmul.f32 %v468, 0.3
      %v661 = vmul.f32 %v469, 0.3
      %v662 = vmul.f32 %v470, 0.3
      %v663 = vmul.f32 %v471, 0.3
      %v664 = vmul.f32 %v472, 0.3
      %v665 = vmul.f32 %v473, 0.3
      %v666 = vmul.f32 %v474, 0.3
      %v667 = vmul.f32 %v475, 0.3
      %v668 = vmul.f32 %v476, 0.3
      %v669 = vmul.f32 %v477, 0.3
      %v670 = vmul.f32 %v478, 0.3
      %v671 = vmul.f32 %v479, 0.3
      %v672 = vmul.f32 %v480, 0.3
      %v673 = vmul.f32 %v481, 0.3
      %v674 = vmul.f32 %v482, 0.3
      %v675 = vmul.f32 %v483, 0.3
      %v676 = vmul.f32 %v484, 0.3
      %v677 = vmul.f32 %v485, 0.3
      %v678 = vmul.f32 %v486, 0.3
      %v679 = vmul.f32 %v487, 0.3
      %v680 = vmul.f32 %v488, 0.3
      %v681 = vmul.f32 %v489, 0.3
      %v682 = vmul.f32 %v490, 0.3
      %v683 = vmul.f32 %v491, 0.3
      %v684 = vmul.f32 %v492, 0.3
      %v685 = vmul.f32 %v493, 0.3
      %v686 = vmul.f32 %v494, 0.3
      %s687 = scalar_lea.vmem %s188, 128
      %v688 = vld [vmem:[%s687] sm:$0xf]
      %v689 = vld [vmem:[%s687 + $0x4] sm:$0xf]
      %v690 = vld [vmem:[%s687 + $0x8] sm:$0xf]
      %v691 = vld [vmem:[%s687 + $0xc] sm:$0xf]
      %v692 = vld [vmem:[%s687 + $0x10] sm:$0xf]
      %v693 = vld [vmem:[%s687 + $0x14] sm:$0xf]
      %v694 = vld [vmem:[%s687 + $0x18] sm:$0xf]
      %v695 = vld [vmem:[%s687 + $0x1c] sm:$0xf]
      %v696 = vld [vmem:[%s687 + $0x20] sm:$0xf]
      %v697 = vld [vmem:[%s687 + $0x24] sm:$0xf]
      %v698 = vld [vmem:[%s687 + $0x28] sm:$0xf]
      %v699 = vld [vmem:[%s687 + $0x2c] sm:$0xf]
      %v700 = vld [vmem:[%s687 + $0x30] sm:$0xf]
      %v701 = vld [vmem:[%s687 + $0x34] sm:$0xf]
      %v702 = vld [vmem:[%s687 + $0x38] sm:$0xf]
      %v703 = vld [vmem:[%s687 + $0x3c] sm:$0xf]
      %v704 = vld [vmem:[%s687 + $0x40] sm:$0xf]
      %v705 = vld [vmem:[%s687 + $0x44] sm:$0xf]
      %v706 = vld [vmem:[%s687 + $0x48] sm:$0xf]
      %v707 = vld [vmem:[%s687 + $0x4c] sm:$0xf]
      %v708 = vld [vmem:[%s687 + $0x50] sm:$0xf]
      %v709 = vld [vmem:[%s687 + $0x54] sm:$0xf]
      %v710 = vld [vmem:[%s687 + $0x58] sm:$0xf]
      %v711 = vld [vmem:[%s687 + $0x5c] sm:$0xf]
      %v712 = vld [vmem:[%s687 + $0x60] sm:$0xf]
      %v713 = vld [vmem:[%s687 + $0x64] sm:$0xf]
      %v714 = vld [vmem:[%s687 + $0x68] sm:$0xf]
      %v715 = vld [vmem:[%s687 + $0x6c] sm:$0xf]
      %v716 = vld [vmem:[%s687 + $0x70] sm:$0xf]
      %v717 = vld [vmem:[%s687 + $0x74] sm:$0xf]
      %v718 = vld [vmem:[%s687 + $0x78] sm:$0xf]
      %v719 = vld [vmem:[%s687 + $0x7c] sm:$0xf]
      %v720 = vunpack.c.l.bf16 %v688
      %v721 = vunpack.c.l.bf16 %v689
      %v722 = vunpack.c.l.bf16 %v690
      %v723 = vunpack.c.l.bf16 %v691
      %v724 = vunpack.c.l.bf16 %v692
      %v725 = vunpack.c.l.bf16 %v693
      %v726 = vunpack.c.l.bf16 %v694
      %v727 = vunpack.c.l.bf16 %v695
      %v728 = vunpack.c.l.bf16 %v696
      %v729 = vunpack.c.l.bf16 %v697
      %v730 = vunpack.c.l.bf16 %v698
      %v731 = vunpack.c.l.bf16 %v699
      %v732 = vunpack.c.l.bf16 %v700
      %v733 = vunpack.c.l.bf16 %v701
      %v734 = vunpack.c.l.bf16 %v702
      %v735 = vunpack.c.l.bf16 %v703
      %v736 = vunpack.c.l.bf16 %v704
      %v737 = vunpack.c.l.bf16 %v705
      %v738 = vunpack.c.l.bf16 %v706
      %v739 = vunpack.c.l.bf16 %v707
      %v740 = vunpack.c.l.bf16 %v708
      %v741 = vunpack.c.l.bf16 %v709
      %v742 = vunpack.c.l.bf16 %v710
      %v743 = vunpack.c.l.bf16 %v711
      %v744 = vunpack.c.l.bf16 %v712
      %v745 = vunpack.c.l.bf16 %v713
      %v746 = vunpack.c.l.bf16 %v714
      %v747 = vunpack.c.l.bf16 %v715
      %v748 = vunpack.c.l.bf16 %v716
      %v749 = vunpack.c.l.bf16 %v717
      %v750 = vunpack.c.l.bf16 %v718
      %v751 = vunpack.c.l.bf16 %v719
      %s752 = scalar_lea.vmem %s179, 1
      %v753 = vld [vmem:[%s752] sm:$0x1]
      %v755 = vlaneseq
      %v756 = vshrl.u32 %v755, 7
      %v757 = vsub.s32 0, %v756
      %v758 = vrot.slane %v753, %v757
      %v760 = vmul.f32 %v720, %v758
      %v761 = vmul.f32 %v721, %v758
      %v762 = vmul.f32 %v722, %v758
      %v763 = vmul.f32 %v723, %v758
      %v764 = vmul.f32 %v724, %v758
      %v765 = vmul.f32 %v725, %v758
      %v766 = vmul.f32 %v726, %v758
      %v767 = vmul.f32 %v727, %v758
      %v768 = vmul.f32 %v728, %v758
      %v769 = vmul.f32 %v729, %v758
      %v770 = vmul.f32 %v730, %v758
      %v771 = vmul.f32 %v731, %v758
      %v772 = vmul.f32 %v732, %v758
      %v773 = vmul.f32 %v733, %v758
      %v774 = vmul.f32 %v734, %v758
      %v775 = vmul.f32 %v735, %v758
      %v776 = vmul.f32 %v736, %v758
      %v777 = vmul.f32 %v737, %v758
      %v778 = vmul.f32 %v738, %v758
      %v779 = vmul.f32 %v739, %v758
      %v780 = vmul.f32 %v740, %v758
      %v781 = vmul.f32 %v741, %v758
      %v782 = vmul.f32 %v742, %v758
      %v783 = vmul.f32 %v743, %v758
      %v784 = vmul.f32 %v744, %v758
      %v785 = vmul.f32 %v745, %v758
      %v786 = vmul.f32 %v746, %v758
      %v787 = vmul.f32 %v747, %v758
      %v788 = vmul.f32 %v748, %v758
      %v789 = vmul.f32 %v749, %v758
      %v790 = vmul.f32 %v750, %v758
      %v791 = vmul.f32 %v751, %v758
      %v792 = vadd.f32 %v655, %v760
      %v793 = vadd.f32 %v656, %v761
      %v794 = vadd.f32 %v657, %v762
      %v795 = vadd.f32 %v658, %v763
      %v796 = vadd.f32 %v659, %v764
      %v797 = vadd.f32 %v660, %v765
      %v798 = vadd.f32 %v661, %v766
      %v799 = vadd.f32 %v662, %v767
      %v800 = vadd.f32 %v663, %v768
      %v801 = vadd.f32 %v664, %v769
      %v802 = vadd.f32 %v665, %v770
      %v803 = vadd.f32 %v666, %v771
      %v804 = vadd.f32 %v667, %v772
      %v805 = vadd.f32 %v668, %v773
      %v806 = vadd.f32 %v669, %v774
      %v807 = vadd.f32 %v670, %v775
      %v808 = vadd.f32 %v671, %v776
      %v809 = vadd.f32 %v672, %v777
      %v810 = vadd.f32 %v673, %v778
      %v811 = vadd.f32 %v674, %v779
      %v812 = vadd.f32 %v675, %v780
      %v813 = vadd.f32 %v676, %v781
      %v814 = vadd.f32 %v677, %v782
      %v815 = vadd.f32 %v678, %v783
      %v816 = vadd.f32 %v679, %v784
      %v817 = vadd.f32 %v680, %v785
      %v818 = vadd.f32 %v681, %v786
      %v819 = vadd.f32 %v682, %v787
      %v820 = vadd.f32 %v683, %v788
      %v821 = vadd.f32 %v684, %v789
      %v822 = vadd.f32 %v685, %v790
      %v823 = vadd.f32 %v686, %v791
      %vm824 = vcmp.ge.f32.partialorder %v792, 0.3
      %vm825 = vcmp.ge.f32.partialorder %v793, 0.3
      %vm826 = vcmp.ge.f32.partialorder %v794, 0.3
      %vm827 = vcmp.ge.f32.partialorder %v795, 0.3
      %vm828 = vcmp.ge.f32.partialorder %v796, 0.3
      %vm829 = vcmp.ge.f32.partialorder %v797, 0.3
      %vm830 = vcmp.ge.f32.partialorder %v798, 0.3
      %vm831 = vcmp.ge.f32.partialorder %v799, 0.3
      %vm832 = vcmp.ge.f32.partialorder %v800, 0.3
      %vm833 = vcmp.ge.f32.partialorder %v801, 0.3
      %vm834 = vcmp.ge.f32.partialorder %v802, 0.3
      %vm835 = vcmp.ge.f32.partialorder %v803, 0.3
      %vm836 = vcmp.ge.f32.partialorder %v804, 0.3
      %vm837 = vcmp.ge.f32.partialorder %v805, 0.3
      %vm838 = vcmp.ge.f32.partialorder %v806, 0.3
      %vm839 = vcmp.ge.f32.partialorder %v807, 0.3
      %vm840 = vcmp.ge.f32.partialorder %v808, 0.3
      %vm841 = vcmp.ge.f32.partialorder %v809, 0.3
      %vm842 = vcmp.ge.f32.partialorder %v810, 0.3
      %vm843 = vcmp.ge.f32.partialorder %v811, 0.3
      %vm844 = vcmp.ge.f32.partialorder %v812, 0.3
      %vm845 = vcmp.ge.f32.partialorder %v813, 0.3
      %vm846 = vcmp.ge.f32.partialorder %v814, 0.3
      %vm847 = vcmp.ge.f32.partialorder %v815, 0.3
      %vm848 = vcmp.ge.f32.partialorder %v816, 0.3
      %vm849 = vcmp.ge.f32.partialorder %v817, 0.3
      %vm850 = vcmp.ge.f32.partialorder %v818, 0.3
      %vm851 = vcmp.ge.f32.partialorder %v819, 0.3
      %vm852 = vcmp.ge.f32.partialorder %v820, 0.3
      %vm853 = vcmp.ge.f32.partialorder %v821, 0.3
      %vm854 = vcmp.ge.f32.partialorder %v822, 0.3
      %vm855 = vcmp.ge.f32.partialorder %v823, 0.3
      %v856 = vsel %vm824, 1, 0
      %v857 = vsel %vm825, 1, 0
      %v858 = vsel %vm826, 1, 0
      %v859 = vsel %vm827, 1, 0
      %v860 = vsel %vm828, 1, 0
      %v861 = vsel %vm829, 1, 0
      %v862 = vsel %vm830, 1, 0
      %v863 = vsel %vm831, 1, 0
      %v864 = vsel %vm832, 1, 0
      %v865 = vsel %vm833, 1, 0
      %v866 = vsel %vm834, 1, 0
      %v867 = vsel %vm835, 1, 0
      %v868 = vsel %vm836, 1, 0
      %v869 = vsel %vm837, 1, 0
      %v870 = vsel %vm838, 1, 0
      %v871 = vsel %vm839, 1, 0
      %v872 = vsel %vm840, 1, 0
      %v873 = vsel %vm841, 1, 0
      %v874 = vsel %vm842, 1, 0
      %v875 = vsel %vm843, 1, 0
      %v876 = vsel %vm844, 1, 0
      %v877 = vsel %vm845, 1, 0
      %v878 = vsel %vm846, 1, 0
      %v879 = vsel %vm847, 1, 0
      %v880 = vsel %vm848, 1, 0
      %v881 = vsel %vm849, 1, 0
      %v882 = vsel %vm850, 1, 0
      %v883 = vsel %vm851, 1, 0
      %v884 = vsel %vm852, 1, 0
      %v885 = vsel %vm853, 1, 0
      %v886 = vsel %vm854, 1, 0
      %v887 = vsel %vm855, 1, 0
      %v888 = vcvt.s32.f32 %v856
      %v889 = vcvt.s32.f32 %v857
      %v890 = vcvt.s32.f32 %v858
      %v891 = vcvt.s32.f32 %v859
      %v892 = vcvt.s32.f32 %v860
      %v893 = vcvt.s32.f32 %v861
      %v894 = vcvt.s32.f32 %v862
      %v895 = vcvt.s32.f32 %v863
      %v896 = vcvt.s32.f32 %v864
      %v897 = vcvt.s32.f32 %v865
      %v898 = vcvt.s32.f32 %v866
      %v899 = vcvt.s32.f32 %v867
      %v900 = vcvt.s32.f32 %v868
      %v901 = vcvt.s32.f32 %v869
      %v902 = vcvt.s32.f32 %v870
      %v903 = vcvt.s32.f32 %v871
      %v904 = vcvt.s32.f32 %v872
      %v905 = vcvt.s32.f32 %v873
      %v906 = vcvt.s32.f32 %v874
      %v907 = vcvt.s32.f32 %v875
      %v908 = vcvt.s32.f32 %v876
      %v909 = vcvt.s32.f32 %v877
      %v910 = vcvt.s32.f32 %v878
      %v911 = vcvt.s32.f32 %v879
      %v912 = vcvt.s32.f32 %v880
      %v913 = vcvt.s32.f32 %v881
      %v914 = vcvt.s32.f32 %v882
      %v915 = vcvt.s32.f32 %v883
      %v916 = vcvt.s32.f32 %v884
      %v917 = vcvt.s32.f32 %v885
      %v918 = vcvt.s32.f32 %v886
      %v919 = vcvt.s32.f32 %v887
      %vm920 = vcmp.gt.f32.partialorder %v888, 0.0
      %vm921 = vcmp.gt.f32.partialorder %v889, 0.0
      %vm922 = vcmp.gt.f32.partialorder %v890, 0.0
      %vm923 = vcmp.gt.f32.partialorder %v891, 0.0
      %vm924 = vcmp.gt.f32.partialorder %v892, 0.0
      %vm925 = vcmp.gt.f32.partialorder %v893, 0.0
      %vm926 = vcmp.gt.f32.partialorder %v894, 0.0
      %vm927 = vcmp.gt.f32.partialorder %v895, 0.0
      %vm928 = vcmp.gt.f32.partialorder %v896, 0.0
      %vm929 = vcmp.gt.f32.partialorder %v897, 0.0
      %vm930 = vcmp.gt.f32.partialorder %v898, 0.0
      %vm931 = vcmp.gt.f32.partialorder %v899, 0.0
      %vm932 = vcmp.gt.f32.partialorder %v900, 0.0
      %vm933 = vcmp.gt.f32.partialorder %v901, 0.0
      %vm934 = vcmp.gt.f32.partialorder %v902, 0.0
      %vm935 = vcmp.gt.f32.partialorder %v903, 0.0
      %vm936 = vcmp.gt.f32.partialorder %v904, 0.0
      %vm937 = vcmp.gt.f32.partialorder %v905, 0.0
      %vm938 = vcmp.gt.f32.partialorder %v906, 0.0
      %vm939 = vcmp.gt.f32.partialorder %v907, 0.0
      %vm940 = vcmp.gt.f32.partialorder %v908, 0.0
      %vm941 = vcmp.gt.f32.partialorder %v909, 0.0
      %vm942 = vcmp.gt.f32.partialorder %v910, 0.0
      %vm943 = vcmp.gt.f32.partialorder %v911, 0.0
      %vm944 = vcmp.gt.f32.partialorder %v912, 0.0
      %vm945 = vcmp.gt.f32.partialorder %v913, 0.0
      %vm946 = vcmp.gt.f32.partialorder %v914, 0.0
      %vm947 = vcmp.gt.f32.partialorder %v915, 0.0
      %vm948 = vcmp.gt.f32.partialorder %v916, 0.0
      %vm949 = vcmp.gt.f32.partialorder %v917, 0.0
      %vm950 = vcmp.gt.f32.partialorder %v918, 0.0
      %vm951 = vcmp.gt.f32.partialorder %v919, 0.0
      %v952 = vsel %vm920, 0.0, %v792
      %v953 = vsel %vm921, 0.0, %v793
      %v954 = vsel %vm922, 0.0, %v794
      %v955 = vsel %vm923, 0.0, %v795
      %v956 = vsel %vm924, 0.0, %v796
      %v957 = vsel %vm925, 0.0, %v797
      %v958 = vsel %vm926, 0.0, %v798
      %v959 = vsel %vm927, 0.0, %v799
      %v960 = vsel %vm928, 0.0, %v800
      %v961 = vsel %vm929, 0.0, %v801
      %v962 = vsel %vm930, 0.0, %v802
      %v963 = vsel %vm931, 0.0, %v803
      %v964 = vsel %vm932, 0.0, %v804
      %v965 = vsel %vm933, 0.0, %v805
      %v966 = vsel %vm934, 0.0, %v806
      %v967 = vsel %vm935, 0.0, %v807
      %v968 = vsel %vm936, 0.0, %v808
      %v969 = vsel %vm937, 0.0, %v809
      %v970 = vsel %vm938, 0.0, %v810
      %v971 = vsel %vm939, 0.0, %v811
      %v972 = vsel %vm940, 0.0, %v812
      %v973 = vsel %vm941, 0.0, %v813
      %v974 = vsel %vm942, 0.0, %v814
      %v975 = vsel %vm943, 0.0, %v815
      %v976 = vsel %vm944, 0.0, %v816
      %v977 = vsel %vm945, 0.0, %v817
      %v978 = vsel %vm946, 0.0, %v818
      %v979 = vsel %vm947, 0.0, %v819
      %v980 = vsel %vm948, 0.0, %v820
      %v981 = vsel %vm949, 0.0, %v821
      %v982 = vsel %vm950, 0.0, %v822
      %v983 = vsel %vm951, 0.0, %v823
      %v984 = vpack.c.bf16 %v889, %v888
      %v985 = vpack.c.bf16 %v891, %v890
      %v986 = vpack.c.bf16 %v893, %v892
      %v987 = vpack.c.bf16 %v895, %v894
      %v988 = vpack.c.bf16 %v897, %v896
      %v989 = vpack.c.bf16 %v899, %v898
      %v990 = vpack.c.bf16 %v901, %v900
      %v991 = vpack.c.bf16 %v903, %v902
      %v992 = vpack.c.bf16 %v905, %v904
      %v993 = vpack.c.bf16 %v907, %v906
      %v994 = vpack.c.bf16 %v909, %v908
      %v995 = vpack.c.bf16 %v911, %v910
      %v996 = vpack.c.bf16 %v913, %v912
      %v997 = vpack.c.bf16 %v915, %v914
      %v998 = vpack.c.bf16 %v917, %v916
      %v999 = vpack.c.bf16 %v919, %v918
      %v1016 = vunpack.c.l.b16 %v984
      %v1017 = vunpack.c.h.b16 %v984
      %v1018 = vunpack.c.l.b16 %v985
      %v1019 = vunpack.c.h.b16 %v985
      %v1020 = vunpack.c.l.b16 %v986
      %v1021 = vunpack.c.h.b16 %v986
      %v1022 = vunpack.c.l.b16 %v987
      %v1023 = vunpack.c.h.b16 %v987
      %v1024 = vunpack.c.l.b16 %v988
      %v1025 = vunpack.c.h.b16 %v988
      %v1026 = vunpack.c.l.b16 %v989
      %v1027 = vunpack.c.h.b16 %v989
      %v1028 = vunpack.c.l.b16 %v990
      %v1029 = vunpack.c.h.b16 %v990
      %v1030 = vunpack.c.l.b16 %v991
      %v1031 = vunpack.c.h.b16 %v991
      %v1032 = vunpack.c.l.b16 %v992
      %v1033 = vunpack.c.h.b16 %v992
      %v1034 = vunpack.c.l.b16 %v993
      %v1035 = vunpack.c.h.b16 %v993
      %v1036 = vunpack.c.l.b16 %v994
      %v1037 = vunpack.c.h.b16 %v994
      %v1038 = vunpack.c.l.b16 %v995
      %v1039 = vunpack.c.h.b16 %v995
      %v1040 = vunpack.c.l.b16 %v996
      %v1041 = vunpack.c.h.b16 %v996
      %v1042 = vunpack.c.l.b16 %v997
      %v1043 = vunpack.c.h.b16 %v997
      %v1044 = vunpack.c.l.b16 %v998
      %v1045 = vunpack.c.h.b16 %v998
      %v1046 = vunpack.c.l.b16 %v999
      %v1047 = vunpack.c.h.b16 %v999
      %v1048 = vpack.c.b16 %v1016, %v1016
      %v1049 = vpack.c.b16 %v1017, %v1017
      %v1050 = vpack.c.b16 %v1018, %v1018
      %v1051 = vpack.c.b16 %v1019, %v1019
      %v1052 = vpack.c.b16 %v1020, %v1020
      %v1053 = vpack.c.b16 %v1021, %v1021
      %v1054 = vpack.c.b16 %v1022, %v1022
      %v1055 = vpack.c.b16 %v1023, %v1023
      %v1056 = vpack.c.b16 %v1024, %v1024
      %v1057 = vpack.c.b16 %v1025, %v1025
      %v1058 = vpack.c.b16 %v1026, %v1026
      %v1059 = vpack.c.b16 %v1027, %v1027
      %v1060 = vpack.c.b16 %v1028, %v1028
      %v1061 = vpack.c.b16 %v1029, %v1029
      %v1062 = vpack.c.b16 %v1030, %v1030
      %v1063 = vpack.c.b16 %v1031, %v1031
      %v1064 = vpack.c.b16 %v1032, %v1032
      %v1065 = vpack.c.b16 %v1033, %v1033
      %v1066 = vpack.c.b16 %v1034, %v1034
      %v1067 = vpack.c.b16 %v1035, %v1035
      %v1068 = vpack.c.b16 %v1036, %v1036
      %v1069 = vpack.c.b16 %v1037, %v1037
      %v1070 = vpack.c.b16 %v1038, %v1038
      %v1071 = vpack.c.b16 %v1039, %v1039
      %v1072 = vpack.c.b16 %v1040, %v1040
      %v1073 = vpack.c.b16 %v1041, %v1041
      %v1074 = vpack.c.b16 %v1042, %v1042
      %v1075 = vpack.c.b16 %v1043, %v1043
      %v1076 = vpack.c.b16 %v1044, %v1044
      %v1077 = vpack.c.b16 %v1045, %v1045
      %v1078 = vpack.c.b16 %v1046, %v1046
      %v1079 = vpack.c.b16 %v1047, %v1047
      %s1112 = scalar_lea.vmem %s198, 128
      %1113 = vst [vmem:[%s1112] sm:$0xf] %v1048
      %1114 = vst [vmem:[%s1112 + $0x4] sm:$0xf] %v1049
      %1115 = vst [vmem:[%s1112 + $0x8] sm:$0xf] %v1050
      %1116 = vst [vmem:[%s1112 + $0xc] sm:$0xf] %v1051
      %1117 = vst [vmem:[%s1112 + $0x10] sm:$0xf] %v1052
      %1118 = vst [vmem:[%s1112 + $0x14] sm:$0xf] %v1053
      %1119 = vst [vmem:[%s1112 + $0x18] sm:$0xf] %v1054
      %1120 = vst [vmem:[%s1112 + $0x1c] sm:$0xf] %v1055
      %1121 = vst [vmem:[%s1112 + $0x20] sm:$0xf] %v1056
      %1122 = vst [vmem:[%s1112 + $0x24] sm:$0xf] %v1057
      %1123 = vst [vmem:[%s1112 + $0x28] sm:$0xf] %v1058
      %1124 = vst [vmem:[%s1112 + $0x2c] sm:$0xf] %v1059
      %1125 = vst [vmem:[%s1112 + $0x30] sm:$0xf] %v1060
      %1126 = vst [vmem:[%s1112 + $0x34] sm:$0xf] %v1061
      %1127 = vst [vmem:[%s1112 + $0x38] sm:$0xf] %v1062
      %1128 = vst [vmem:[%s1112 + $0x3c] sm:$0xf] %v1063
      %1129 = vst [vmem:[%s1112 + $0x40] sm:$0xf] %v1064
      %1130 = vst [vmem:[%s1112 + $0x44] sm:$0xf] %v1065
      %1131 = vst [vmem:[%s1112 + $0x48] sm:$0xf] %v1066
      %1132 = vst [vmem:[%s1112 + $0x4c] sm:$0xf] %v1067
      %1133 = vst [vmem:[%s1112 + $0x50] sm:$0xf] %v1068
      %1134 = vst [vmem:[%s1112 + $0x54] sm:$0xf] %v1069
      %1135 = vst [vmem:[%s1112 + $0x58] sm:$0xf] %v1070
      %1136 = vst [vmem:[%s1112 + $0x5c] sm:$0xf] %v1071
      %1137 = vst [vmem:[%s1112 + $0x60] sm:$0xf] %v1072
      %1138 = vst [vmem:[%s1112 + $0x64] sm:$0xf] %v1073
      %1139 = vst [vmem:[%s1112 + $0x68] sm:$0xf] %v1074
      %1140 = vst [vmem:[%s1112 + $0x6c] sm:$0xf] %v1075
      %1141 = vst [vmem:[%s1112 + $0x70] sm:$0xf] %v1076
      %1142 = vst [vmem:[%s1112 + $0x74] sm:$0xf] %v1077
      %1143 = vst [vmem:[%s1112 + $0x78] sm:$0xf] %v1078
      %1144 = vst [vmem:[%s1112 + $0x7c] sm:$0xf] %v1079
      %v1145 = vmul.f32 %v952, 0.3
      %v1146 = vmul.f32 %v953, 0.3
      %v1147 = vmul.f32 %v954, 0.3
      %v1148 = vmul.f32 %v955, 0.3
      %v1149 = vmul.f32 %v956, 0.3
      %v1150 = vmul.f32 %v957, 0.3
      %v1151 = vmul.f32 %v958, 0.3
      %v1152 = vmul.f32 %v959, 0.3
      %v1153 = vmul.f32 %v960, 0.3
      %v1154 = vmul.f32 %v961, 0.3
      %v1155 = vmul.f32 %v962, 0.3
      %v1156 = vmul.f32 %v963, 0.3
      %v1157 = vmul.f32 %v964, 0.3
      %v1158 = vmul.f32 %v965, 0.3
      %v1159 = vmul.f32 %v966, 0.3
      %v1160 = vmul.f32 %v967, 0.3
      %v1161 = vmul.f32 %v968, 0.3
      %v1162 = vmul.f32 %v969, 0.3
      %v1163 = vmul.f32 %v970, 0.3
      %v1164 = vmul.f32 %v971, 0.3
      %v1165 = vmul.f32 %v972, 0.3
      %v1166 = vmul.f32 %v973, 0.3
      %v1167 = vmul.f32 %v974, 0.3
      %v1168 = vmul.f32 %v975, 0.3
      %v1169 = vmul.f32 %v976, 0.3
      %v1170 = vmul.f32 %v977, 0.3
      %v1171 = vmul.f32 %v978, 0.3
      %v1172 = vmul.f32 %v979, 0.3
      %v1173 = vmul.f32 %v980, 0.3
      %v1174 = vmul.f32 %v981, 0.3
      %v1175 = vmul.f32 %v982, 0.3
      %v1176 = vmul.f32 %v983, 0.3
      %s1177 = scalar_lea.vmem %s188, 256
      %v1178 = vld [vmem:[%s1177] sm:$0xf]
      %v1179 = vld [vmem:[%s1177 + $0x4] sm:$0xf]
      %v1180 = vld [vmem:[%s1177 + $0x8] sm:$0xf]
      %v1181 = vld [vmem:[%s1177 + $0xc] sm:$0xf]
      %v1182 = vld [vmem:[%s1177 + $0x10] sm:$0xf]
      %v1183 = vld [vmem:[%s1177 + $0x14] sm:$0xf]
      %v1184 = vld [vmem:[%s1177 + $0x18] sm:$0xf]
      %v1185 = vld [vmem:[%s1177 + $0x1c] sm:$0xf]
      %v1186 = vld [vmem:[%s1177 + $0x20] sm:$0xf]
      %v1187 = vld [vmem:[%s1177 + $0x24] sm:$0xf]
      %v1188 = vld [vmem:[%s1177 + $0x28] sm:$0xf]
      %v1189 = vld [vmem:[%s1177 + $0x2c] sm:$0xf]
      %v1190 = vld [vmem:[%s1177 + $0x30] sm:$0xf]
      %v1191 = vld [vmem:[%s1177 + $0x34] sm:$0xf]
      %v1192 = vld [vmem:[%s1177 + $0x38] sm:$0xf]
      %v1193 = vld [vmem:[%s1177 + $0x3c] sm:$0xf]
      %v1194 = vld [vmem:[%s1177 + $0x40] sm:$0xf]
      %v1195 = vld [vmem:[%s1177 + $0x44] sm:$0xf]
      %v1196 = vld [vmem:[%s1177 + $0x48] sm:$0xf]
      %v1197 = vld [vmem:[%s1177 + $0x4c] sm:$0xf]
      %v1198 = vld [vmem:[%s1177 + $0x50] sm:$0xf]
      %v1199 = vld [vmem:[%s1177 + $0x54] sm:$0xf]
      %v1200 = vld [vmem:[%s1177 + $0x58] sm:$0xf]
      %v1201 = vld [vmem:[%s1177 + $0x5c] sm:$0xf]
      %v1202 = vld [vmem:[%s1177 + $0x60] sm:$0xf]
      %v1203 = vld [vmem:[%s1177 + $0x64] sm:$0xf]
      %v1204 = vld [vmem:[%s1177 + $0x68] sm:$0xf]
      %v1205 = vld [vmem:[%s1177 + $0x6c] sm:$0xf]
      %v1206 = vld [vmem:[%s1177 + $0x70] sm:$0xf]
      %v1207 = vld [vmem:[%s1177 + $0x74] sm:$0xf]
      %v1208 = vld [vmem:[%s1177 + $0x78] sm:$0xf]
      %v1209 = vld [vmem:[%s1177 + $0x7c] sm:$0xf]
      %v1210 = vunpack.c.l.bf16 %v1178
      %v1211 = vunpack.c.l.bf16 %v1179
      %v1212 = vunpack.c.l.bf16 %v1180
      %v1213 = vunpack.c.l.bf16 %v1181
      %v1214 = vunpack.c.l.bf16 %v1182
      %v1215 = vunpack.c.l.bf16 %v1183
      %v1216 = vunpack.c.l.bf16 %v1184
      %v1217 = vunpack.c.l.bf16 %v1185
      %v1218 = vunpack.c.l.bf16 %v1186
      %v1219 = vunpack.c.l.bf16 %v1187
      %v1220 = vunpack.c.l.bf16 %v1188
      %v1221 = vunpack.c.l.bf16 %v1189
      %v1222 = vunpack.c.l.bf16 %v1190
      %v1223 = vunpack.c.l.bf16 %v1191
      %v1224 = vunpack.c.l.bf16 %v1192
      %v1225 = vunpack.c.l.bf16 %v1193
      %v1226 = vunpack.c.l.bf16 %v1194
      %v1227 = vunpack.c.l.bf16 %v1195
      %v1228 = vunpack.c.l.bf16 %v1196
      %v1229 = vunpack.c.l.bf16 %v1197
      %v1230 = vunpack.c.l.bf16 %v1198
      %v1231 = vunpack.c.l.bf16 %v1199
      %v1232 = vunpack.c.l.bf16 %v1200
      %v1233 = vunpack.c.l.bf16 %v1201
      %v1234 = vunpack.c.l.bf16 %v1202
      %v1235 = vunpack.c.l.bf16 %v1203
      %v1236 = vunpack.c.l.bf16 %v1204
      %v1237 = vunpack.c.l.bf16 %v1205
      %v1238 = vunpack.c.l.bf16 %v1206
      %v1239 = vunpack.c.l.bf16 %v1207
      %v1240 = vunpack.c.l.bf16 %v1208
      %v1241 = vunpack.c.l.bf16 %v1209
      %s1242 = scalar_lea.vmem %s179, 2
      %v1243 = vld [vmem:[%s1242] sm:$0x1]
      %v1245 = vlaneseq
      %v1246 = vshrl.u32 %v1245, 7
      %v1247 = vsub.s32 0, %v1246
      %v1248 = vrot.slane %v1243, %v1247
      %v1250 = vmul.f32 %v1210, %v1248
      %v1251 = vmul.f32 %v1211, %v1248
      %v1252 = vmul.f32 %v1212, %v1248
      %v1253 = vmul.f32 %v1213, %v1248
      %v1254 = vmul.f32 %v1214, %v1248
      %v1255 = vmul.f32 %v1215, %v1248
      %v1256 = vmul.f32 %v1216, %v1248
      %v1257 = vmul.f32 %v1217, %v1248
      %v1258 = vmul.f32 %v1218, %v1248
      %v1259 = vmul.f32 %v1219, %v1248
      %v1260 = vmul.f32 %v1220, %v1248
      %v1261 = vmul.f32 %v1221, %v1248
      %v1262 = vmul.f32 %v1222, %v1248
      %v1263 = vmul.f32 %v1223, %v1248
      %v1264 = vmul.f32 %v1224, %v1248
      %v1265 = vmul.f32 %v1225, %v1248
      %v1266 = vmul.f32 %v1226, %v1248
      %v1267 = vmul.f32 %v1227, %v1248
      %v1268 = vmul.f32 %v1228, %v1248
      %v1269 = vmul.f32 %v1229, %v1248
      %v1270 = vmul.f32 %v1230, %v1248
      %v1271 = vmul.f32 %v1231, %v1248
      %v1272 = vmul.f32 %v1232, %v1248
      %v1273 = vmul.f32 %v1233, %v1248
      %v1274 = vmul.f32 %v1234, %v1248
      %v1275 = vmul.f32 %v1235, %v1248
      %v1276 = vmul.f32 %v1236, %v1248
      %v1277 = vmul.f32 %v1237, %v1248
      %v1278 = vmul.f32 %v1238, %v1248
      %v1279 = vmul.f32 %v1239, %v1248
      %v1280 = vmul.f32 %v1240, %v1248
      %v1281 = vmul.f32 %v1241, %v1248
      %v1282 = vadd.f32 %v1145, %v1250
      %v1283 = vadd.f32 %v1146, %v1251
      %v1284 = vadd.f32 %v1147, %v1252
      %v1285 = vadd.f32 %v1148, %v1253
      %v1286 = vadd.f32 %v1149, %v1254
      %v1287 = vadd.f32 %v1150, %v1255
      %v1288 = vadd.f32 %v1151, %v1256
      %v1289 = vadd.f32 %v1152, %v1257
      %v1290 = vadd.f32 %v1153, %v1258
      %v1291 = vadd.f32 %v1154, %v1259
      %v1292 = vadd.f32 %v1155, %v1260
      %v1293 = vadd.f32 %v1156, %v1261
      %v1294 = vadd.f32 %v1157, %v1262
      %v1295 = vadd.f32 %v1158, %v1263
      %v1296 = vadd.f32 %v1159, %v1264
      %v1297 = vadd.f32 %v1160, %v1265
      %v1298 = vadd.f32 %v1161, %v1266
      %v1299 = vadd.f32 %v1162, %v1267
      %v1300 = vadd.f32 %v1163, %v1268
      %v1301 = vadd.f32 %v1164, %v1269
      %v1302 = vadd.f32 %v1165, %v1270
      %v1303 = vadd.f32 %v1166, %v1271
      %v1304 = vadd.f32 %v1167, %v1272
      %v1305 = vadd.f32 %v1168, %v1273
      %v1306 = vadd.f32 %v1169, %v1274
      %v1307 = vadd.f32 %v1170, %v1275
      %v1308 = vadd.f32 %v1171, %v1276
      %v1309 = vadd.f32 %v1172, %v1277
      %v1310 = vadd.f32 %v1173, %v1278
      %v1311 = vadd.f32 %v1174, %v1279
      %v1312 = vadd.f32 %v1175, %v1280
      %v1313 = vadd.f32 %v1176, %v1281
      %vm1314 = vcmp.ge.f32.partialorder %v1282, 0.3
      %vm1315 = vcmp.ge.f32.partialorder %v1283, 0.3
      %vm1316 = vcmp.ge.f32.partialorder %v1284, 0.3
      %vm1317 = vcmp.ge.f32.partialorder %v1285, 0.3
      %vm1318 = vcmp.ge.f32.partialorder %v1286, 0.3
      %vm1319 = vcmp.ge.f32.partialorder %v1287, 0.3
      %vm1320 = vcmp.ge.f32.partialorder %v1288, 0.3
      %vm1321 = vcmp.ge.f32.partialorder %v1289, 0.3
      %vm1322 = vcmp.ge.f32.partialorder %v1290, 0.3
      %vm1323 = vcmp.ge.f32.partialorder %v1291, 0.3
      %vm1324 = vcmp.ge.f32.partialorder %v1292, 0.3
      %vm1325 = vcmp.ge.f32.partialorder %v1293, 0.3
      %vm1326 = vcmp.ge.f32.partialorder %v1294, 0.3
      %vm1327 = vcmp.ge.f32.partialorder %v1295, 0.3
      %vm1328 = vcmp.ge.f32.partialorder %v1296, 0.3
      %vm1329 = vcmp.ge.f32.partialorder %v1297, 0.3
      %vm1330 = vcmp.ge.f32.partialorder %v1298, 0.3
      %vm1331 = vcmp.ge.f32.partialorder %v1299, 0.3
      %vm1332 = vcmp.ge.f32.partialorder %v1300, 0.3
      %vm1333 = vcmp.ge.f32.partialorder %v1301, 0.3
      %vm1334 = vcmp.ge.f32.partialorder %v1302, 0.3
      %vm1335 = vcmp.ge.f32.partialorder %v1303, 0.3
      %vm1336 = vcmp.ge.f32.partialorder %v1304, 0.3
      %vm1337 = vcmp.ge.f32.partialorder %v1305, 0.3
      %vm1338 = vcmp.ge.f32.partialorder %v1306, 0.3
      %vm1339 = vcmp.ge.f32.partialorder %v1307, 0.3
      %vm1340 = vcmp.ge.f32.partialorder %v1308, 0.3
      %vm1341 = vcmp.ge.f32.partialorder %v1309, 0.3
      %vm1342 = vcmp.ge.f32.partialorder %v1310, 0.3
      %vm1343 = vcmp.ge.f32.partialorder %v1311, 0.3
      %vm1344 = vcmp.ge.f32.partialorder %v1312, 0.3
      %vm1345 = vcmp.ge.f32.partialorder %v1313, 0.3
      %v1346 = vsel %vm1314, 1, 0
      %v1347 = vsel %vm1315, 1, 0
      %v1348 = vsel %vm1316, 1, 0
      %v1349 = vsel %vm1317, 1, 0
      %v1350 = vsel %vm1318, 1, 0
      %v1351 = vsel %vm1319, 1, 0
      %v1352 = vsel %vm1320, 1, 0
      %v1353 = vsel %vm1321, 1, 0
      %v1354 = vsel %vm1322, 1, 0
      %v1355 = vsel %vm1323, 1, 0
      %v1356 = vsel %vm1324, 1, 0
      %v1357 = vsel %vm1325, 1, 0
      %v1358 = vsel %vm1326, 1, 0
      %v1359 = vsel %vm1327, 1, 0
      %v1360 = vsel %vm1328, 1, 0
      %v1361 = vsel %vm1329, 1, 0
      %v1362 = vsel %vm1330, 1, 0
      %v1363 = vsel %vm1331, 1, 0
      %v1364 = vsel %vm1332, 1, 0
      %v1365 = vsel %vm1333, 1, 0
      %v1366 = vsel %vm1334, 1, 0
      %v1367 = vsel %vm1335, 1, 0
      %v1368 = vsel %vm1336, 1, 0
      %v1369 = vsel %vm1337, 1, 0
      %v1370 = vsel %vm1338, 1, 0
      %v1371 = vsel %vm1339, 1, 0
      %v1372 = vsel %vm1340, 1, 0
      %v1373 = vsel %vm1341, 1, 0
      %v1374 = vsel %vm1342, 1, 0
      %v1375 = vsel %vm1343, 1, 0
      %v1376 = vsel %vm1344, 1, 0
      %v1377 = vsel %vm1345, 1, 0
      %v1378 = vcvt.s32.f32 %v1346
      %v1379 = vcvt.s32.f32 %v1347
      %v1380 = vcvt.s32.f32 %v1348
      %v1381 = vcvt.s32.f32 %v1349
      %v1382 = vcvt.s32.f32 %v1350
      %v1383 = vcvt.s32.f32 %v1351
      %v1384 = vcvt.s32.f32 %v1352
      %v1385 = vcvt.s32.f32 %v1353
      %v1386 = vcvt.s32.f32 %v1354
      %v1387 = vcvt.s32.f32 %v1355
      %v1388 = vcvt.s32.f32 %v1356
      %v1389 = vcvt.s32.f32 %v1357
      %v1390 = vcvt.s32.f32 %v1358
      %v1391 = vcvt.s32.f32 %v1359
      %v1392 = vcvt.s32.f32 %v1360
      %v1393 = vcvt.s32.f32 %v1361
      %v1394 = vcvt.s32.f32 %v1362
      %v1395 = vcvt.s32.f32 %v1363
      %v1396 = vcvt.s32.f32 %v1364
      %v1397 = vcvt.s32.f32 %v1365
      %v1398 = vcvt.s32.f32 %v1366
      %v1399 = vcvt.s32.f32 %v1367
      %v1400 = vcvt.s32.f32 %v1368
      %v1401 = vcvt.s32.f32 %v1369
      %v1402 = vcvt.s32.f32 %v1370
      %v1403 = vcvt.s32.f32 %v1371
      %v1404 = vcvt.s32.f32 %v1372
      %v1405 = vcvt.s32.f32 %v1373
      %v1406 = vcvt.s32.f32 %v1374
      %v1407 = vcvt.s32.f32 %v1375
      %v1408 = vcvt.s32.f32 %v1376
      %v1409 = vcvt.s32.f32 %v1377
      %vm1410 = vcmp.gt.f32.partialorder %v1378, 0.0
      %vm1411 = vcmp.gt.f32.partialorder %v1379, 0.0
      %vm1412 = vcmp.gt.f32.partialorder %v1380, 0.0
      %vm1413 = vcmp.gt.f32.partialorder %v1381, 0.0
      %vm1414 = vcmp.gt.f32.partialorder %v1382, 0.0
      %vm1415 = vcmp.gt.f32.partialorder %v1383, 0.0
      %vm1416 = vcmp.gt.f32.partialorder %v1384, 0.0
      %vm1417 = vcmp.gt.f32.partialorder %v1385, 0.0
      %vm1418 = vcmp.gt.f32.partialorder %v1386, 0.0
      %vm1419 = vcmp.gt.f32.partialorder %v1387, 0.0
      %vm1420 = vcmp.gt.f32.partialorder %v1388, 0.0
      %vm1421 = vcmp.gt.f32.partialorder %v1389, 0.0
      %vm1422 = vcmp.gt.f32.partialorder %v1390, 0.0
      %vm1423 = vcmp.gt.f32.partialorder %v1391, 0.0
      %vm1424 = vcmp.gt.f32.partialorder %v1392, 0.0
      %vm1425 = vcmp.gt.f32.partialorder %v1393, 0.0
      %vm1426 = vcmp.gt.f32.partialorder %v1394, 0.0
      %vm1427 = vcmp.gt.f32.partialorder %v1395, 0.0
      %vm1428 = vcmp.gt.f32.partialorder %v1396, 0.0
      %vm1429 = vcmp.gt.f32.partialorder %v1397, 0.0
      %vm1430 = vcmp.gt.f32.partialorder %v1398, 0.0
      %vm1431 = vcmp.gt.f32.partialorder %v1399, 0.0
      %vm1432 = vcmp.gt.f32.partialorder %v1400, 0.0
      %vm1433 = vcmp.gt.f32.partialorder %v1401, 0.0
      %vm1434 = vcmp.gt.f32.partialorder %v1402, 0.0
      %vm1435 = vcmp.gt.f32.partialorder %v1403, 0.0
      %vm1436 = vcmp.gt.f32.partialorder %v1404, 0.0
      %vm1437 = vcmp.gt.f32.partialorder %v1405, 0.0
      %vm1438 = vcmp.gt.f32.partialorder %v1406, 0.0
      %vm1439 = vcmp.gt.f32.partialorder %v1407, 0.0
      %vm1440 = vcmp.gt.f32.partialorder %v1408, 0.0
      %vm1441 = vcmp.gt.f32.partialorder %v1409, 0.0
      %v1442 = vsel %vm1410, 0.0, %v1282
      %v1443 = vsel %vm1411, 0.0, %v1283
      %v1444 = vsel %vm1412, 0.0, %v1284
      %v1445 = vsel %vm1413, 0.0, %v1285
      %v1446 = vsel %vm1414, 0.0, %v1286
      %v1447 = vsel %vm1415, 0.0, %v1287
      %v1448 = vsel %vm1416, 0.0, %v1288
      %v1449 = vsel %vm1417, 0.0, %v1289
      %v1450 = vsel %vm1418, 0.0, %v1290
      %v1451 = vsel %vm1419, 0.0, %v1291
      %v1452 = vsel %vm1420, 0.0, %v1292
      %v1453 = vsel %vm1421, 0.0, %v1293
      %v1454 = vsel %vm1422, 0.0, %v1294
      %v1455 = vsel %vm1423, 0.0, %v1295
      %v1456 = vsel %vm1424, 0.0, %v1296
      %v1457 = vsel %vm1425, 0.0, %v1297
      %v1458 = vsel %vm1426, 0.0, %v1298
      %v1459 = vsel %vm1427, 0.0, %v1299
      %v1460 = vsel %vm1428, 0.0, %v1300
      %v1461 = vsel %vm1429, 0.0, %v1301
      %v1462 = vsel %vm1430, 0.0, %v1302
      %v1463 = vsel %vm1431, 0.0, %v1303
      %v1464 = vsel %vm1432, 0.0, %v1304
      %v1465 = vsel %vm1433, 0.0, %v1305
      %v1466 = vsel %vm1434, 0.0, %v1306
      %v1467 = vsel %vm1435, 0.0, %v1307
      %v1468 = vsel %vm1436, 0.0, %v1308
      %v1469 = vsel %vm1437, 0.0, %v1309
      %v1470 = vsel %vm1438, 0.0, %v1310
      %v1471 = vsel %vm1439, 0.0, %v1311
      %v1472 = vsel %vm1440, 0.0, %v1312
      %v1473 = vsel %vm1441, 0.0, %v1313
      %v1474 = vpack.c.bf16 %v1379, %v1378
      %v1475 = vpack.c.bf16 %v1381, %v1380
      %v1476 = vpack.c.bf16 %v1383, %v1382
      %v1477 = vpack.c.bf16 %v1385, %v1384
      %v1478 = vpack.c.bf16 %v1387, %v1386
      %v1479 = vpack.c.bf16 %v1389, %v1388
      %v1480 = vpack.c.bf16 %v1391, %v1390
      %v1481 = vpack.c.bf16 %v1393, %v1392
      %v1482 = vpack.c.bf16 %v1395, %v1394
      %v1483 = vpack.c.bf16 %v1397, %v1396
      %v1484 = vpack.c.bf16 %v1399, %v1398
      %v1485 = vpack.c.bf16 %v1401, %v1400
      %v1486 = vpack.c.bf16 %v1403, %v1402
      %v1487 = vpack.c.bf16 %v1405, %v1404
      %v1488 = vpack.c.bf16 %v1407, %v1406
      %v1489 = vpack.c.bf16 %v1409, %v1408
      %v1506 = vunpack.c.l.b16 %v1474
      %v1507 = vunpack.c.h.b16 %v1474
      %v1508 = vunpack.c.l.b16 %v1475
      %v1509 = vunpack.c.h.b16 %v1475
      %v1510 = vunpack.c.l.b16 %v1476
      %v1511 = vunpack.c.h.b16 %v1476
      %v1512 = vunpack.c.l.b16 %v1477
      %v1513 = vunpack.c.h.b16 %v1477
      %v1514 = vunpack.c.l.b16 %v1478
      %v1515 = vunpack.c.h.b16 %v1478
      %v1516 = vunpack.c.l.b16 %v1479
      %v1517 = vunpack.c.h.b16 %v1479
      %v1518 = vunpack.c.l.b16 %v1480
      %v1519 = vunpack.c.h.b16 %v1480
      %v1520 = vunpack.c.l.b16 %v1481
      %v1521 = vunpack.c.h.b16 %v1481
      %v1522 = vunpack.c.l.b16 %v1482
      %v1523 = vunpack.c.h.b16 %v1482
      %v1524 = vunpack.c.l.b16 %v1483
      %v1525 = vunpack.c.h.b16 %v1483
      %v1526 = vunpack.c.l.b16 %v1484
      %v1527 = vunpack.c.h.b16 %v1484
      %v1528 = vunpack.c.l.b16 %v1485
      %v1529 = vunpack.c.h.b16 %v1485
      %v1530 = vunpack.c.l.b16 %v1486
      %v1531 = vunpack.c.h.b16 %v1486
      %v1532 = vunpack.c.l.b16 %v1487
      %v1533 = vunpack.c.h.b16 %v1487
      %v1534 = vunpack.c.l.b16 %v1488
      %v1535 = vunpack.c.h.b16 %v1488
      %v1536 = vunpack.c.l.b16 %v1489
      %v1537 = vunpack.c.h.b16 %v1489
      %v1538 = vpack.c.b16 %v1506, %v1506
      %v1539 = vpack.c.b16 %v1507, %v1507
      %v1540 = vpack.c.b16 %v1508, %v1508
      %v1541 = vpack.c.b16 %v1509, %v1509
      %v1542 = vpack.c.b16 %v1510, %v1510
      %v1543 = vpack.c.b16 %v1511, %v1511
      %v1544 = vpack.c.b16 %v1512, %v1512
      %v1545 = vpack.c.b16 %v1513, %v1513
      %v1546 = vpack.c.b16 %v1514, %v1514
      %v1547 = vpack.c.b16 %v1515, %v1515
      %v1548 = vpack.c.b16 %v1516, %v1516
      %v1549 = vpack.c.b16 %v1517, %v1517
      %v1550 = vpack.c.b16 %v1518, %v1518
      %v1551 = vpack.c.b16 %v1519, %v1519
      %v1552 = vpack.c.b16 %v1520, %v1520
      %v1553 = vpack.c.b16 %v1521, %v1521
      %v1554 = vpack.c.b16 %v1522, %v1522
      %v1555 = vpack.c.b16 %v1523, %v1523
      %v1556 = vpack.c.b16 %v1524, %v1524
      %v1557 = vpack.c.b16 %v1525, %v1525
      %v1558 = vpack.c.b16 %v1526, %v1526
      %v1559 = vpack.c.b16 %v1527, %v1527
      %v1560 = vpack.c.b16 %v1528, %v1528
      %v1561 = vpack.c.b16 %v1529, %v1529
      %v1562 = vpack.c.b16 %v1530, %v1530
      %v1563 = vpack.c.b16 %v1531, %v1531
      %v1564 = vpack.c.b16 %v1532, %v1532
      %v1565 = vpack.c.b16 %v1533, %v1533
      %v1566 = vpack.c.b16 %v1534, %v1534
      %v1567 = vpack.c.b16 %v1535, %v1535
      %v1568 = vpack.c.b16 %v1536, %v1536
      %v1569 = vpack.c.b16 %v1537, %v1537
      %s1602 = scalar_lea.vmem %s198, 256
      %1603 = vst [vmem:[%s1602] sm:$0xf] %v1538
      %1604 = vst [vmem:[%s1602 + $0x4] sm:$0xf] %v1539
      %1605 = vst [vmem:[%s1602 + $0x8] sm:$0xf] %v1540
      %1606 = vst [vmem:[%s1602 + $0xc] sm:$0xf] %v1541
      %1607 = vst [vmem:[%s1602 + $0x10] sm:$0xf] %v1542
      %1608 = vst [vmem:[%s1602 + $0x14] sm:$0xf] %v1543
      %1609 = vst [vmem:[%s1602 + $0x18] sm:$0xf] %v1544
      %1610 = vst [vmem:[%s1602 + $0x1c] sm:$0xf] %v1545
      %1611 = vst [vmem:[%s1602 + $0x20] sm:$0xf] %v1546
      %1612 = vst [vmem:[%s1602 + $0x24] sm:$0xf] %v1547
      %1613 = vst [vmem:[%s1602 + $0x28] sm:$0xf] %v1548
      %1614 = vst [vmem:[%s1602 + $0x2c] sm:$0xf] %v1549
      %1615 = vst [vmem:[%s1602 + $0x30] sm:$0xf] %v1550
      %1616 = vst [vmem:[%s1602 + $0x34] sm:$0xf] %v1551
      %1617 = vst [vmem:[%s1602 + $0x38] sm:$0xf] %v1552
      %1618 = vst [vmem:[%s1602 + $0x3c] sm:$0xf] %v1553
      %1619 = vst [vmem:[%s1602 + $0x40] sm:$0xf] %v1554
      %1620 = vst [vmem:[%s1602 + $0x44] sm:$0xf] %v1555
      %1621 = vst [vmem:[%s1602 + $0x48] sm:$0xf] %v1556
      %1622 = vst [vmem:[%s1602 + $0x4c] sm:$0xf] %v1557
      %1623 = vst [vmem:[%s1602 + $0x50] sm:$0xf] %v1558
      %1624 = vst [vmem:[%s1602 + $0x54] sm:$0xf] %v1559
      %1625 = vst [vmem:[%s1602 + $0x58] sm:$0xf] %v1560
      %1626 = vst [vmem:[%s1602 + $0x5c] sm:$0xf] %v1561
      %1627 = vst [vmem:[%s1602 + $0x60] sm:$0xf] %v1562
      %1628 = vst [vmem:[%s1602 + $0x64] sm:$0xf] %v1563
      %1629 = vst [vmem:[%s1602 + $0x68] sm:$0xf] %v1564
      %1630 = vst [vmem:[%s1602 + $0x6c] sm:$0xf] %v1565
      %1631 = vst [vmem:[%s1602 + $0x70] sm:$0xf] %v1566
      %1632 = vst [vmem:[%s1602 + $0x74] sm:$0xf] %v1567
      %1633 = vst [vmem:[%s1602 + $0x78] sm:$0xf] %v1568
      %1634 = vst [vmem:[%s1602 + $0x7c] sm:$0xf] %v1569
      %v1635 = vmul.f32 %v1442, 0.3
      %v1636 = vmul.f32 %v1443, 0.3
      %v1637 = vmul.f32 %v1444, 0.3
      %v1638 = vmul.f32 %v1445, 0.3
      %v1639 = vmul.f32 %v1446, 0.3
      %v1640 = vmul.f32 %v1447, 0.3
      %v1641 = vmul.f32 %v1448, 0.3
      %v1642 = vmul.f32 %v1449, 0.3
      %v1643 = vmul.f32 %v1450, 0.3
      %v1644 = vmul.f32 %v1451, 0.3
      %v1645 = vmul.f32 %v1452, 0.3
      %v1646 = vmul.f32 %v1453, 0.3
      %v1647 = vmul.f32 %v1454, 0.3
      %v1648 = vmul.f32 %v1455, 0.3
      %v1649 = vmul.f32 %v1456, 0.3
      %v1650 = vmul.f32 %v1457, 0.3
      %v1651 = vmul.f32 %v1458, 0.3
      %v1652 = vmul.f32 %v1459, 0.3
      %v1653 = vmul.f32 %v1460, 0.3
      %v1654 = vmul.f32 %v1461, 0.3
      %v1655 = vmul.f32 %v1462, 0.3
      %v1656 = vmul.f32 %v1463, 0.3
      %v1657 = vmul.f32 %v1464, 0.3
      %v1658 = vmul.f32 %v1465, 0.3
      %v1659 = vmul.f32 %v1466, 0.3
      %v1660 = vmul.f32 %v1467, 0.3
      %v1661 = vmul.f32 %v1468, 0.3
      %v1662 = vmul.f32 %v1469, 0.3
      %v1663 = vmul.f32 %v1470, 0.3
      %v1664 = vmul.f32 %v1471, 0.3
      %v1665 = vmul.f32 %v1472, 0.3
      %v1666 = vmul.f32 %v1473, 0.3
      %s1667 = scalar_lea.vmem %s188, 384
      %v1668 = vld [vmem:[%s1667] sm:$0xf]
      %v1669 = vld [vmem:[%s1667 + $0x4] sm:$0xf]
      %v1670 = vld [vmem:[%s1667 + $0x8] sm:$0xf]
      %v1671 = vld [vmem:[%s1667 + $0xc] sm:$0xf]
      %v1672 = vld [vmem:[%s1667 + $0x10] sm:$0xf]
      %v1673 = vld [vmem:[%s1667 + $0x14] sm:$0xf]
      %v1674 = vld [vmem:[%s1667 + $0x18] sm:$0xf]
      %v1675 = vld [vmem:[%s1667 + $0x1c] sm:$0xf]
      %v1676 = vld [vmem:[%s1667 + $0x20] sm:$0xf]
      %v1677 = vld [vmem:[%s1667 + $0x24] sm:$0xf]
      %v1678 = vld [vmem:[%s1667 + $0x28] sm:$0xf]
      %v1679 = vld [vmem:[%s1667 + $0x2c] sm:$0xf]
      %v1680 = vld [vmem:[%s1667 + $0x30] sm:$0xf]
      %v1681 = vld [vmem:[%s1667 + $0x34] sm:$0xf]
      %v1682 = vld [vmem:[%s1667 + $0x38] sm:$0xf]
      %v1683 = vld [vmem:[%s1667 + $0x3c] sm:$0xf]
      %v1684 = vld [vmem:[%s1667 + $0x40] sm:$0xf]
      %v1685 = vld [vmem:[%s1667 + $0x44] sm:$0xf]
      %v1686 = vld [vmem:[%s1667 + $0x48] sm:$0xf]
      %v1687 = vld [vmem:[%s1667 + $0x4c] sm:$0xf]
      %v1688 = vld [vmem:[%s1667 + $0x50] sm:$0xf]
      %v1689 = vld [vmem:[%s1667 + $0x54] sm:$0xf]
      %v1690 = vld [vmem:[%s1667 + $0x58] sm:$0xf]
      %v1691 = vld [vmem:[%s1667 + $0x5c] sm:$0xf]
      %v1692 = vld [vmem:[%s1667 + $0x60] sm:$0xf]
      %v1693 = vld [vmem:[%s1667 + $0x64] sm:$0xf]
      %v1694 = vld [vmem:[%s1667 + $0x68] sm:$0xf]
      %v1695 = vld [vmem:[%s1667 + $0x6c] sm:$0xf]
      %v1696 = vld [vmem:[%s1667 + $0x70] sm:$0xf]
      %v1697 = vld [vmem:[%s1667 + $0x74] sm:$0xf]
      %v1698 = vld [vmem:[%s1667 + $0x78] sm:$0xf]
      %v1699 = vld [vmem:[%s1667 + $0x7c] sm:$0xf]
      %v1700 = vunpack.c.l.bf16 %v1668
      %v1701 = vunpack.c.l.bf16 %v1669
      %v1702 = vunpack.c.l.bf16 %v1670
      %v1703 = vunpack.c.l.bf16 %v1671
      %v1704 = vunpack.c.l.bf16 %v1672
      %v1705 = vunpack.c.l.bf16 %v1673
      %v1706 = vunpack.c.l.bf16 %v1674
      %v1707 = vunpack.c.l.bf16 %v1675
      %v1708 = vunpack.c.l.bf16 %v1676
      %v1709 = vunpack.c.l.bf16 %v1677
      %v1710 = vunpack.c.l.bf16 %v1678
      %v1711 = vunpack.c.l.bf16 %v1679
      %v1712 = vunpack.c.l.bf16 %v1680
      %v1713 = vunpack.c.l.bf16 %v1681
      %v1714 = vunpack.c.l.bf16 %v1682
      %v1715 = vunpack.c.l.bf16 %v1683
      %v1716 = vunpack.c.l.bf16 %v1684
      %v1717 = vunpack.c.l.bf16 %v1685
      %v1718 = vunpack.c.l.bf16 %v1686
      %v1719 = vunpack.c.l.bf16 %v1687
      %v1720 = vunpack.c.l.bf16 %v1688
      %v1721 = vunpack.c.l.bf16 %v1689
      %v1722 = vunpack.c.l.bf16 %v1690
      %v1723 = vunpack.c.l.bf16 %v1691
      %v1724 = vunpack.c.l.bf16 %v1692
      %v1725 = vunpack.c.l.bf16 %v1693
      %v1726 = vunpack.c.l.bf16 %v1694
      %v1727 = vunpack.c.l.bf16 %v1695
      %v1728 = vunpack.c.l.bf16 %v1696
      %v1729 = vunpack.c.l.bf16 %v1697
      %v1730 = vunpack.c.l.bf16 %v1698
      %v1731 = vunpack.c.l.bf16 %v1699
      %s1732 = scalar_lea.vmem %s179, 3
      %v1733 = vld [vmem:[%s1732] sm:$0x1]
      %v1735 = vlaneseq
      %v1736 = vshrl.u32 %v1735, 7
      %v1737 = vsub.s32 0, %v1736
      %v1738 = vrot.slane %v1733, %v1737
      %v1740 = vmul.f32 %v1700, %v1738
      %v1741 = vmul.f32 %v1701, %v1738
      %v1742 = vmul.f32 %v1702, %v1738
      %v1743 = vmul.f32 %v1703, %v1738
      %v1744 = vmul.f32 %v1704, %v1738
      %v1745 = vmul.f32 %v1705, %v1738
      %v1746 = vmul.f32 %v1706, %v1738
      %v1747 = vmul.f32 %v1707, %v1738
      %v1748 = vmul.f32 %v1708, %v1738
      %v1749 = vmul.f32 %v1709, %v1738
      %v1750 = vmul.f32 %v1710, %v1738
      %v1751 = vmul.f32 %v1711, %v1738
      %v1752 = vmul.f32 %v1712, %v1738
      %v1753 = vmul.f32 %v1713, %v1738
      %v1754 = vmul.f32 %v1714, %v1738
      %v1755 = vmul.f32 %v1715, %v1738
      %v1756 = vmul.f32 %v1716, %v1738
      %v1757 = vmul.f32 %v1717, %v1738
      %v1758 = vmul.f32 %v1718, %v1738
      %v1759 = vmul.f32 %v1719, %v1738
      %v1760 = vmul.f32 %v1720, %v1738
      %v1761 = vmul.f32 %v1721, %v1738
      %v1762 = vmul.f32 %v1722, %v1738
      %v1763 = vmul.f32 %v1723, %v1738
      %v1764 = vmul.f32 %v1724, %v1738
      %v1765 = vmul.f32 %v1725, %v1738
      %v1766 = vmul.f32 %v1726, %v1738
      %v1767 = vmul.f32 %v1727, %v1738
      %v1768 = vmul.f32 %v1728, %v1738
      %v1769 = vmul.f32 %v1729, %v1738
      %v1770 = vmul.f32 %v1730, %v1738
      %v1771 = vmul.f32 %v1731, %v1738
      %v1772 = vadd.f32 %v1635, %v1740
      %v1773 = vadd.f32 %v1636, %v1741
      %v1774 = vadd.f32 %v1637, %v1742
      %v1775 = vadd.f32 %v1638, %v1743
      %v1776 = vadd.f32 %v1639, %v1744
      %v1777 = vadd.f32 %v1640, %v1745
      %v1778 = vadd.f32 %v1641, %v1746
      %v1779 = vadd.f32 %v1642, %v1747
      %v1780 = vadd.f32 %v1643, %v1748
      %v1781 = vadd.f32 %v1644, %v1749
      %v1782 = vadd.f32 %v1645, %v1750
      %v1783 = vadd.f32 %v1646, %v1751
      %v1784 = vadd.f32 %v1647, %v1752
      %v1785 = vadd.f32 %v1648, %v1753
      %v1786 = vadd.f32 %v1649, %v1754
      %v1787 = vadd.f32 %v1650, %v1755
      %v1788 = vadd.f32 %v1651, %v1756
      %v1789 = vadd.f32 %v1652, %v1757
      %v1790 = vadd.f32 %v1653, %v1758
      %v1791 = vadd.f32 %v1654, %v1759
      %v1792 = vadd.f32 %v1655, %v1760
      %v1793 = vadd.f32 %v1656, %v1761
      %v1794 = vadd.f32 %v1657, %v1762
      %v1795 = vadd.f32 %v1658, %v1763
      %v1796 = vadd.f32 %v1659, %v1764
      %v1797 = vadd.f32 %v1660, %v1765
      %v1798 = vadd.f32 %v1661, %v1766
      %v1799 = vadd.f32 %v1662, %v1767
      %v1800 = vadd.f32 %v1663, %v1768
      %v1801 = vadd.f32 %v1664, %v1769
      %v1802 = vadd.f32 %v1665, %v1770
      %v1803 = vadd.f32 %v1666, %v1771
      %vm1804 = vcmp.ge.f32.partialorder %v1772, 0.3
      %vm1805 = vcmp.ge.f32.partialorder %v1773, 0.3
      %vm1806 = vcmp.ge.f32.partialorder %v1774, 0.3
      %vm1807 = vcmp.ge.f32.partialorder %v1775, 0.3
      %vm1808 = vcmp.ge.f32.partialorder %v1776, 0.3
      %vm1809 = vcmp.ge.f32.partialorder %v1777, 0.3
      %vm1810 = vcmp.ge.f32.partialorder %v1778, 0.3
      %vm1811 = vcmp.ge.f32.partialorder %v1779, 0.3
      %vm1812 = vcmp.ge.f32.partialorder %v1780, 0.3
      %vm1813 = vcmp.ge.f32.partialorder %v1781, 0.3
      %vm1814 = vcmp.ge.f32.partialorder %v1782, 0.3
      %vm1815 = vcmp.ge.f32.partialorder %v1783, 0.3
      %vm1816 = vcmp.ge.f32.partialorder %v1784, 0.3
      %vm1817 = vcmp.ge.f32.partialorder %v1785, 0.3
      %vm1818 = vcmp.ge.f32.partialorder %v1786, 0.3
      %vm1819 = vcmp.ge.f32.partialorder %v1787, 0.3
      %vm1820 = vcmp.ge.f32.partialorder %v1788, 0.3
      %vm1821 = vcmp.ge.f32.partialorder %v1789, 0.3
      %vm1822 = vcmp.ge.f32.partialorder %v1790, 0.3
      %vm1823 = vcmp.ge.f32.partialorder %v1791, 0.3
      %vm1824 = vcmp.ge.f32.partialorder %v1792, 0.3
      %vm1825 = vcmp.ge.f32.partialorder %v1793, 0.3
      %vm1826 = vcmp.ge.f32.partialorder %v1794, 0.3
      %vm1827 = vcmp.ge.f32.partialorder %v1795, 0.3
      %vm1828 = vcmp.ge.f32.partialorder %v1796, 0.3
      %vm1829 = vcmp.ge.f32.partialorder %v1797, 0.3
      %vm1830 = vcmp.ge.f32.partialorder %v1798, 0.3
      %vm1831 = vcmp.ge.f32.partialorder %v1799, 0.3
      %vm1832 = vcmp.ge.f32.partialorder %v1800, 0.3
      %vm1833 = vcmp.ge.f32.partialorder %v1801, 0.3
      %vm1834 = vcmp.ge.f32.partialorder %v1802, 0.3
      %vm1835 = vcmp.ge.f32.partialorder %v1803, 0.3
      %v1836 = vsel %vm1804, 1, 0
      %v1837 = vsel %vm1805, 1, 0
      %v1838 = vsel %vm1806, 1, 0
      %v1839 = vsel %vm1807, 1, 0
      %v1840 = vsel %vm1808, 1, 0
      %v1841 = vsel %vm1809, 1, 0
      %v1842 = vsel %vm1810, 1, 0
      %v1843 = vsel %vm1811, 1, 0
      %v1844 = vsel %vm1812, 1, 0
      %v1845 = vsel %vm1813, 1, 0
      %v1846 = vsel %vm1814, 1, 0
      %v1847 = vsel %vm1815, 1, 0
      %v1848 = vsel %vm1816, 1, 0
      %v1849 = vsel %vm1817, 1, 0
      %v1850 = vsel %vm1818, 1, 0
      %v1851 = vsel %vm1819, 1, 0
      %v1852 = vsel %vm1820, 1, 0
      %v1853 = vsel %vm1821, 1, 0
      %v1854 = vsel %vm1822, 1, 0
      %v1855 = vsel %vm1823, 1, 0
      %v1856 = vsel %vm1824, 1, 0
      %v1857 = vsel %vm1825, 1, 0
      %v1858 = vsel %vm1826, 1, 0
      %v1859 = vsel %vm1827, 1, 0
      %v1860 = vsel %vm1828, 1, 0
      %v1861 = vsel %vm1829, 1, 0
      %v1862 = vsel %vm1830, 1, 0
      %v1863 = vsel %vm1831, 1, 0
      %v1864 = vsel %vm1832, 1, 0
      %v1865 = vsel %vm1833, 1, 0
      %v1866 = vsel %vm1834, 1, 0
      %v1867 = vsel %vm1835, 1, 0
      %v1868 = vcvt.s32.f32 %v1836
      %v1869 = vcvt.s32.f32 %v1837
      %v1870 = vcvt.s32.f32 %v1838
      %v1871 = vcvt.s32.f32 %v1839
      %v1872 = vcvt.s32.f32 %v1840
      %v1873 = vcvt.s32.f32 %v1841
      %v1874 = vcvt.s32.f32 %v1842
      %v1875 = vcvt.s32.f32 %v1843
      %v1876 = vcvt.s32.f32 %v1844
      %v1877 = vcvt.s32.f32 %v1845
      %v1878 = vcvt.s32.f32 %v1846
      %v1879 = vcvt.s32.f32 %v1847
      %v1880 = vcvt.s32.f32 %v1848
      %v1881 = vcvt.s32.f32 %v1849
      %v1882 = vcvt.s32.f32 %v1850
      %v1883 = vcvt.s32.f32 %v1851
      %v1884 = vcvt.s32.f32 %v1852
      %v1885 = vcvt.s32.f32 %v1853
      %v1886 = vcvt.s32.f32 %v1854
      %v1887 = vcvt.s32.f32 %v1855
      %v1888 = vcvt.s32.f32 %v1856
      %v1889 = vcvt.s32.f32 %v1857
      %v1890 = vcvt.s32.f32 %v1858
      %v1891 = vcvt.s32.f32 %v1859
      %v1892 = vcvt.s32.f32 %v1860
      %v1893 = vcvt.s32.f32 %v1861
      %v1894 = vcvt.s32.f32 %v1862
      %v1895 = vcvt.s32.f32 %v1863
      %v1896 = vcvt.s32.f32 %v1864
      %v1897 = vcvt.s32.f32 %v1865
      %v1898 = vcvt.s32.f32 %v1866
      %v1899 = vcvt.s32.f32 %v1867
      %vm1900 = vcmp.gt.f32.partialorder %v1868, 0.0
      %vm1901 = vcmp.gt.f32.partialorder %v1869, 0.0
      %vm1902 = vcmp.gt.f32.partialorder %v1870, 0.0
      %vm1903 = vcmp.gt.f32.partialorder %v1871, 0.0
      %vm1904 = vcmp.gt.f32.partialorder %v1872, 0.0
      %vm1905 = vcmp.gt.f32.partialorder %v1873, 0.0
      %vm1906 = vcmp.gt.f32.partialorder %v1874, 0.0
      %vm1907 = vcmp.gt.f32.partialorder %v1875, 0.0
      %vm1908 = vcmp.gt.f32.partialorder %v1876, 0.0
      %vm1909 = vcmp.gt.f32.partialorder %v1877, 0.0
      %vm1910 = vcmp.gt.f32.partialorder %v1878, 0.0
      %vm1911 = vcmp.gt.f32.partialorder %v1879, 0.0
      %vm1912 = vcmp.gt.f32.partialorder %v1880, 0.0
      %vm1913 = vcmp.gt.f32.partialorder %v1881, 0.0
      %vm1914 = vcmp.gt.f32.partialorder %v1882, 0.0
      %vm1915 = vcmp.gt.f32.partialorder %v1883, 0.0
      %vm1916 = vcmp.gt.f32.partialorder %v1884, 0.0
      %vm1917 = vcmp.gt.f32.partialorder %v1885, 0.0
      %vm1918 = vcmp.gt.f32.partialorder %v1886, 0.0
      %vm1919 = vcmp.gt.f32.partialorder %v1887, 0.0
      %vm1920 = vcmp.gt.f32.partialorder %v1888, 0.0
      %vm1921 = vcmp.gt.f32.partialorder %v1889, 0.0
      %vm1922 = vcmp.gt.f32.partialorder %v1890, 0.0
      %vm1923 = vcmp.gt.f32.partialorder %v1891, 0.0
      %vm1924 = vcmp.gt.f32.partialorder %v1892, 0.0
      %vm1925 = vcmp.gt.f32.partialorder %v1893, 0.0
      %vm1926 = vcmp.gt.f32.partialorder %v1894, 0.0
      %vm1927 = vcmp.gt.f32.partialorder %v1895, 0.0
      %vm1928 = vcmp.gt.f32.partialorder %v1896, 0.0
      %vm1929 = vcmp.gt.f32.partialorder %v1897, 0.0
      %vm1930 = vcmp.gt.f32.partialorder %v1898, 0.0
      %vm1931 = vcmp.gt.f32.partialorder %v1899, 0.0
      %v1932 = vsel %vm1900, 0.0, %v1772
      %v1933 = vsel %vm1901, 0.0, %v1773
      %v1934 = vsel %vm1902, 0.0, %v1774
      %v1935 = vsel %vm1903, 0.0, %v1775
      %v1936 = vsel %vm1904, 0.0, %v1776
      %v1937 = vsel %vm1905, 0.0, %v1777
      %v1938 = vsel %vm1906, 0.0, %v1778
      %v1939 = vsel %vm1907, 0.0, %v1779
      %v1940 = vsel %vm1908, 0.0, %v1780
      %v1941 = vsel %vm1909, 0.0, %v1781
      %v1942 = vsel %vm1910, 0.0, %v1782
      %v1943 = vsel %vm1911, 0.0, %v1783
      %v1944 = vsel %vm1912, 0.0, %v1784
      %v1945 = vsel %vm1913, 0.0, %v1785
      %v1946 = vsel %vm1914, 0.0, %v1786
      %v1947 = vsel %vm1915, 0.0, %v1787
      %v1948 = vsel %vm1916, 0.0, %v1788
      %v1949 = vsel %vm1917, 0.0, %v1789
      %v1950 = vsel %vm1918, 0.0, %v1790
      %v1951 = vsel %vm1919, 0.0, %v1791
      %v1952 = vsel %vm1920, 0.0, %v1792
      %v1953 = vsel %vm1921, 0.0, %v1793
      %v1954 = vsel %vm1922, 0.0, %v1794
      %v1955 = vsel %vm1923, 0.0, %v1795
      %v1956 = vsel %vm1924, 0.0, %v1796
      %v1957 = vsel %vm1925, 0.0, %v1797
      %v1958 = vsel %vm1926, 0.0, %v1798
      %v1959 = vsel %vm1927, 0.0, %v1799
      %v1960 = vsel %vm1928, 0.0, %v1800
      %v1961 = vsel %vm1929, 0.0, %v1801
      %v1962 = vsel %vm1930, 0.0, %v1802
      %v1963 = vsel %vm1931, 0.0, %v1803
      %v1964 = vpack.c.bf16 %v1869, %v1868
      %v1965 = vpack.c.bf16 %v1871, %v1870
      %v1966 = vpack.c.bf16 %v1873, %v1872
      %v1967 = vpack.c.bf16 %v1875, %v1874
      %v1968 = vpack.c.bf16 %v1877, %v1876
      %v1969 = vpack.c.bf16 %v1879, %v1878
      %v1970 = vpack.c.bf16 %v1881, %v1880
      %v1971 = vpack.c.bf16 %v1883, %v1882
      %v1972 = vpack.c.bf16 %v1885, %v1884
      %v1973 = vpack.c.bf16 %v1887, %v1886
      %v1974 = vpack.c.bf16 %v1889, %v1888
      %v1975 = vpack.c.bf16 %v1891, %v1890
      %v1976 = vpack.c.bf16 %v1893, %v1892
      %v1977 = vpack.c.bf16 %v1895, %v1894
      %v1978 = vpack.c.bf16 %v1897, %v1896
      %v1979 = vpack.c.bf16 %v1899, %v1898
      %v1996 = vunpack.c.l.b16 %v1964
      %v1997 = vunpack.c.h.b16 %v1964
      %v1998 = vunpack.c.l.b16 %v1965
      %v1999 = vunpack.c.h.b16 %v1965
      %v2000 = vunpack.c.l.b16 %v1966
      %v2001 = vunpack.c.h.b16 %v1966
      %v2002 = vunpack.c.l.b16 %v1967
      %v2003 = vunpack.c.h.b16 %v1967
      %v2004 = vunpack.c.l.b16 %v1968
      %v2005 = vunpack.c.h.b16 %v1968
      %v2006 = vunpack.c.l.b16 %v1969
      %v2007 = vunpack.c.h.b16 %v1969
      %v2008 = vunpack.c.l.b16 %v1970
      %v2009 = vunpack.c.h.b16 %v1970
      %v2010 = vunpack.c.l.b16 %v1971
      %v2011 = vunpack.c.h.b16 %v1971
      %v2012 = vunpack.c.l.b16 %v1972
      %v2013 = vunpack.c.h.b16 %v1972
      %v2014 = vunpack.c.l.b16 %v1973
      %v2015 = vunpack.c.h.b16 %v1973
      %v2016 = vunpack.c.l.b16 %v1974
      %v2017 = vunpack.c.h.b16 %v1974
      %v2018 = vunpack.c.l.b16 %v1975
      %v2019 = vunpack.c.h.b16 %v1975
      %v2020 = vunpack.c.l.b16 %v1976
      %v2021 = vunpack.c.h.b16 %v1976
      %v2022 = vunpack.c.l.b16 %v1977
      %v2023 = vunpack.c.h.b16 %v1977
      %v2024 = vunpack.c.l.b16 %v1978
      %v2025 = vunpack.c.h.b16 %v1978
      %v2026 = vunpack.c.l.b16 %v1979
      %v2027 = vunpack.c.h.b16 %v1979
      %v2028 = vpack.c.b16 %v1996, %v1996
      %v2029 = vpack.c.b16 %v1997, %v1997
      %v2030 = vpack.c.b16 %v1998, %v1998
      %v2031 = vpack.c.b16 %v1999, %v1999
      %v2032 = vpack.c.b16 %v2000, %v2000
      %v2033 = vpack.c.b16 %v2001, %v2001
      %v2034 = vpack.c.b16 %v2002, %v2002
      %v2035 = vpack.c.b16 %v2003, %v2003
      %v2036 = vpack.c.b16 %v2004, %v2004
      %v2037 = vpack.c.b16 %v2005, %v2005
      %v2038 = vpack.c.b16 %v2006, %v2006
      %v2039 = vpack.c.b16 %v2007, %v2007
      %v2040 = vpack.c.b16 %v2008, %v2008
      %v2041 = vpack.c.b16 %v2009, %v2009
      %v2042 = vpack.c.b16 %v2010, %v2010
      %v2043 = vpack.c.b16 %v2011, %v2011
      %v2044 = vpack.c.b16 %v2012, %v2012
      %v2045 = vpack.c.b16 %v2013, %v2013
      %v2046 = vpack.c.b16 %v2014, %v2014
      %v2047 = vpack.c.b16 %v2015, %v2015
      %v2048 = vpack.c.b16 %v2016, %v2016
      %v2049 = vpack.c.b16 %v2017, %v2017
      %v2050 = vpack.c.b16 %v2018, %v2018
      %v2051 = vpack.c.b16 %v2019, %v2019
      %v2052 = vpack.c.b16 %v2020, %v2020
      %v2053 = vpack.c.b16 %v2021, %v2021
      %v2054 = vpack.c.b16 %v2022, %v2022
      %v2055 = vpack.c.b16 %v2023, %v2023
      %v2056 = vpack.c.b16 %v2024, %v2024
      %v2057 = vpack.c.b16 %v2025, %v2025
      %v2058 = vpack.c.b16 %v2026, %v2026
      %v2059 = vpack.c.b16 %v2027, %v2027
      %s2092 = scalar_lea.vmem %s198, 384
      %2093 = vst [vmem:[%s2092] sm:$0xf] %v2028
      %2094 = vst [vmem:[%s2092 + $0x4] sm:$0xf] %v2029
      %2095 = vst [vmem:[%s2092 + $0x8] sm:$0xf] %v2030
      %2096 = vst [vmem:[%s2092 + $0xc] sm:$0xf] %v2031
      %2097 = vst [vmem:[%s2092 + $0x10] sm:$0xf] %v2032
      %2098 = vst [vmem:[%s2092 + $0x14] sm:$0xf] %v2033
      %2099 = vst [vmem:[%s2092 + $0x18] sm:$0xf] %v2034
      %2100 = vst [vmem:[%s2092 + $0x1c] sm:$0xf] %v2035
      %2101 = vst [vmem:[%s2092 + $0x20] sm:$0xf] %v2036
      %2102 = vst [vmem:[%s2092 + $0x24] sm:$0xf] %v2037
      %2103 = vst [vmem:[%s2092 + $0x28] sm:$0xf] %v2038
      %2104 = vst [vmem:[%s2092 + $0x2c] sm:$0xf] %v2039
      %2105 = vst [vmem:[%s2092 + $0x30] sm:$0xf] %v2040
      %2106 = vst [vmem:[%s2092 + $0x34] sm:$0xf] %v2041
      %2107 = vst [vmem:[%s2092 + $0x38] sm:$0xf] %v2042
      %2108 = vst [vmem:[%s2092 + $0x3c] sm:$0xf] %v2043
      %2109 = vst [vmem:[%s2092 + $0x40] sm:$0xf] %v2044
      %2110 = vst [vmem:[%s2092 + $0x44] sm:$0xf] %v2045
      %2111 = vst [vmem:[%s2092 + $0x48] sm:$0xf] %v2046
      %2112 = vst [vmem:[%s2092 + $0x4c] sm:$0xf] %v2047
      %2113 = vst [vmem:[%s2092 + $0x50] sm:$0xf] %v2048
      %2114 = vst [vmem:[%s2092 + $0x54] sm:$0xf] %v2049
      %2115 = vst [vmem:[%s2092 + $0x58] sm:$0xf] %v2050
      %2116 = vst [vmem:[%s2092 + $0x5c] sm:$0xf] %v2051
      %2117 = vst [vmem:[%s2092 + $0x60] sm:$0xf] %v2052
      %2118 = vst [vmem:[%s2092 + $0x64] sm:$0xf] %v2053
      %2119 = vst [vmem:[%s2092 + $0x68] sm:$0xf] %v2054
      %2120 = vst [vmem:[%s2092 + $0x6c] sm:$0xf] %v2055
      %2121 = vst [vmem:[%s2092 + $0x70] sm:$0xf] %v2056
      %2122 = vst [vmem:[%s2092 + $0x74] sm:$0xf] %v2057
      %2123 = vst [vmem:[%s2092 + $0x78] sm:$0xf] %v2058
      %2124 = vst [vmem:[%s2092 + $0x7c] sm:$0xf] %v2059
      %v2125 = vmul.f32 %v1932, 0.3
      %v2126 = vmul.f32 %v1933, 0.3
      %v2127 = vmul.f32 %v1934, 0.3
      %v2128 = vmul.f32 %v1935, 0.3
      %v2129 = vmul.f32 %v1936, 0.3
      %v2130 = vmul.f32 %v1937, 0.3
      %v2131 = vmul.f32 %v1938, 0.3
      %v2132 = vmul.f32 %v1939, 0.3
      %v2133 = vmul.f32 %v1940, 0.3
      %v2134 = vmul.f32 %v1941, 0.3
      %v2135 = vmul.f32 %v1942, 0.3
      %v2136 = vmul.f32 %v1943, 0.3
      %v2137 = vmul.f32 %v1944, 0.3
      %v2138 = vmul.f32 %v1945, 0.3
      %v2139 = vmul.f32 %v1946, 0.3
      %v2140 = vmul.f32 %v1947, 0.3
      %v2141 = vmul.f32 %v1948, 0.3
      %v2142 = vmul.f32 %v1949, 0.3
      %v2143 = vmul.f32 %v1950, 0.3
      %v2144 = vmul.f32 %v1951, 0.3
      %v2145 = vmul.f32 %v1952, 0.3
      %v2146 = vmul.f32 %v1953, 0.3
      %v2147 = vmul.f32 %v1954, 0.3
      %v2148 = vmul.f32 %v1955, 0.3
      %v2149 = vmul.f32 %v1956, 0.3
      %v2150 = vmul.f32 %v1957, 0.3
      %v2151 = vmul.f32 %v1958, 0.3
      %v2152 = vmul.f32 %v1959, 0.3
      %v2153 = vmul.f32 %v1960, 0.3
      %v2154 = vmul.f32 %v1961, 0.3
      %v2155 = vmul.f32 %v1962, 0.3
      %v2156 = vmul.f32 %v1963, 0.3
      %s2157 = scalar_lea.vmem %s188, 512
      %v2158 = vld [vmem:[%s2157] sm:$0xf]
      %v2159 = vld [vmem:[%s2157 + $0x4] sm:$0xf]
      %v2160 = vld [vmem:[%s2157 + $0x8] sm:$0xf]
      %v2161 = vld [vmem:[%s2157 + $0xc] sm:$0xf]
      %v2162 = vld [vmem:[%s2157 + $0x10] sm:$0xf]
      %v2163 = vld [vmem:[%s2157 + $0x14] sm:$0xf]
      %v2164 = vld [vmem:[%s2157 + $0x18] sm:$0xf]
      %v2165 = vld [vmem:[%s2157 + $0x1c] sm:$0xf]
      %v2166 = vld [vmem:[%s2157 + $0x20] sm:$0xf]
      %v2167 = vld [vmem:[%s2157 + $0x24] sm:$0xf]
      %v2168 = vld [vmem:[%s2157 + $0x28] sm:$0xf]
      %v2169 = vld [vmem:[%s2157 + $0x2c] sm:$0xf]
      %v2170 = vld [vmem:[%s2157 + $0x30] sm:$0xf]
      %v2171 = vld [vmem:[%s2157 + $0x34] sm:$0xf]
      %v2172 = vld [vmem:[%s2157 + $0x38] sm:$0xf]
      %v2173 = vld [vmem:[%s2157 + $0x3c] sm:$0xf]
      %v2174 = vld [vmem:[%s2157 + $0x40] sm:$0xf]
      %v2175 = vld [vmem:[%s2157 + $0x44] sm:$0xf]
      %v2176 = vld [vmem:[%s2157 + $0x48] sm:$0xf]
      %v2177 = vld [vmem:[%s2157 + $0x4c] sm:$0xf]
      %v2178 = vld [vmem:[%s2157 + $0x50] sm:$0xf]
      %v2179 = vld [vmem:[%s2157 + $0x54] sm:$0xf]
      %v2180 = vld [vmem:[%s2157 + $0x58] sm:$0xf]
      %v2181 = vld [vmem:[%s2157 + $0x5c] sm:$0xf]
      %v2182 = vld [vmem:[%s2157 + $0x60] sm:$0xf]
      %v2183 = vld [vmem:[%s2157 + $0x64] sm:$0xf]
      %v2184 = vld [vmem:[%s2157 + $0x68] sm:$0xf]
      %v2185 = vld [vmem:[%s2157 + $0x6c] sm:$0xf]
      %v2186 = vld [vmem:[%s2157 + $0x70] sm:$0xf]
      %v2187 = vld [vmem:[%s2157 + $0x74] sm:$0xf]
      %v2188 = vld [vmem:[%s2157 + $0x78] sm:$0xf]
      %v2189 = vld [vmem:[%s2157 + $0x7c] sm:$0xf]
      %v2190 = vunpack.c.l.bf16 %v2158
      %v2191 = vunpack.c.l.bf16 %v2159
      %v2192 = vunpack.c.l.bf16 %v2160
      %v2193 = vunpack.c.l.bf16 %v2161
      %v2194 = vunpack.c.l.bf16 %v2162
      %v2195 = vunpack.c.l.bf16 %v2163
      %v2196 = vunpack.c.l.bf16 %v2164
      %v2197 = vunpack.c.l.bf16 %v2165
      %v2198 = vunpack.c.l.bf16 %v2166
      %v2199 = vunpack.c.l.bf16 %v2167
      %v2200 = vunpack.c.l.bf16 %v2168
      %v2201 = vunpack.c.l.bf16 %v2169
      %v2202 = vunpack.c.l.bf16 %v2170
      %v2203 = vunpack.c.l.bf16 %v2171
      %v2204 = vunpack.c.l.bf16 %v2172
      %v2205 = vunpack.c.l.bf16 %v2173
      %v2206 = vunpack.c.l.bf16 %v2174
      %v2207 = vunpack.c.l.bf16 %v2175
      %v2208 = vunpack.c.l.bf16 %v2176
      %v2209 = vunpack.c.l.bf16 %v2177
      %v2210 = vunpack.c.l.bf16 %v2178
      %v2211 = vunpack.c.l.bf16 %v2179
      %v2212 = vunpack.c.l.bf16 %v2180
      %v2213 = vunpack.c.l.bf16 %v2181
      %v2214 = vunpack.c.l.bf16 %v2182
      %v2215 = vunpack.c.l.bf16 %v2183
      %v2216 = vunpack.c.l.bf16 %v2184
      %v2217 = vunpack.c.l.bf16 %v2185
      %v2218 = vunpack.c.l.bf16 %v2186
      %v2219 = vunpack.c.l.bf16 %v2187
      %v2220 = vunpack.c.l.bf16 %v2188
      %v2221 = vunpack.c.l.bf16 %v2189
      %s2222 = scalar_lea.vmem %s179, 4
      %v2223 = vld [vmem:[%s2222] sm:$0x1]
      %v2225 = vlaneseq
      %v2226 = vshrl.u32 %v2225, 7
      %v2227 = vsub.s32 0, %v2226
      %v2228 = vrot.slane %v2223, %v2227
      %v2230 = vmul.f32 %v2190, %v2228
      %v2231 = vmul.f32 %v2191, %v2228
      %v2232 = vmul.f32 %v2192, %v2228
      %v2233 = vmul.f32 %v2193, %v2228
      %v2234 = vmul.f32 %v2194, %v2228
      %v2235 = vmul.f32 %v2195, %v2228
      %v2236 = vmul.f32 %v2196, %v2228
      %v2237 = vmul.f32 %v2197, %v2228
      %v2238 = vmul.f32 %v2198, %v2228
      %v2239 = vmul.f32 %v2199, %v2228
      %v2240 = vmul.f32 %v2200, %v2228
      %v2241 = vmul.f32 %v2201, %v2228
      %v2242 = vmul.f32 %v2202, %v2228
      %v2243 = vmul.f32 %v2203, %v2228
      %v2244 = vmul.f32 %v2204, %v2228
      %v2245 = vmul.f32 %v2205, %v2228
      %v2246 = vmul.f32 %v2206, %v2228
      %v2247 = vmul.f32 %v2207, %v2228
      %v2248 = vmul.f32 %v2208, %v2228
      %v2249 = vmul.f32 %v2209, %v2228
      %v2250 = vmul.f32 %v2210, %v2228
      %v2251 = vmul.f32 %v2211, %v2228
      %v2252 = vmul.f32 %v2212, %v2228
      %v2253 = vmul.f32 %v2213, %v2228
      %v2254 = vmul.f32 %v2214, %v2228
      %v2255 = vmul.f32 %v2215, %v2228
      %v2256 = vmul.f32 %v2216, %v2228
      %v2257 = vmul.f32 %v2217, %v2228
      %v2258 = vmul.f32 %v2218, %v2228
      %v2259 = vmul.f32 %v2219, %v2228
      %v2260 = vmul.f32 %v2220, %v2228
      %v2261 = vmul.f32 %v2221, %v2228
      %v2262 = vadd.f32 %v2125, %v2230
      %v2263 = vadd.f32 %v2126, %v2231
      %v2264 = vadd.f32 %v2127, %v2232
      %v2265 = vadd.f32 %v2128, %v2233
      %v2266 = vadd.f32 %v2129, %v2234
      %v2267 = vadd.f32 %v2130, %v2235
      %v2268 = vadd.f32 %v2131, %v2236
      %v2269 = vadd.f32 %v2132, %v2237
      %v2270 = vadd.f32 %v2133, %v2238
      %v2271 = vadd.f32 %v2134, %v2239
      %v2272 = vadd.f32 %v2135, %v2240
      %v2273 = vadd.f32 %v2136, %v2241
      %v2274 = vadd.f32 %v2137, %v2242
      %v2275 = vadd.f32 %v2138, %v2243
      %v2276 = vadd.f32 %v2139, %v2244
      %v2277 = vadd.f32 %v2140, %v2245
      %v2278 = vadd.f32 %v2141, %v2246
      %v2279 = vadd.f32 %v2142, %v2247
      %v2280 = vadd.f32 %v2143, %v2248
      %v2281 = vadd.f32 %v2144, %v2249
      %v2282 = vadd.f32 %v2145, %v2250
      %v2283 = vadd.f32 %v2146, %v2251
      %v2284 = vadd.f32 %v2147, %v2252
      %v2285 = vadd.f32 %v2148, %v2253
      %v2286 = vadd.f32 %v2149, %v2254
      %v2287 = vadd.f32 %v2150, %v2255
      %v2288 = vadd.f32 %v2151, %v2256
      %v2289 = vadd.f32 %v2152, %v2257
      %v2290 = vadd.f32 %v2153, %v2258
      %v2291 = vadd.f32 %v2154, %v2259
      %v2292 = vadd.f32 %v2155, %v2260
      %v2293 = vadd.f32 %v2156, %v2261
      %vm2294 = vcmp.ge.f32.partialorder %v2262, 0.3
      %vm2295 = vcmp.ge.f32.partialorder %v2263, 0.3
      %vm2296 = vcmp.ge.f32.partialorder %v2264, 0.3
      %vm2297 = vcmp.ge.f32.partialorder %v2265, 0.3
      %vm2298 = vcmp.ge.f32.partialorder %v2266, 0.3
      %vm2299 = vcmp.ge.f32.partialorder %v2267, 0.3
      %vm2300 = vcmp.ge.f32.partialorder %v2268, 0.3
      %vm2301 = vcmp.ge.f32.partialorder %v2269, 0.3
      %vm2302 = vcmp.ge.f32.partialorder %v2270, 0.3
      %vm2303 = vcmp.ge.f32.partialorder %v2271, 0.3
      %vm2304 = vcmp.ge.f32.partialorder %v2272, 0.3
      %vm2305 = vcmp.ge.f32.partialorder %v2273, 0.3
      %vm2306 = vcmp.ge.f32.partialorder %v2274, 0.3
      %vm2307 = vcmp.ge.f32.partialorder %v2275, 0.3
      %vm2308 = vcmp.ge.f32.partialorder %v2276, 0.3
      %vm2309 = vcmp.ge.f32.partialorder %v2277, 0.3
      %vm2310 = vcmp.ge.f32.partialorder %v2278, 0.3
      %vm2311 = vcmp.ge.f32.partialorder %v2279, 0.3
      %vm2312 = vcmp.ge.f32.partialorder %v2280, 0.3
      %vm2313 = vcmp.ge.f32.partialorder %v2281, 0.3
      %vm2314 = vcmp.ge.f32.partialorder %v2282, 0.3
      %vm2315 = vcmp.ge.f32.partialorder %v2283, 0.3
      %vm2316 = vcmp.ge.f32.partialorder %v2284, 0.3
      %vm2317 = vcmp.ge.f32.partialorder %v2285, 0.3
      %vm2318 = vcmp.ge.f32.partialorder %v2286, 0.3
      %vm2319 = vcmp.ge.f32.partialorder %v2287, 0.3
      %vm2320 = vcmp.ge.f32.partialorder %v2288, 0.3
      %vm2321 = vcmp.ge.f32.partialorder %v2289, 0.3
      %vm2322 = vcmp.ge.f32.partialorder %v2290, 0.3
      %vm2323 = vcmp.ge.f32.partialorder %v2291, 0.3
      %vm2324 = vcmp.ge.f32.partialorder %v2292, 0.3
      %vm2325 = vcmp.ge.f32.partialorder %v2293, 0.3
      %v2326 = vsel %vm2294, 1, 0
      %v2327 = vsel %vm2295, 1, 0
      %v2328 = vsel %vm2296, 1, 0
      %v2329 = vsel %vm2297, 1, 0
      %v2330 = vsel %vm2298, 1, 0
      %v2331 = vsel %vm2299, 1, 0
      %v2332 = vsel %vm2300, 1, 0
      %v2333 = vsel %vm2301, 1, 0
      %v2334 = vsel %vm2302, 1, 0
      %v2335 = vsel %vm2303, 1, 0
      %v2336 = vsel %vm2304, 1, 0
      %v2337 = vsel %vm2305, 1, 0
      %v2338 = vsel %vm2306, 1, 0
      %v2339 = vsel %vm2307, 1, 0
      %v2340 = vsel %vm2308, 1, 0
      %v2341 = vsel %vm2309, 1, 0
      %v2342 = vsel %vm2310, 1, 0
      %v2343 = vsel %vm2311, 1, 0
      %v2344 = vsel %vm2312, 1, 0
      %v2345 = vsel %vm2313, 1, 0
      %v2346 = vsel %vm2314, 1, 0
      %v2347 = vsel %vm2315, 1, 0
      %v2348 = vsel %vm2316, 1, 0
      %v2349 = vsel %vm2317, 1, 0
      %v2350 = vsel %vm2318, 1, 0
      %v2351 = vsel %vm2319, 1, 0
      %v2352 = vsel %vm2320, 1, 0
      %v2353 = vsel %vm2321, 1, 0
      %v2354 = vsel %vm2322, 1, 0
      %v2355 = vsel %vm2323, 1, 0
      %v2356 = vsel %vm2324, 1, 0
      %v2357 = vsel %vm2325, 1, 0
      %v2358 = vcvt.s32.f32 %v2326
      %v2359 = vcvt.s32.f32 %v2327
      %v2360 = vcvt.s32.f32 %v2328
      %v2361 = vcvt.s32.f32 %v2329
      %v2362 = vcvt.s32.f32 %v2330
      %v2363 = vcvt.s32.f32 %v2331
      %v2364 = vcvt.s32.f32 %v2332
      %v2365 = vcvt.s32.f32 %v2333
      %v2366 = vcvt.s32.f32 %v2334
      %v2367 = vcvt.s32.f32 %v2335
      %v2368 = vcvt.s32.f32 %v2336
      %v2369 = vcvt.s32.f32 %v2337
      %v2370 = vcvt.s32.f32 %v2338
      %v2371 = vcvt.s32.f32 %v2339
      %v2372 = vcvt.s32.f32 %v2340
      %v2373 = vcvt.s32.f32 %v2341
      %v2374 = vcvt.s32.f32 %v2342
      %v2375 = vcvt.s32.f32 %v2343
      %v2376 = vcvt.s32.f32 %v2344
      %v2377 = vcvt.s32.f32 %v2345
      %v2378 = vcvt.s32.f32 %v2346
      %v2379 = vcvt.s32.f32 %v2347
      %v2380 = vcvt.s32.f32 %v2348
      %v2381 = vcvt.s32.f32 %v2349
      %v2382 = vcvt.s32.f32 %v2350
      %v2383 = vcvt.s32.f32 %v2351
      %v2384 = vcvt.s32.f32 %v2352
      %v2385 = vcvt.s32.f32 %v2353
      %v2386 = vcvt.s32.f32 %v2354
      %v2387 = vcvt.s32.f32 %v2355
      %v2388 = vcvt.s32.f32 %v2356
      %v2389 = vcvt.s32.f32 %v2357
      %vm2390 = vcmp.gt.f32.partialorder %v2358, 0.0
      %vm2391 = vcmp.gt.f32.partialorder %v2359, 0.0
      %vm2392 = vcmp.gt.f32.partialorder %v2360, 0.0
      %vm2393 = vcmp.gt.f32.partialorder %v2361, 0.0
      %vm2394 = vcmp.gt.f32.partialorder %v2362, 0.0
      %vm2395 = vcmp.gt.f32.partialorder %v2363, 0.0
      %vm2396 = vcmp.gt.f32.partialorder %v2364, 0.0
      %vm2397 = vcmp.gt.f32.partialorder %v2365, 0.0
      %vm2398 = vcmp.gt.f32.partialorder %v2366, 0.0
      %vm2399 = vcmp.gt.f32.partialorder %v2367, 0.0
      %vm2400 = vcmp.gt.f32.partialorder %v2368, 0.0
      %vm2401 = vcmp.gt.f32.partialorder %v2369, 0.0
      %vm2402 = vcmp.gt.f32.partialorder %v2370, 0.0
      %vm2403 = vcmp.gt.f32.partialorder %v2371, 0.0
      %vm2404 = vcmp.gt.f32.partialorder %v2372, 0.0
      %vm2405 = vcmp.gt.f32.partialorder %v2373, 0.0
      %vm2406 = vcmp.gt.f32.partialorder %v2374, 0.0
      %vm2407 = vcmp.gt.f32.partialorder %v2375, 0.0
      %vm2408 = vcmp.gt.f32.partialorder %v2376, 0.0
      %vm2409 = vcmp.gt.f32.partialorder %v2377, 0.0
      %vm2410 = vcmp.gt.f32.partialorder %v2378, 0.0
      %vm2411 = vcmp.gt.f32.partialorder %v2379, 0.0
      %vm2412 = vcmp.gt.f32.partialorder %v2380, 0.0
      %vm2413 = vcmp.gt.f32.partialorder %v2381, 0.0
      %vm2414 = vcmp.gt.f32.partialorder %v2382, 0.0
      %vm2415 = vcmp.gt.f32.partialorder %v2383, 0.0
      %vm2416 = vcmp.gt.f32.partialorder %v2384, 0.0
      %vm2417 = vcmp.gt.f32.partialorder %v2385, 0.0
      %vm2418 = vcmp.gt.f32.partialorder %v2386, 0.0
      %vm2419 = vcmp.gt.f32.partialorder %v2387, 0.0
      %vm2420 = vcmp.gt.f32.partialorder %v2388, 0.0
      %vm2421 = vcmp.gt.f32.partialorder %v2389, 0.0
      %v2422 = vsel %vm2390, 0.0, %v2262
      %v2423 = vsel %vm2391, 0.0, %v2263
      %v2424 = vsel %vm2392, 0.0, %v2264
      %v2425 = vsel %vm2393, 0.0, %v2265
      %v2426 = vsel %vm2394, 0.0, %v2266
      %v2427 = vsel %vm2395, 0.0, %v2267
      %v2428 = vsel %vm2396, 0.0, %v2268
      %v2429 = vsel %vm2397, 0.0, %v2269
      %v2430 = vsel %vm2398, 0.0, %v2270
      %v2431 = vsel %vm2399, 0.0, %v2271
      %v2432 = vsel %vm2400, 0.0, %v2272
      %v2433 = vsel %vm2401, 0.0, %v2273
      %v2434 = vsel %vm2402, 0.0, %v2274
      %v2435 = vsel %vm2403, 0.0, %v2275
      %v2436 = vsel %vm2404, 0.0, %v2276
      %v2437 = vsel %vm2405, 0.0, %v2277
      %v2438 = vsel %vm2406, 0.0, %v2278
      %v2439 = vsel %vm2407, 0.0, %v2279
      %v2440 = vsel %vm2408, 0.0, %v2280
      %v2441 = vsel %vm2409, 0.0, %v2281
      %v2442 = vsel %vm2410, 0.0, %v2282
      %v2443 = vsel %vm2411, 0.0, %v2283
      %v2444 = vsel %vm2412, 0.0, %v2284
      %v2445 = vsel %vm2413, 0.0, %v2285
      %v2446 = vsel %vm2414, 0.0, %v2286
      %v2447 = vsel %vm2415, 0.0, %v2287
      %v2448 = vsel %vm2416, 0.0, %v2288
      %v2449 = vsel %vm2417, 0.0, %v2289
      %v2450 = vsel %vm2418, 0.0, %v2290
      %v2451 = vsel %vm2419, 0.0, %v2291
      %v2452 = vsel %vm2420, 0.0, %v2292
      %v2453 = vsel %vm2421, 0.0, %v2293
      %v2454 = vpack.c.bf16 %v2359, %v2358
      %v2455 = vpack.c.bf16 %v2361, %v2360
      %v2456 = vpack.c.bf16 %v2363, %v2362
      %v2457 = vpack.c.bf16 %v2365, %v2364
      %v2458 = vpack.c.bf16 %v2367, %v2366
      %v2459 = vpack.c.bf16 %v2369, %v2368
      %v2460 = vpack.c.bf16 %v2371, %v2370
      %v2461 = vpack.c.bf16 %v2373, %v2372
      %v2462 = vpack.c.bf16 %v2375, %v2374
      %v2463 = vpack.c.bf16 %v2377, %v2376
      %v2464 = vpack.c.bf16 %v2379, %v2378
      %v2465 = vpack.c.bf16 %v2381, %v2380
      %v2466 = vpack.c.bf16 %v2383, %v2382
      %v2467 = vpack.c.bf16 %v2385, %v2384
      %v2468 = vpack.c.bf16 %v2387, %v2386
      %v2469 = vpack.c.bf16 %v2389, %v2388
      %v2486 = vunpack.c.l.b16 %v2454
      %v2487 = vunpack.c.h.b16 %v2454
      %v2488 = vunpack.c.l.b16 %v2455
      %v2489 = vunpack.c.h.b16 %v2455
      %v2490 = vunpack.c.l.b16 %v2456
      %v2491 = vunpack.c.h.b16 %v2456
      %v2492 = vunpack.c.l.b16 %v2457
      %v2493 = vunpack.c.h.b16 %v2457
      %v2494 = vunpack.c.l.b16 %v2458
      %v2495 = vunpack.c.h.b16 %v2458
      %v2496 = vunpack.c.l.b16 %v2459
      %v2497 = vunpack.c.h.b16 %v2459
      %v2498 = vunpack.c.l.b16 %v2460
      %v2499 = vunpack.c.h.b16 %v2460
      %v2500 = vunpack.c.l.b16 %v2461
      %v2501 = vunpack.c.h.b16 %v2461
      %v2502 = vunpack.c.l.b16 %v2462
      %v2503 = vunpack.c.h.b16 %v2462
      %v2504 = vunpack.c.l.b16 %v2463
      %v2505 = vunpack.c.h.b16 %v2463
      %v2506 = vunpack.c.l.b16 %v2464
      %v2507 = vunpack.c.h.b16 %v2464
      %v2508 = vunpack.c.l.b16 %v2465
      %v2509 = vunpack.c.h.b16 %v2465
      %v2510 = vunpack.c.l.b16 %v2466
      %v2511 = vunpack.c.h.b16 %v2466
      %v2512 = vunpack.c.l.b16 %v2467
      %v2513 = vunpack.c.h.b16 %v2467
      %v2514 = vunpack.c.l.b16 %v2468
      %v2515 = vunpack.c.h.b16 %v2468
      %v2516 = vunpack.c.l.b16 %v2469
      %v2517 = vunpack.c.h.b16 %v2469
      %v2518 = vpack.c.b16 %v2486, %v2486
      %v2519 = vpack.c.b16 %v2487, %v2487
      %v2520 = vpack.c.b16 %v2488, %v2488
      %v2521 = vpack.c.b16 %v2489, %v2489
      %v2522 = vpack.c.b16 %v2490, %v2490
      %v2523 = vpack.c.b16 %v2491, %v2491
      %v2524 = vpack.c.b16 %v2492, %v2492
      %v2525 = vpack.c.b16 %v2493, %v2493
      %v2526 = vpack.c.b16 %v2494, %v2494
      %v2527 = vpack.c.b16 %v2495, %v2495
      %v2528 = vpack.c.b16 %v2496, %v2496
      %v2529 = vpack.c.b16 %v2497, %v2497
      %v2530 = vpack.c.b16 %v2498, %v2498
      %v2531 = vpack.c.b16 %v2499, %v2499
      %v2532 = vpack.c.b16 %v2500, %v2500
      %v2533 = vpack.c.b16 %v2501, %v2501
      %v2534 = vpack.c.b16 %v2502, %v2502
      %v2535 = vpack.c.b16 %v2503, %v2503
      %v2536 = vpack.c.b16 %v2504, %v2504
      %v2537 = vpack.c.b16 %v2505, %v2505
      %v2538 = vpack.c.b16 %v2506, %v2506
      %v2539 = vpack.c.b16 %v2507, %v2507
      %v2540 = vpack.c.b16 %v2508, %v2508
      %v2541 = vpack.c.b16 %v2509, %v2509
      %v2542 = vpack.c.b16 %v2510, %v2510
      %v2543 = vpack.c.b16 %v2511, %v2511
      %v2544 = vpack.c.b16 %v2512, %v2512
      %v2545 = vpack.c.b16 %v2513, %v2513
      %v2546 = vpack.c.b16 %v2514, %v2514
      %v2547 = vpack.c.b16 %v2515, %v2515
      %v2548 = vpack.c.b16 %v2516, %v2516
      %v2549 = vpack.c.b16 %v2517, %v2517
      %s2582 = scalar_lea.vmem %s198, 512
      %2583 = vst [vmem:[%s2582] sm:$0xf] %v2518
      %2584 = vst [vmem:[%s2582 + $0x4] sm:$0xf] %v2519
      %2585 = vst [vmem:[%s2582 + $0x8] sm:$0xf] %v2520
      %2586 = vst [vmem:[%s2582 + $0xc] sm:$0xf] %v2521
      %2587 = vst [vmem:[%s2582 + $0x10] sm:$0xf] %v2522
      %2588 = vst [vmem:[%s2582 + $0x14] sm:$0xf] %v2523
      %2589 = vst [vmem:[%s2582 + $0x18] sm:$0xf] %v2524
      %2590 = vst [vmem:[%s2582 + $0x1c] sm:$0xf] %v2525
      %2591 = vst [vmem:[%s2582 + $0x20] sm:$0xf] %v2526
      %2592 = vst [vmem:[%s2582 + $0x24] sm:$0xf] %v2527
      %2593 = vst [vmem:[%s2582 + $0x28] sm:$0xf] %v2528
      %2594 = vst [vmem:[%s2582 + $0x2c] sm:$0xf] %v2529
      %2595 = vst [vmem:[%s2582 + $0x30] sm:$0xf] %v2530
      %2596 = vst [vmem:[%s2582 + $0x34] sm:$0xf] %v2531
      %2597 = vst [vmem:[%s2582 + $0x38] sm:$0xf] %v2532
      %2598 = vst [vmem:[%s2582 + $0x3c] sm:$0xf] %v2533
      %2599 = vst [vmem:[%s2582 + $0x40] sm:$0xf] %v2534
      %2600 = vst [vmem:[%s2582 + $0x44] sm:$0xf] %v2535
      %2601 = vst [vmem:[%s2582 + $0x48] sm:$0xf] %v2536
      %2602 = vst [vmem:[%s2582 + $0x4c] sm:$0xf] %v2537
      %2603 = vst [vmem:[%s2582 + $0x50] sm:$0xf] %v2538
      %2604 = vst [vmem:[%s2582 + $0x54] sm:$0xf] %v2539
      %2605 = vst [vmem:[%s2582 + $0x58] sm:$0xf] %v2540
      %2606 = vst [vmem:[%s2582 + $0x5c] sm:$0xf] %v2541
      %2607 = vst [vmem:[%s2582 + $0x60] sm:$0xf] %v2542
      %2608 = vst [vmem:[%s2582 + $0x64] sm:$0xf] %v2543
      %2609 = vst [vmem:[%s2582 + $0x68] sm:$0xf] %v2544
      %2610 = vst [vmem:[%s2582 + $0x6c] sm:$0xf] %v2545
      %2611 = vst [vmem:[%s2582 + $0x70] sm:$0xf] %v2546
      %2612 = vst [vmem:[%s2582 + $0x74] sm:$0xf] %v2547
      %2613 = vst [vmem:[%s2582 + $0x78] sm:$0xf] %v2548
      %2614 = vst [vmem:[%s2582 + $0x7c] sm:$0xf] %v2549
      %v2615 = vmul.f32 %v2422, 0.3
      %v2616 = vmul.f32 %v2423, 0.3
      %v2617 = vmul.f32 %v2424, 0.3
      %v2618 = vmul.f32 %v2425, 0.3
      %v2619 = vmul.f32 %v2426, 0.3
      %v2620 = vmul.f32 %v2427, 0.3
      %v2621 = vmul.f32 %v2428, 0.3
      %v2622 = vmul.f32 %v2429, 0.3
      %v2623 = vmul.f32 %v2430, 0.3
      %v2624 = vmul.f32 %v2431, 0.3
      %v2625 = vmul.f32 %v2432, 0.3
      %v2626 = vmul.f32 %v2433, 0.3
      %v2627 = vmul.f32 %v2434, 0.3
      %v2628 = vmul.f32 %v2435, 0.3
      %v2629 = vmul.f32 %v2436, 0.3
      %v2630 = vmul.f32 %v2437, 0.3
      %v2631 = vmul.f32 %v2438, 0.3
      %v2632 = vmul.f32 %v2439, 0.3
      %v2633 = vmul.f32 %v2440, 0.3
      %v2634 = vmul.f32 %v2441, 0.3
      %v2635 = vmul.f32 %v2442, 0.3
      %v2636 = vmul.f32 %v2443, 0.3
      %v2637 = vmul.f32 %v2444, 0.3
      %v2638 = vmul.f32 %v2445, 0.3
      %v2639 = vmul.f32 %v2446, 0.3
      %v2640 = vmul.f32 %v2447, 0.3
      %v2641 = vmul.f32 %v2448, 0.3
      %v2642 = vmul.f32 %v2449, 0.3
      %v2643 = vmul.f32 %v2450, 0.3
      %v2644 = vmul.f32 %v2451, 0.3
      %v2645 = vmul.f32 %v2452, 0.3
      %v2646 = vmul.f32 %v2453, 0.3
      %s2647 = scalar_lea.vmem %s188, 640
      %v2648 = vld [vmem:[%s2647] sm:$0xf]
      %v2649 = vld [vmem:[%s2647 + $0x4] sm:$0xf]
      %v2650 = vld [vmem:[%s2647 + $0x8] sm:$0xf]
      %v2651 = vld [vmem:[%s2647 + $0xc] sm:$0xf]
      %v2652 = vld [vmem:[%s2647 + $0x10] sm:$0xf]
      %v2653 = vld [vmem:[%s2647 + $0x14] sm:$0xf]
      %v2654 = vld [vmem:[%s2647 + $0x18] sm:$0xf]
      %v2655 = vld [vmem:[%s2647 + $0x1c] sm:$0xf]
      %v2656 = vld [vmem:[%s2647 + $0x20] sm:$0xf]
      %v2657 = vld [vmem:[%s2647 + $0x24] sm:$0xf]
      %v2658 = vld [vmem:[%s2647 + $0x28] sm:$0xf]
      %v2659 = vld [vmem:[%s2647 + $0x2c] sm:$0xf]
      %v2660 = vld [vmem:[%s2647 + $0x30] sm:$0xf]
      %v2661 = vld [vmem:[%s2647 + $0x34] sm:$0xf]
      %v2662 = vld [vmem:[%s2647 + $0x38] sm:$0xf]
      %v2663 = vld [vmem:[%s2647 + $0x3c] sm:$0xf]
      %v2664 = vld [vmem:[%s2647 + $0x40] sm:$0xf]
      %v2665 = vld [vmem:[%s2647 + $0x44] sm:$0xf]
      %v2666 = vld [vmem:[%s2647 + $0x48] sm:$0xf]
      %v2667 = vld [vmem:[%s2647 + $0x4c] sm:$0xf]
      %v2668 = vld [vmem:[%s2647 + $0x50] sm:$0xf]
      %v2669 = vld [vmem:[%s2647 + $0x54] sm:$0xf]
      %v2670 = vld [vmem:[%s2647 + $0x58] sm:$0xf]
      %v2671 = vld [vmem:[%s2647 + $0x5c] sm:$0xf]
      %v2672 = vld [vmem:[%s2647 + $0x60] sm:$0xf]
      %v2673 = vld [vmem:[%s2647 + $0x64] sm:$0xf]
      %v2674 = vld [vmem:[%s2647 + $0x68] sm:$0xf]
      %v2675 = vld [vmem:[%s2647 + $0x6c] sm:$0xf]
      %v2676 = vld [vmem:[%s2647 + $0x70] sm:$0xf]
      %v2677 = vld [vmem:[%s2647 + $0x74] sm:$0xf]
      %v2678 = vld [vmem:[%s2647 + $0x78] sm:$0xf]
      %v2679 = vld [vmem:[%s2647 + $0x7c] sm:$0xf]
      %v2680 = vunpack.c.l.bf16 %v2648
      %v2681 = vunpack.c.l.bf16 %v2649
      %v2682 = vunpack.c.l.bf16 %v2650
      %v2683 = vunpack.c.l.bf16 %v2651
      %v2684 = vunpack.c.l.bf16 %v2652
      %v2685 = vunpack.c.l.bf16 %v2653
      %v2686 = vunpack.c.l.bf16 %v2654
      %v2687 = vunpack.c.l.bf16 %v2655
      %v2688 = vunpack.c.l.bf16 %v2656
      %v2689 = vunpack.c.l.bf16 %v2657
      %v2690 = vunpack.c.l.bf16 %v2658
      %v2691 = vunpack.c.l.bf16 %v2659
      %v2692 = vunpack.c.l.bf16 %v2660
      %v2693 = vunpack.c.l.bf16 %v2661
      %v2694 = vunpack.c.l.bf16 %v2662
      %v2695 = vunpack.c.l.bf16 %v2663
      %v2696 = vunpack.c.l.bf16 %v2664
      %v2697 = vunpack.c.l.bf16 %v2665
      %v2698 = vunpack.c.l.bf16 %v2666
      %v2699 = vunpack.c.l.bf16 %v2667
      %v2700 = vunpack.c.l.bf16 %v2668
      %v2701 = vunpack.c.l.bf16 %v2669
      %v2702 = vunpack.c.l.bf16 %v2670
      %v2703 = vunpack.c.l.bf16 %v2671
      %v2704 = vunpack.c.l.bf16 %v2672
      %v2705 = vunpack.c.l.bf16 %v2673
      %v2706 = vunpack.c.l.bf16 %v2674
      %v2707 = vunpack.c.l.bf16 %v2675
      %v2708 = vunpack.c.l.bf16 %v2676
      %v2709 = vunpack.c.l.bf16 %v2677
      %v2710 = vunpack.c.l.bf16 %v2678
      %v2711 = vunpack.c.l.bf16 %v2679
      %s2712 = scalar_lea.vmem %s179, 5
      %v2713 = vld [vmem:[%s2712] sm:$0x1]
      %v2715 = vlaneseq
      %v2716 = vshrl.u32 %v2715, 7
      %v2717 = vsub.s32 0, %v2716
      %v2718 = vrot.slane %v2713, %v2717
      %v2720 = vmul.f32 %v2680, %v2718
      %v2721 = vmul.f32 %v2681, %v2718
      %v2722 = vmul.f32 %v2682, %v2718
      %v2723 = vmul.f32 %v2683, %v2718
      %v2724 = vmul.f32 %v2684, %v2718
      %v2725 = vmul.f32 %v2685, %v2718
      %v2726 = vmul.f32 %v2686, %v2718
      %v2727 = vmul.f32 %v2687, %v2718
      %v2728 = vmul.f32 %v2688, %v2718
      %v2729 = vmul.f32 %v2689, %v2718
      %v2730 = vmul.f32 %v2690, %v2718
      %v2731 = vmul.f32 %v2691, %v2718
      %v2732 = vmul.f32 %v2692, %v2718
      %v2733 = vmul.f32 %v2693, %v2718
      %v2734 = vmul.f32 %v2694, %v2718
      %v2735 = vmul.f32 %v2695, %v2718
      %v2736 = vmul.f32 %v2696, %v2718
      %v2737 = vmul.f32 %v2697, %v2718
      %v2738 = vmul.f32 %v2698, %v2718
      %v2739 = vmul.f32 %v2699, %v2718
      %v2740 = vmul.f32 %v2700, %v2718
      %v2741 = vmul.f32 %v2701, %v2718
      %v2742 = vmul.f32 %v2702, %v2718
      %v2743 = vmul.f32 %v2703, %v2718
      %v2744 = vmul.f32 %v2704, %v2718
      %v2745 = vmul.f32 %v2705, %v2718
      %v2746 = vmul.f32 %v2706, %v2718
      %v2747 = vmul.f32 %v2707, %v2718
      %v2748 = vmul.f32 %v2708, %v2718
      %v2749 = vmul.f32 %v2709, %v2718
      %v2750 = vmul.f32 %v2710, %v2718
      %v2751 = vmul.f32 %v2711, %v2718
      %v2752 = vadd.f32 %v2615, %v2720
      %v2753 = vadd.f32 %v2616, %v2721
      %v2754 = vadd.f32 %v2617, %v2722
      %v2755 = vadd.f32 %v2618, %v2723
      %v2756 = vadd.f32 %v2619, %v2724
      %v2757 = vadd.f32 %v2620, %v2725
      %v2758 = vadd.f32 %v2621, %v2726
      %v2759 = vadd.f32 %v2622, %v2727
      %v2760 = vadd.f32 %v2623, %v2728
      %v2761 = vadd.f32 %v2624, %v2729
      %v2762 = vadd.f32 %v2625, %v2730
      %v2763 = vadd.f32 %v2626, %v2731
      %v2764 = vadd.f32 %v2627, %v2732
      %v2765 = vadd.f32 %v2628, %v2733
      %v2766 = vadd.f32 %v2629, %v2734
      %v2767 = vadd.f32 %v2630, %v2735
      %v2768 = vadd.f32 %v2631, %v2736
      %v2769 = vadd.f32 %v2632, %v2737
      %v2770 = vadd.f32 %v2633, %v2738
      %v2771 = vadd.f32 %v2634, %v2739
      %v2772 = vadd.f32 %v2635, %v2740
      %v2773 = vadd.f32 %v2636, %v2741
      %v2774 = vadd.f32 %v2637, %v2742
      %v2775 = vadd.f32 %v2638, %v2743
      %v2776 = vadd.f32 %v2639, %v2744
      %v2777 = vadd.f32 %v2640, %v2745
      %v2778 = vadd.f32 %v2641, %v2746
      %v2779 = vadd.f32 %v2642, %v2747
      %v2780 = vadd.f32 %v2643, %v2748
      %v2781 = vadd.f32 %v2644, %v2749
      %v2782 = vadd.f32 %v2645, %v2750
      %v2783 = vadd.f32 %v2646, %v2751
      %vm2784 = vcmp.ge.f32.partialorder %v2752, 0.3
      %vm2785 = vcmp.ge.f32.partialorder %v2753, 0.3
      %vm2786 = vcmp.ge.f32.partialorder %v2754, 0.3
      %vm2787 = vcmp.ge.f32.partialorder %v2755, 0.3
      %vm2788 = vcmp.ge.f32.partialorder %v2756, 0.3
      %vm2789 = vcmp.ge.f32.partialorder %v2757, 0.3
      %vm2790 = vcmp.ge.f32.partialorder %v2758, 0.3
      %vm2791 = vcmp.ge.f32.partialorder %v2759, 0.3
      %vm2792 = vcmp.ge.f32.partialorder %v2760, 0.3
      %vm2793 = vcmp.ge.f32.partialorder %v2761, 0.3
      %vm2794 = vcmp.ge.f32.partialorder %v2762, 0.3
      %vm2795 = vcmp.ge.f32.partialorder %v2763, 0.3
      %vm2796 = vcmp.ge.f32.partialorder %v2764, 0.3
      %vm2797 = vcmp.ge.f32.partialorder %v2765, 0.3
      %vm2798 = vcmp.ge.f32.partialorder %v2766, 0.3
      %vm2799 = vcmp.ge.f32.partialorder %v2767, 0.3
      %vm2800 = vcmp.ge.f32.partialorder %v2768, 0.3
      %vm2801 = vcmp.ge.f32.partialorder %v2769, 0.3
      %vm2802 = vcmp.ge.f32.partialorder %v2770, 0.3
      %vm2803 = vcmp.ge.f32.partialorder %v2771, 0.3
      %vm2804 = vcmp.ge.f32.partialorder %v2772, 0.3
      %vm2805 = vcmp.ge.f32.partialorder %v2773, 0.3
      %vm2806 = vcmp.ge.f32.partialorder %v2774, 0.3
      %vm2807 = vcmp.ge.f32.partialorder %v2775, 0.3
      %vm2808 = vcmp.ge.f32.partialorder %v2776, 0.3
      %vm2809 = vcmp.ge.f32.partialorder %v2777, 0.3
      %vm2810 = vcmp.ge.f32.partialorder %v2778, 0.3
      %vm2811 = vcmp.ge.f32.partialorder %v2779, 0.3
      %vm2812 = vcmp.ge.f32.partialorder %v2780, 0.3
      %vm2813 = vcmp.ge.f32.partialorder %v2781, 0.3
      %vm2814 = vcmp.ge.f32.partialorder %v2782, 0.3
      %vm2815 = vcmp.ge.f32.partialorder %v2783, 0.3
      %v2816 = vsel %vm2784, 1, 0
      %v2817 = vsel %vm2785, 1, 0
      %v2818 = vsel %vm2786, 1, 0
      %v2819 = vsel %vm2787, 1, 0
      %v2820 = vsel %vm2788, 1, 0
      %v2821 = vsel %vm2789, 1, 0
      %v2822 = vsel %vm2790, 1, 0
      %v2823 = vsel %vm2791, 1, 0
      %v2824 = vsel %vm2792, 1, 0
      %v2825 = vsel %vm2793, 1, 0
      %v2826 = vsel %vm2794, 1, 0
      %v2827 = vsel %vm2795, 1, 0
      %v2828 = vsel %vm2796, 1, 0
      %v2829 = vsel %vm2797, 1, 0
      %v2830 = vsel %vm2798, 1, 0
      %v2831 = vsel %vm2799, 1, 0
      %v2832 = vsel %vm2800, 1, 0
      %v2833 = vsel %vm2801, 1, 0
      %v2834 = vsel %vm2802, 1, 0
      %v2835 = vsel %vm2803, 1, 0
      %v2836 = vsel %vm2804, 1, 0
      %v2837 = vsel %vm2805, 1, 0
      %v2838 = vsel %vm2806, 1, 0
      %v2839 = vsel %vm2807, 1, 0
      %v2840 = vsel %vm2808, 1, 0
      %v2841 = vsel %vm2809, 1, 0
      %v2842 = vsel %vm2810, 1, 0
      %v2843 = vsel %vm2811, 1, 0
      %v2844 = vsel %vm2812, 1, 0
      %v2845 = vsel %vm2813, 1, 0
      %v2846 = vsel %vm2814, 1, 0
      %v2847 = vsel %vm2815, 1, 0
      %v2848 = vcvt.s32.f32 %v2816
      %v2849 = vcvt.s32.f32 %v2817
      %v2850 = vcvt.s32.f32 %v2818
      %v2851 = vcvt.s32.f32 %v2819
      %v2852 = vcvt.s32.f32 %v2820
      %v2853 = vcvt.s32.f32 %v2821
      %v2854 = vcvt.s32.f32 %v2822
      %v2855 = vcvt.s32.f32 %v2823
      %v2856 = vcvt.s32.f32 %v2824
      %v2857 = vcvt.s32.f32 %v2825
      %v2858 = vcvt.s32.f32 %v2826
      %v2859 = vcvt.s32.f32 %v2827
      %v2860 = vcvt.s32.f32 %v2828
      %v2861 = vcvt.s32.f32 %v2829
      %v2862 = vcvt.s32.f32 %v2830
      %v2863 = vcvt.s32.f32 %v2831
      %v2864 = vcvt.s32.f32 %v2832
      %v2865 = vcvt.s32.f32 %v2833
      %v2866 = vcvt.s32.f32 %v2834
      %v2867 = vcvt.s32.f32 %v2835
      %v2868 = vcvt.s32.f32 %v2836
      %v2869 = vcvt.s32.f32 %v2837
      %v2870 = vcvt.s32.f32 %v2838
      %v2871 = vcvt.s32.f32 %v2839
      %v2872 = vcvt.s32.f32 %v2840
      %v2873 = vcvt.s32.f32 %v2841
      %v2874 = vcvt.s32.f32 %v2842
      %v2875 = vcvt.s32.f32 %v2843
      %v2876 = vcvt.s32.f32 %v2844
      %v2877 = vcvt.s32.f32 %v2845
      %v2878 = vcvt.s32.f32 %v2846
      %v2879 = vcvt.s32.f32 %v2847
      %vm2880 = vcmp.gt.f32.partialorder %v2848, 0.0
      %vm2881 = vcmp.gt.f32.partialorder %v2849, 0.0
      %vm2882 = vcmp.gt.f32.partialorder %v2850, 0.0
      %vm2883 = vcmp.gt.f32.partialorder %v2851, 0.0
      %vm2884 = vcmp.gt.f32.partialorder %v2852, 0.0
      %vm2885 = vcmp.gt.f32.partialorder %v2853, 0.0
      %vm2886 = vcmp.gt.f32.partialorder %v2854, 0.0
      %vm2887 = vcmp.gt.f32.partialorder %v2855, 0.0
      %vm2888 = vcmp.gt.f32.partialorder %v2856, 0.0
      %vm2889 = vcmp.gt.f32.partialorder %v2857, 0.0
      %vm2890 = vcmp.gt.f32.partialorder %v2858, 0.0
      %vm2891 = vcmp.gt.f32.partialorder %v2859, 0.0
      %vm2892 = vcmp.gt.f32.partialorder %v2860, 0.0
      %vm2893 = vcmp.gt.f32.partialorder %v2861, 0.0
      %vm2894 = vcmp.gt.f32.partialorder %v2862, 0.0
      %vm2895 = vcmp.gt.f32.partialorder %v2863, 0.0
      %vm2896 = vcmp.gt.f32.partialorder %v2864, 0.0
      %vm2897 = vcmp.gt.f32.partialorder %v2865, 0.0
      %vm2898 = vcmp.gt.f32.partialorder %v2866, 0.0
      %vm2899 = vcmp.gt.f32.partialorder %v2867, 0.0
      %vm2900 = vcmp.gt.f32.partialorder %v2868, 0.0
      %vm2901 = vcmp.gt.f32.partialorder %v2869, 0.0
      %vm2902 = vcmp.gt.f32.partialorder %v2870, 0.0
      %vm2903 = vcmp.gt.f32.partialorder %v2871, 0.0
      %vm2904 = vcmp.gt.f32.partialorder %v2872, 0.0
      %vm2905 = vcmp.gt.f32.partialorder %v2873, 0.0
      %vm2906 = vcmp.gt.f32.partialorder %v2874, 0.0
      %vm2907 = vcmp.gt.f32.partialorder %v2875, 0.0
      %vm2908 = vcmp.gt.f32.partialorder %v2876, 0.0
      %vm2909 = vcmp.gt.f32.partialorder %v2877, 0.0
      %vm2910 = vcmp.gt.f32.partialorder %v2878, 0.0
      %vm2911 = vcmp.gt.f32.partialorder %v2879, 0.0
      %v2912 = vsel %vm2880, 0.0, %v2752
      %v2913 = vsel %vm2881, 0.0, %v2753
      %v2914 = vsel %vm2882, 0.0, %v2754
      %v2915 = vsel %vm2883, 0.0, %v2755
      %v2916 = vsel %vm2884, 0.0, %v2756
      %v2917 = vsel %vm2885, 0.0, %v2757
      %v2918 = vsel %vm2886, 0.0, %v2758
      %v2919 = vsel %vm2887, 0.0, %v2759
      %v2920 = vsel %vm2888, 0.0, %v2760
      %v2921 = vsel %vm2889, 0.0, %v2761
      %v2922 = vsel %vm2890, 0.0, %v2762
      %v2923 = vsel %vm2891, 0.0, %v2763
      %v2924 = vsel %vm2892, 0.0, %v2764
      %v2925 = vsel %vm2893, 0.0, %v2765
      %v2926 = vsel %vm2894, 0.0, %v2766
      %v2927 = vsel %vm2895, 0.0, %v2767
      %v2928 = vsel %vm2896, 0.0, %v2768
      %v2929 = vsel %vm2897, 0.0, %v2769
      %v2930 = vsel %vm2898, 0.0, %v2770
      %v2931 = vsel %vm2899, 0.0, %v2771
      %v2932 = vsel %vm2900, 0.0, %v2772
      %v2933 = vsel %vm2901, 0.0, %v2773
      %v2934 = vsel %vm2902, 0.0, %v2774
      %v2935 = vsel %vm2903, 0.0, %v2775
      %v2936 = vsel %vm2904, 0.0, %v2776
      %v2937 = vsel %vm2905, 0.0, %v2777
      %v2938 = vsel %vm2906, 0.0, %v2778
      %v2939 = vsel %vm2907, 0.0, %v2779
      %v2940 = vsel %vm2908, 0.0, %v2780
      %v2941 = vsel %vm2909, 0.0, %v2781
      %v2942 = vsel %vm2910, 0.0, %v2782
      %v2943 = vsel %vm2911, 0.0, %v2783
      %v2944 = vpack.c.bf16 %v2849, %v2848
      %v2945 = vpack.c.bf16 %v2851, %v2850
      %v2946 = vpack.c.bf16 %v2853, %v2852
      %v2947 = vpack.c.bf16 %v2855, %v2854
      %v2948 = vpack.c.bf16 %v2857, %v2856
      %v2949 = vpack.c.bf16 %v2859, %v2858
      %v2950 = vpack.c.bf16 %v2861, %v2860
      %v2951 = vpack.c.bf16 %v2863, %v2862
      %v2952 = vpack.c.bf16 %v2865, %v2864
      %v2953 = vpack.c.bf16 %v2867, %v2866
      %v2954 = vpack.c.bf16 %v2869, %v2868
      %v2955 = vpack.c.bf16 %v2871, %v2870
      %v2956 = vpack.c.bf16 %v2873, %v2872
      %v2957 = vpack.c.bf16 %v2875, %v2874
      %v2958 = vpack.c.bf16 %v2877, %v2876
      %v2959 = vpack.c.bf16 %v2879, %v2878
      %v2976 = vunpack.c.l.b16 %v2944
      %v2977 = vunpack.c.h.b16 %v2944
      %v2978 = vunpack.c.l.b16 %v2945
      %v2979 = vunpack.c.h.b16 %v2945
      %v2980 = vunpack.c.l.b16 %v2946
      %v2981 = vunpack.c.h.b16 %v2946
      %v2982 = vunpack.c.l.b16 %v2947
      %v2983 = vunpack.c.h.b16 %v2947
      %v2984 = vunpack.c.l.b16 %v2948
      %v2985 = vunpack.c.h.b16 %v2948
      %v2986 = vunpack.c.l.b16 %v2949
      %v2987 = vunpack.c.h.b16 %v2949
      %v2988 = vunpack.c.l.b16 %v2950
      %v2989 = vunpack.c.h.b16 %v2950
      %v2990 = vunpack.c.l.b16 %v2951
      %v2991 = vunpack.c.h.b16 %v2951
      %v2992 = vunpack.c.l.b16 %v2952
      %v2993 = vunpack.c.h.b16 %v2952
      %v2994 = vunpack.c.l.b16 %v2953
      %v2995 = vunpack.c.h.b16 %v2953
      %v2996 = vunpack.c.l.b16 %v2954
      %v2997 = vunpack.c.h.b16 %v2954
      %v2998 = vunpack.c.l.b16 %v2955
      %v2999 = vunpack.c.h.b16 %v2955
      %v3000 = vunpack.c.l.b16 %v2956
      %v3001 = vunpack.c.h.b16 %v2956
      %v3002 = vunpack.c.l.b16 %v2957
      %v3003 = vunpack.c.h.b16 %v2957
      %v3004 = vunpack.c.l.b16 %v2958
      %v3005 = vunpack.c.h.b16 %v2958
      %v3006 = vunpack.c.l.b16 %v2959
      %v3007 = vunpack.c.h.b16 %v2959
      %v3008 = vpack.c.b16 %v2976, %v2976
      %v3009 = vpack.c.b16 %v2977, %v2977
      %v3010 = vpack.c.b16 %v2978, %v2978
      %v3011 = vpack.c.b16 %v2979, %v2979
      %v3012 = vpack.c.b16 %v2980, %v2980
      %v3013 = vpack.c.b16 %v2981, %v2981
      %v3014 = vpack.c.b16 %v2982, %v2982
      %v3015 = vpack.c.b16 %v2983, %v2983
      %v3016 = vpack.c.b16 %v2984, %v2984
      %v3017 = vpack.c.b16 %v2985, %v2985
      %v3018 = vpack.c.b16 %v2986, %v2986
      %v3019 = vpack.c.b16 %v2987, %v2987
      %v3020 = vpack.c.b16 %v2988, %v2988
      %v3021 = vpack.c.b16 %v2989, %v2989
      %v3022 = vpack.c.b16 %v2990, %v2990
      %v3023 = vpack.c.b16 %v2991, %v2991
      %v3024 = vpack.c.b16 %v2992, %v2992
      %v3025 = vpack.c.b16 %v2993, %v2993
      %v3026 = vpack.c.b16 %v2994, %v2994
      %v3027 = vpack.c.b16 %v2995, %v2995
      %v3028 = vpack.c.b16 %v2996, %v2996
      %v3029 = vpack.c.b16 %v2997, %v2997
      %v3030 = vpack.c.b16 %v2998, %v2998
      %v3031 = vpack.c.b16 %v2999, %v2999
      %v3032 = vpack.c.b16 %v3000, %v3000
      %v3033 = vpack.c.b16 %v3001, %v3001
      %v3034 = vpack.c.b16 %v3002, %v3002
      %v3035 = vpack.c.b16 %v3003, %v3003
      %v3036 = vpack.c.b16 %v3004, %v3004
      %v3037 = vpack.c.b16 %v3005, %v3005
      %v3038 = vpack.c.b16 %v3006, %v3006
      %v3039 = vpack.c.b16 %v3007, %v3007
      %s3072 = scalar_lea.vmem %s198, 640
      %3073 = vst [vmem:[%s3072] sm:$0xf] %v3008
      %3074 = vst [vmem:[%s3072 + $0x4] sm:$0xf] %v3009
      %3075 = vst [vmem:[%s3072 + $0x8] sm:$0xf] %v3010
      %3076 = vst [vmem:[%s3072 + $0xc] sm:$0xf] %v3011
      %3077 = vst [vmem:[%s3072 + $0x10] sm:$0xf] %v3012
      %3078 = vst [vmem:[%s3072 + $0x14] sm:$0xf] %v3013
      %3079 = vst [vmem:[%s3072 + $0x18] sm:$0xf] %v3014
      %3080 = vst [vmem:[%s3072 + $0x1c] sm:$0xf] %v3015
      %3081 = vst [vmem:[%s3072 + $0x20] sm:$0xf] %v3016
      %3082 = vst [vmem:[%s3072 + $0x24] sm:$0xf] %v3017
      %3083 = vst [vmem:[%s3072 + $0x28] sm:$0xf] %v3018
      %3084 = vst [vmem:[%s3072 + $0x2c] sm:$0xf] %v3019
      %3085 = vst [vmem:[%s3072 + $0x30] sm:$0xf] %v3020
      %3086 = vst [vmem:[%s3072 + $0x34] sm:$0xf] %v3021
      %3087 = vst [vmem:[%s3072 + $0x38] sm:$0xf] %v3022
      %3088 = vst [vmem:[%s3072 + $0x3c] sm:$0xf] %v3023
      %3089 = vst [vmem:[%s3072 + $0x40] sm:$0xf] %v3024
      %3090 = vst [vmem:[%s3072 + $0x44] sm:$0xf] %v3025
      %3091 = vst [vmem:[%s3072 + $0x48] sm:$0xf] %v3026
      %3092 = vst [vmem:[%s3072 + $0x4c] sm:$0xf] %v3027
      %3093 = vst [vmem:[%s3072 + $0x50] sm:$0xf] %v3028
      %3094 = vst [vmem:[%s3072 + $0x54] sm:$0xf] %v3029
      %3095 = vst [vmem:[%s3072 + $0x58] sm:$0xf] %v3030
      %3096 = vst [vmem:[%s3072 + $0x5c] sm:$0xf] %v3031
      %3097 = vst [vmem:[%s3072 + $0x60] sm:$0xf] %v3032
      %3098 = vst [vmem:[%s3072 + $0x64] sm:$0xf] %v3033
      %3099 = vst [vmem:[%s3072 + $0x68] sm:$0xf] %v3034
      %3100 = vst [vmem:[%s3072 + $0x6c] sm:$0xf] %v3035
      %3101 = vst [vmem:[%s3072 + $0x70] sm:$0xf] %v3036
      %3102 = vst [vmem:[%s3072 + $0x74] sm:$0xf] %v3037
      %3103 = vst [vmem:[%s3072 + $0x78] sm:$0xf] %v3038
      %3104 = vst [vmem:[%s3072 + $0x7c] sm:$0xf] %v3039
      %v3105 = vmul.f32 %v2912, 0.3
      %v3106 = vmul.f32 %v2913, 0.3
      %v3107 = vmul.f32 %v2914, 0.3
      %v3108 = vmul.f32 %v2915, 0.3
      %v3109 = vmul.f32 %v2916, 0.3
      %v3110 = vmul.f32 %v2917, 0.3
      %v3111 = vmul.f32 %v2918, 0.3
      %v3112 = vmul.f32 %v2919, 0.3
      %v3113 = vmul.f32 %v2920, 0.3
      %v3114 = vmul.f32 %v2921, 0.3
      %v3115 = vmul.f32 %v2922, 0.3
      %v3116 = vmul.f32 %v2923, 0.3
      %v3117 = vmul.f32 %v2924, 0.3
      %v3118 = vmul.f32 %v2925, 0.3
      %v3119 = vmul.f32 %v2926, 0.3
      %v3120 = vmul.f32 %v2927, 0.3
      %v3121 = vmul.f32 %v2928, 0.3
      %v3122 = vmul.f32 %v2929, 0.3
      %v3123 = vmul.f32 %v2930, 0.3
      %v3124 = vmul.f32 %v2931, 0.3
      %v3125 = vmul.f32 %v2932, 0.3
      %v3126 = vmul.f32 %v2933, 0.3
      %v3127 = vmul.f32 %v2934, 0.3
      %v3128 = vmul.f32 %v2935, 0.3
      %v3129 = vmul.f32 %v2936, 0.3
      %v3130 = vmul.f32 %v2937, 0.3
      %v3131 = vmul.f32 %v2938, 0.3
      %v3132 = vmul.f32 %v2939, 0.3
      %v3133 = vmul.f32 %v2940, 0.3
      %v3134 = vmul.f32 %v2941, 0.3
      %v3135 = vmul.f32 %v2942, 0.3
      %v3136 = vmul.f32 %v2943, 0.3
      %s3137 = scalar_lea.vmem %s188, 768
      %v3138 = vld [vmem:[%s3137] sm:$0xf]
      %v3139 = vld [vmem:[%s3137 + $0x4] sm:$0xf]
      %v3140 = vld [vmem:[%s3137 + $0x8] sm:$0xf]
      %v3141 = vld [vmem:[%s3137 + $0xc] sm:$0xf]
      %v3142 = vld [vmem:[%s3137 + $0x10] sm:$0xf]
      %v3143 = vld [vmem:[%s3137 + $0x14] sm:$0xf]
      %v3144 = vld [vmem:[%s3137 + $0x18] sm:$0xf]
      %v3145 = vld [vmem:[%s3137 + $0x1c] sm:$0xf]
      %v3146 = vld [vmem:[%s3137 + $0x20] sm:$0xf]
      %v3147 = vld [vmem:[%s3137 + $0x24] sm:$0xf]
      %v3148 = vld [vmem:[%s3137 + $0x28] sm:$0xf]
      %v3149 = vld [vmem:[%s3137 + $0x2c] sm:$0xf]
      %v3150 = vld [vmem:[%s3137 + $0x30] sm:$0xf]
      %v3151 = vld [vmem:[%s3137 + $0x34] sm:$0xf]
      %v3152 = vld [vmem:[%s3137 + $0x38] sm:$0xf]
      %v3153 = vld [vmem:[%s3137 + $0x3c] sm:$0xf]
      %v3154 = vld [vmem:[%s3137 + $0x40] sm:$0xf]
      %v3155 = vld [vmem:[%s3137 + $0x44] sm:$0xf]
      %v3156 = vld [vmem:[%s3137 + $0x48] sm:$0xf]
      %v3157 = vld [vmem:[%s3137 + $0x4c] sm:$0xf]
      %v3158 = vld [vmem:[%s3137 + $0x50] sm:$0xf]
      %v3159 = vld [vmem:[%s3137 + $0x54] sm:$0xf]
      %v3160 = vld [vmem:[%s3137 + $0x58] sm:$0xf]
      %v3161 = vld [vmem:[%s3137 + $0x5c] sm:$0xf]
      %v3162 = vld [vmem:[%s3137 + $0x60] sm:$0xf]
      %v3163 = vld [vmem:[%s3137 + $0x64] sm:$0xf]
      %v3164 = vld [vmem:[%s3137 + $0x68] sm:$0xf]
      %v3165 = vld [vmem:[%s3137 + $0x6c] sm:$0xf]
      %v3166 = vld [vmem:[%s3137 + $0x70] sm:$0xf]
      %v3167 = vld [vmem:[%s3137 + $0x74] sm:$0xf]
      %v3168 = vld [vmem:[%s3137 + $0x78] sm:$0xf]
      %v3169 = vld [vmem:[%s3137 + $0x7c] sm:$0xf]
      %v3170 = vunpack.c.l.bf16 %v3138
      %v3171 = vunpack.c.l.bf16 %v3139
      %v3172 = vunpack.c.l.bf16 %v3140
      %v3173 = vunpack.c.l.bf16 %v3141
      %v3174 = vunpack.c.l.bf16 %v3142
      %v3175 = vunpack.c.l.bf16 %v3143
      %v3176 = vunpack.c.l.bf16 %v3144
      %v3177 = vunpack.c.l.bf16 %v3145
      %v3178 = vunpack.c.l.bf16 %v3146
      %v3179 = vunpack.c.l.bf16 %v3147
      %v3180 = vunpack.c.l.bf16 %v3148
      %v3181 = vunpack.c.l.bf16 %v3149
      %v3182 = vunpack.c.l.bf16 %v3150
      %v3183 = vunpack.c.l.bf16 %v3151
      %v3184 = vunpack.c.l.bf16 %v3152
      %v3185 = vunpack.c.l.bf16 %v3153
      %v3186 = vunpack.c.l.bf16 %v3154
      %v3187 = vunpack.c.l.bf16 %v3155
      %v3188 = vunpack.c.l.bf16 %v3156
      %v3189 = vunpack.c.l.bf16 %v3157
      %v3190 = vunpack.c.l.bf16 %v3158
      %v3191 = vunpack.c.l.bf16 %v3159
      %v3192 = vunpack.c.l.bf16 %v3160
      %v3193 = vunpack.c.l.bf16 %v3161
      %v3194 = vunpack.c.l.bf16 %v3162
      %v3195 = vunpack.c.l.bf16 %v3163
      %v3196 = vunpack.c.l.bf16 %v3164
      %v3197 = vunpack.c.l.bf16 %v3165
      %v3198 = vunpack.c.l.bf16 %v3166
      %v3199 = vunpack.c.l.bf16 %v3167
      %v3200 = vunpack.c.l.bf16 %v3168
      %v3201 = vunpack.c.l.bf16 %v3169
      %s3202 = scalar_lea.vmem %s179, 6
      %v3203 = vld [vmem:[%s3202] sm:$0x1]
      %v3205 = vlaneseq
      %v3206 = vshrl.u32 %v3205, 7
      %v3207 = vsub.s32 0, %v3206
      %v3208 = vrot.slane %v3203, %v3207
      %v3210 = vmul.f32 %v3170, %v3208
      %v3211 = vmul.f32 %v3171, %v3208
      %v3212 = vmul.f32 %v3172, %v3208
      %v3213 = vmul.f32 %v3173, %v3208
      %v3214 = vmul.f32 %v3174, %v3208
      %v3215 = vmul.f32 %v3175, %v3208
      %v3216 = vmul.f32 %v3176, %v3208
      %v3217 = vmul.f32 %v3177, %v3208
      %v3218 = vmul.f32 %v3178, %v3208
      %v3219 = vmul.f32 %v3179, %v3208
      %v3220 = vmul.f32 %v3180, %v3208
      %v3221 = vmul.f32 %v3181, %v3208
      %v3222 = vmul.f32 %v3182, %v3208
      %v3223 = vmul.f32 %v3183, %v3208
      %v3224 = vmul.f32 %v3184, %v3208
      %v3225 = vmul.f32 %v3185, %v3208
      %v3226 = vmul.f32 %v3186, %v3208
      %v3227 = vmul.f32 %v3187, %v3208
      %v3228 = vmul.f32 %v3188, %v3208
      %v3229 = vmul.f32 %v3189, %v3208
      %v3230 = vmul.f32 %v3190, %v3208
      %v3231 = vmul.f32 %v3191, %v3208
      %v3232 = vmul.f32 %v3192, %v3208
      %v3233 = vmul.f32 %v3193, %v3208
      %v3234 = vmul.f32 %v3194, %v3208
      %v3235 = vmul.f32 %v3195, %v3208
      %v3236 = vmul.f32 %v3196, %v3208
      %v3237 = vmul.f32 %v3197, %v3208
      %v3238 = vmul.f32 %v3198, %v3208
      %v3239 = vmul.f32 %v3199, %v3208
      %v3240 = vmul.f32 %v3200, %v3208
      %v3241 = vmul.f32 %v3201, %v3208
      %v3242 = vadd.f32 %v3105, %v3210
      %v3243 = vadd.f32 %v3106, %v3211
      %v3244 = vadd.f32 %v3107, %v3212
      %v3245 = vadd.f32 %v3108, %v3213
      %v3246 = vadd.f32 %v3109, %v3214
      %v3247 = vadd.f32 %v3110, %v3215
      %v3248 = vadd.f32 %v3111, %v3216
      %v3249 = vadd.f32 %v3112, %v3217
      %v3250 = vadd.f32 %v3113, %v3218
      %v3251 = vadd.f32 %v3114, %v3219
      %v3252 = vadd.f32 %v3115, %v3220
      %v3253 = vadd.f32 %v3116, %v3221
      %v3254 = vadd.f32 %v3117, %v3222
      %v3255 = vadd.f32 %v3118, %v3223
      %v3256 = vadd.f32 %v3119, %v3224
      %v3257 = vadd.f32 %v3120, %v3225
      %v3258 = vadd.f32 %v3121, %v3226
      %v3259 = vadd.f32 %v3122, %v3227
      %v3260 = vadd.f32 %v3123, %v3228
      %v3261 = vadd.f32 %v3124, %v3229
      %v3262 = vadd.f32 %v3125, %v3230
      %v3263 = vadd.f32 %v3126, %v3231
      %v3264 = vadd.f32 %v3127, %v3232
      %v3265 = vadd.f32 %v3128, %v3233
      %v3266 = vadd.f32 %v3129, %v3234
      %v3267 = vadd.f32 %v3130, %v3235
      %v3268 = vadd.f32 %v3131, %v3236
      %v3269 = vadd.f32 %v3132, %v3237
      %v3270 = vadd.f32 %v3133, %v3238
      %v3271 = vadd.f32 %v3134, %v3239
      %v3272 = vadd.f32 %v3135, %v3240
      %v3273 = vadd.f32 %v3136, %v3241
      %vm3274 = vcmp.ge.f32.partialorder %v3242, 0.3
      %vm3275 = vcmp.ge.f32.partialorder %v3243, 0.3
      %vm3276 = vcmp.ge.f32.partialorder %v3244, 0.3
      %vm3277 = vcmp.ge.f32.partialorder %v3245, 0.3
      %vm3278 = vcmp.ge.f32.partialorder %v3246, 0.3
      %vm3279 = vcmp.ge.f32.partialorder %v3247, 0.3
      %vm3280 = vcmp.ge.f32.partialorder %v3248, 0.3
      %vm3281 = vcmp.ge.f32.partialorder %v3249, 0.3
      %vm3282 = vcmp.ge.f32.partialorder %v3250, 0.3
      %vm3283 = vcmp.ge.f32.partialorder %v3251, 0.3
      %vm3284 = vcmp.ge.f32.partialorder %v3252, 0.3
      %vm3285 = vcmp.ge.f32.partialorder %v3253, 0.3
      %vm3286 = vcmp.ge.f32.partialorder %v3254, 0.3
      %vm3287 = vcmp.ge.f32.partialorder %v3255, 0.3
      %vm3288 = vcmp.ge.f32.partialorder %v3256, 0.3
      %vm3289 = vcmp.ge.f32.partialorder %v3257, 0.3
      %vm3290 = vcmp.ge.f32.partialorder %v3258, 0.3
      %vm3291 = vcmp.ge.f32.partialorder %v3259, 0.3
      %vm3292 = vcmp.ge.f32.partialorder %v3260, 0.3
      %vm3293 = vcmp.ge.f32.partialorder %v3261, 0.3
      %vm3294 = vcmp.ge.f32.partialorder %v3262, 0.3
      %vm3295 = vcmp.ge.f32.partialorder %v3263, 0.3
      %vm3296 = vcmp.ge.f32.partialorder %v3264, 0.3
      %vm3297 = vcmp.ge.f32.partialorder %v3265, 0.3
      %vm3298 = vcmp.ge.f32.partialorder %v3266, 0.3
      %vm3299 = vcmp.ge.f32.partialorder %v3267, 0.3
      %vm3300 = vcmp.ge.f32.partialorder %v3268, 0.3
      %vm3301 = vcmp.ge.f32.partialorder %v3269, 0.3
      %vm3302 = vcmp.ge.f32.partialorder %v3270, 0.3
      %vm3303 = vcmp.ge.f32.partialorder %v3271, 0.3
      %vm3304 = vcmp.ge.f32.partialorder %v3272, 0.3
      %vm3305 = vcmp.ge.f32.partialorder %v3273, 0.3
      %v3306 = vsel %vm3274, 1, 0
      %v3307 = vsel %vm3275, 1, 0
      %v3308 = vsel %vm3276, 1, 0
      %v3309 = vsel %vm3277, 1, 0
      %v3310 = vsel %vm3278, 1, 0
      %v3311 = vsel %vm3279, 1, 0
      %v3312 = vsel %vm3280, 1, 0
      %v3313 = vsel %vm3281, 1, 0
      %v3314 = vsel %vm3282, 1, 0
      %v3315 = vsel %vm3283, 1, 0
      %v3316 = vsel %vm3284, 1, 0
      %v3317 = vsel %vm3285, 1, 0
      %v3318 = vsel %vm3286, 1, 0
      %v3319 = vsel %vm3287, 1, 0
      %v3320 = vsel %vm3288, 1, 0
      %v3321 = vsel %vm3289, 1, 0
      %v3322 = vsel %vm3290, 1, 0
      %v3323 = vsel %vm3291, 1, 0
      %v3324 = vsel %vm3292, 1, 0
      %v3325 = vsel %vm3293, 1, 0
      %v3326 = vsel %vm3294, 1, 0
      %v3327 = vsel %vm3295, 1, 0
      %v3328 = vsel %vm3296, 1, 0
      %v3329 = vsel %vm3297, 1, 0
      %v3330 = vsel %vm3298, 1, 0
      %v3331 = vsel %vm3299, 1, 0
      %v3332 = vsel %vm3300, 1, 0
      %v3333 = vsel %vm3301, 1, 0
      %v3334 = vsel %vm3302, 1, 0
      %v3335 = vsel %vm3303, 1, 0
      %v3336 = vsel %vm3304, 1, 0
      %v3337 = vsel %vm3305, 1, 0
      %v3338 = vcvt.s32.f32 %v3306
      %v3339 = vcvt.s32.f32 %v3307
      %v3340 = vcvt.s32.f32 %v3308
      %v3341 = vcvt.s32.f32 %v3309
      %v3342 = vcvt.s32.f32 %v3310
      %v3343 = vcvt.s32.f32 %v3311
      %v3344 = vcvt.s32.f32 %v3312
      %v3345 = vcvt.s32.f32 %v3313
      %v3346 = vcvt.s32.f32 %v3314
      %v3347 = vcvt.s32.f32 %v3315
      %v3348 = vcvt.s32.f32 %v3316
      %v3349 = vcvt.s32.f32 %v3317
      %v3350 = vcvt.s32.f32 %v3318
      %v3351 = vcvt.s32.f32 %v3319
      %v3352 = vcvt.s32.f32 %v3320
      %v3353 = vcvt.s32.f32 %v3321
      %v3354 = vcvt.s32.f32 %v3322
      %v3355 = vcvt.s32.f32 %v3323
      %v3356 = vcvt.s32.f32 %v3324
      %v3357 = vcvt.s32.f32 %v3325
      %v3358 = vcvt.s32.f32 %v3326
      %v3359 = vcvt.s32.f32 %v3327
      %v3360 = vcvt.s32.f32 %v3328
      %v3361 = vcvt.s32.f32 %v3329
      %v3362 = vcvt.s32.f32 %v3330
      %v3363 = vcvt.s32.f32 %v3331
      %v3364 = vcvt.s32.f32 %v3332
      %v3365 = vcvt.s32.f32 %v3333
      %v3366 = vcvt.s32.f32 %v3334
      %v3367 = vcvt.s32.f32 %v3335
      %v3368 = vcvt.s32.f32 %v3336
      %v3369 = vcvt.s32.f32 %v3337
      %vm3370 = vcmp.gt.f32.partialorder %v3338, 0.0
      %vm3371 = vcmp.gt.f32.partialorder %v3339, 0.0
      %vm3372 = vcmp.gt.f32.partialorder %v3340, 0.0
      %vm3373 = vcmp.gt.f32.partialorder %v3341, 0.0
      %vm3374 = vcmp.gt.f32.partialorder %v3342, 0.0
      %vm3375 = vcmp.gt.f32.partialorder %v3343, 0.0
      %vm3376 = vcmp.gt.f32.partialorder %v3344, 0.0
      %vm3377 = vcmp.gt.f32.partialorder %v3345, 0.0
      %vm3378 = vcmp.gt.f32.partialorder %v3346, 0.0
      %vm3379 = vcmp.gt.f32.partialorder %v3347, 0.0
      %vm3380 = vcmp.gt.f32.partialorder %v3348, 0.0
      %vm3381 = vcmp.gt.f32.partialorder %v3349, 0.0
      %vm3382 = vcmp.gt.f32.partialorder %v3350, 0.0
      %vm3383 = vcmp.gt.f32.partialorder %v3351, 0.0
      %vm3384 = vcmp.gt.f32.partialorder %v3352, 0.0
      %vm3385 = vcmp.gt.f32.partialorder %v3353, 0.0
      %vm3386 = vcmp.gt.f32.partialorder %v3354, 0.0
      %vm3387 = vcmp.gt.f32.partialorder %v3355, 0.0
      %vm3388 = vcmp.gt.f32.partialorder %v3356, 0.0
      %vm3389 = vcmp.gt.f32.partialorder %v3357, 0.0
      %vm3390 = vcmp.gt.f32.partialorder %v3358, 0.0
      %vm3391 = vcmp.gt.f32.partialorder %v3359, 0.0
      %vm3392 = vcmp.gt.f32.partialorder %v3360, 0.0
      %vm3393 = vcmp.gt.f32.partialorder %v3361, 0.0
      %vm3394 = vcmp.gt.f32.partialorder %v3362, 0.0
      %vm3395 = vcmp.gt.f32.partialorder %v3363, 0.0
      %vm3396 = vcmp.gt.f32.partialorder %v3364, 0.0
      %vm3397 = vcmp.gt.f32.partialorder %v3365, 0.0
      %vm3398 = vcmp.gt.f32.partialorder %v3366, 0.0
      %vm3399 = vcmp.gt.f32.partialorder %v3367, 0.0
      %vm3400 = vcmp.gt.f32.partialorder %v3368, 0.0
      %vm3401 = vcmp.gt.f32.partialorder %v3369, 0.0
      %v3402 = vsel %vm3370, 0.0, %v3242
      %v3403 = vsel %vm3371, 0.0, %v3243
      %v3404 = vsel %vm3372, 0.0, %v3244
      %v3405 = vsel %vm3373, 0.0, %v3245
      %v3406 = vsel %vm3374, 0.0, %v3246
      %v3407 = vsel %vm3375, 0.0, %v3247
      %v3408 = vsel %vm3376, 0.0, %v3248
      %v3409 = vsel %vm3377, 0.0, %v3249
      %v3410 = vsel %vm3378, 0.0, %v3250
      %v3411 = vsel %vm3379, 0.0, %v3251
      %v3412 = vsel %vm3380, 0.0, %v3252
      %v3413 = vsel %vm3381, 0.0, %v3253
      %v3414 = vsel %vm3382, 0.0, %v3254
      %v3415 = vsel %vm3383, 0.0, %v3255
      %v3416 = vsel %vm3384, 0.0, %v3256
      %v3417 = vsel %vm3385, 0.0, %v3257
      %v3418 = vsel %vm3386, 0.0, %v3258
      %v3419 = vsel %vm3387, 0.0, %v3259
      %v3420 = vsel %vm3388, 0.0, %v3260
      %v3421 = vsel %vm3389, 0.0, %v3261
      %v3422 = vsel %vm3390, 0.0, %v3262
      %v3423 = vsel %vm3391, 0.0, %v3263
      %v3424 = vsel %vm3392, 0.0, %v3264
      %v3425 = vsel %vm3393, 0.0, %v3265
      %v3426 = vsel %vm3394, 0.0, %v3266
      %v3427 = vsel %vm3395, 0.0, %v3267
      %v3428 = vsel %vm3396, 0.0, %v3268
      %v3429 = vsel %vm3397, 0.0, %v3269
      %v3430 = vsel %vm3398, 0.0, %v3270
      %v3431 = vsel %vm3399, 0.0, %v3271
      %v3432 = vsel %vm3400, 0.0, %v3272
      %v3433 = vsel %vm3401, 0.0, %v3273
      %v3434 = vpack.c.bf16 %v3339, %v3338
      %v3435 = vpack.c.bf16 %v3341, %v3340
      %v3436 = vpack.c.bf16 %v3343, %v3342
      %v3437 = vpack.c.bf16 %v3345, %v3344
      %v3438 = vpack.c.bf16 %v3347, %v3346
      %v3439 = vpack.c.bf16 %v3349, %v3348
      %v3440 = vpack.c.bf16 %v3351, %v3350
      %v3441 = vpack.c.bf16 %v3353, %v3352
      %v3442 = vpack.c.bf16 %v3355, %v3354
      %v3443 = vpack.c.bf16 %v3357, %v3356
      %v3444 = vpack.c.bf16 %v3359, %v3358
      %v3445 = vpack.c.bf16 %v3361, %v3360
      %v3446 = vpack.c.bf16 %v3363, %v3362
      %v3447 = vpack.c.bf16 %v3365, %v3364
      %v3448 = vpack.c.bf16 %v3367, %v3366
      %v3449 = vpack.c.bf16 %v3369, %v3368
      %v3466 = vunpack.c.l.b16 %v3434
      %v3467 = vunpack.c.h.b16 %v3434
      %v3468 = vunpack.c.l.b16 %v3435
      %v3469 = vunpack.c.h.b16 %v3435
      %v3470 = vunpack.c.l.b16 %v3436
      %v3471 = vunpack.c.h.b16 %v3436
      %v3472 = vunpack.c.l.b16 %v3437
      %v3473 = vunpack.c.h.b16 %v3437
      %v3474 = vunpack.c.l.b16 %v3438
      %v3475 = vunpack.c.h.b16 %v3438
      %v3476 = vunpack.c.l.b16 %v3439
      %v3477 = vunpack.c.h.b16 %v3439
      %v3478 = vunpack.c.l.b16 %v3440
      %v3479 = vunpack.c.h.b16 %v3440
      %v3480 = vunpack.c.l.b16 %v3441
      %v3481 = vunpack.c.h.b16 %v3441
      %v3482 = vunpack.c.l.b16 %v3442
      %v3483 = vunpack.c.h.b16 %v3442
      %v3484 = vunpack.c.l.b16 %v3443
      %v3485 = vunpack.c.h.b16 %v3443
      %v3486 = vunpack.c.l.b16 %v3444
      %v3487 = vunpack.c.h.b16 %v3444
      %v3488 = vunpack.c.l.b16 %v3445
      %v3489 = vunpack.c.h.b16 %v3445
      %v3490 = vunpack.c.l.b16 %v3446
      %v3491 = vunpack.c.h.b16 %v3446
      %v3492 = vunpack.c.l.b16 %v3447
      %v3493 = vunpack.c.h.b16 %v3447
      %v3494 = vunpack.c.l.b16 %v3448
      %v3495 = vunpack.c.h.b16 %v3448
      %v3496 = vunpack.c.l.b16 %v3449
      %v3497 = vunpack.c.h.b16 %v3449
      %v3498 = vpack.c.b16 %v3466, %v3466
      %v3499 = vpack.c.b16 %v3467, %v3467
      %v3500 = vpack.c.b16 %v3468, %v3468
      %v3501 = vpack.c.b16 %v3469, %v3469
      %v3502 = vpack.c.b16 %v3470, %v3470
      %v3503 = vpack.c.b16 %v3471, %v3471
      %v3504 = vpack.c.b16 %v3472, %v3472
      %v3505 = vpack.c.b16 %v3473, %v3473
      %v3506 = vpack.c.b16 %v3474, %v3474
      %v3507 = vpack.c.b16 %v3475, %v3475
      %v3508 = vpack.c.b16 %v3476, %v3476
      %v3509 = vpack.c.b16 %v3477, %v3477
      %v3510 = vpack.c.b16 %v3478, %v3478
      %v3511 = vpack.c.b16 %v3479, %v3479
      %v3512 = vpack.c.b16 %v3480, %v3480
      %v3513 = vpack.c.b16 %v3481, %v3481
      %v3514 = vpack.c.b16 %v3482, %v3482
      %v3515 = vpack.c.b16 %v3483, %v3483
      %v3516 = vpack.c.b16 %v3484, %v3484
      %v3517 = vpack.c.b16 %v3485, %v3485
      %v3518 = vpack.c.b16 %v3486, %v3486
      %v3519 = vpack.c.b16 %v3487, %v3487
      %v3520 = vpack.c.b16 %v3488, %v3488
      %v3521 = vpack.c.b16 %v3489, %v3489
      %v3522 = vpack.c.b16 %v3490, %v3490
      %v3523 = vpack.c.b16 %v3491, %v3491
      %v3524 = vpack.c.b16 %v3492, %v3492
      %v3525 = vpack.c.b16 %v3493, %v3493
      %v3526 = vpack.c.b16 %v3494, %v3494
      %v3527 = vpack.c.b16 %v3495, %v3495
      %v3528 = vpack.c.b16 %v3496, %v3496
      %v3529 = vpack.c.b16 %v3497, %v3497
      %s3562 = scalar_lea.vmem %s198, 768
      %3563 = vst [vmem:[%s3562] sm:$0xf] %v3498
      %3564 = vst [vmem:[%s3562 + $0x4] sm:$0xf] %v3499
      %3565 = vst [vmem:[%s3562 + $0x8] sm:$0xf] %v3500
      %3566 = vst [vmem:[%s3562 + $0xc] sm:$0xf] %v3501
      %3567 = vst [vmem:[%s3562 + $0x10] sm:$0xf] %v3502
      %3568 = vst [vmem:[%s3562 + $0x14] sm:$0xf] %v3503
      %3569 = vst [vmem:[%s3562 + $0x18] sm:$0xf] %v3504
      %3570 = vst [vmem:[%s3562 + $0x1c] sm:$0xf] %v3505
      %3571 = vst [vmem:[%s3562 + $0x20] sm:$0xf] %v3506
      %3572 = vst [vmem:[%s3562 + $0x24] sm:$0xf] %v3507
      %3573 = vst [vmem:[%s3562 + $0x28] sm:$0xf] %v3508
      %3574 = vst [vmem:[%s3562 + $0x2c] sm:$0xf] %v3509
      %3575 = vst [vmem:[%s3562 + $0x30] sm:$0xf] %v3510
      %3576 = vst [vmem:[%s3562 + $0x34] sm:$0xf] %v3511
      %3577 = vst [vmem:[%s3562 + $0x38] sm:$0xf] %v3512
      %3578 = vst [vmem:[%s3562 + $0x3c] sm:$0xf] %v3513
      %3579 = vst [vmem:[%s3562 + $0x40] sm:$0xf] %v3514
      %3580 = vst [vmem:[%s3562 + $0x44] sm:$0xf] %v3515
      %3581 = vst [vmem:[%s3562 + $0x48] sm:$0xf] %v3516
      %3582 = vst [vmem:[%s3562 + $0x4c] sm:$0xf] %v3517
      %3583 = vst [vmem:[%s3562 + $0x50] sm:$0xf] %v3518
      %3584 = vst [vmem:[%s3562 + $0x54] sm:$0xf] %v3519
      %3585 = vst [vmem:[%s3562 + $0x58] sm:$0xf] %v3520
      %3586 = vst [vmem:[%s3562 + $0x5c] sm:$0xf] %v3521
      %3587 = vst [vmem:[%s3562 + $0x60] sm:$0xf] %v3522
      %3588 = vst [vmem:[%s3562 + $0x64] sm:$0xf] %v3523
      %3589 = vst [vmem:[%s3562 + $0x68] sm:$0xf] %v3524
      %3590 = vst [vmem:[%s3562 + $0x6c] sm:$0xf] %v3525
      %3591 = vst [vmem:[%s3562 + $0x70] sm:$0xf] %v3526
      %3592 = vst [vmem:[%s3562 + $0x74] sm:$0xf] %v3527
      %3593 = vst [vmem:[%s3562 + $0x78] sm:$0xf] %v3528
      %3594 = vst [vmem:[%s3562 + $0x7c] sm:$0xf] %v3529
      %v3595 = vmul.f32 %v3402, 0.3
      %v3596 = vmul.f32 %v3403, 0.3
      %v3597 = vmul.f32 %v3404, 0.3
      %v3598 = vmul.f32 %v3405, 0.3
      %v3599 = vmul.f32 %v3406, 0.3
      %v3600 = vmul.f32 %v3407, 0.3
      %v3601 = vmul.f32 %v3408, 0.3
      %v3602 = vmul.f32 %v3409, 0.3
      %v3603 = vmul.f32 %v3410, 0.3
      %v3604 = vmul.f32 %v3411, 0.3
      %v3605 = vmul.f32 %v3412, 0.3
      %v3606 = vmul.f32 %v3413, 0.3
      %v3607 = vmul.f32 %v3414, 0.3
      %v3608 = vmul.f32 %v3415, 0.3
      %v3609 = vmul.f32 %v3416, 0.3
      %v3610 = vmul.f32 %v3417, 0.3
      %v3611 = vmul.f32 %v3418, 0.3
      %v3612 = vmul.f32 %v3419, 0.3
      %v3613 = vmul.f32 %v3420, 0.3
      %v3614 = vmul.f32 %v3421, 0.3
      %v3615 = vmul.f32 %v3422, 0.3
      %v3616 = vmul.f32 %v3423, 0.3
      %v3617 = vmul.f32 %v3424, 0.3
      %v3618 = vmul.f32 %v3425, 0.3
      %v3619 = vmul.f32 %v3426, 0.3
      %v3620 = vmul.f32 %v3427, 0.3
      %v3621 = vmul.f32 %v3428, 0.3
      %v3622 = vmul.f32 %v3429, 0.3
      %v3623 = vmul.f32 %v3430, 0.3
      %v3624 = vmul.f32 %v3431, 0.3
      %v3625 = vmul.f32 %v3432, 0.3
      %v3626 = vmul.f32 %v3433, 0.3
      %s3627 = scalar_lea.vmem %s188, 896
      %v3628 = vld [vmem:[%s3627] sm:$0xf]
      %v3629 = vld [vmem:[%s3627 + $0x4] sm:$0xf]
      %v3630 = vld [vmem:[%s3627 + $0x8] sm:$0xf]
      %v3631 = vld [vmem:[%s3627 + $0xc] sm:$0xf]
      %v3632 = vld [vmem:[%s3627 + $0x10] sm:$0xf]
      %v3633 = vld [vmem:[%s3627 + $0x14] sm:$0xf]
      %v3634 = vld [vmem:[%s3627 + $0x18] sm:$0xf]
      %v3635 = vld [vmem:[%s3627 + $0x1c] sm:$0xf]
      %v3636 = vld [vmem:[%s3627 + $0x20] sm:$0xf]
      %v3637 = vld [vmem:[%s3627 + $0x24] sm:$0xf]
      %v3638 = vld [vmem:[%s3627 + $0x28] sm:$0xf]
      %v3639 = vld [vmem:[%s3627 + $0x2c] sm:$0xf]
      %v3640 = vld [vmem:[%s3627 + $0x30] sm:$0xf]
      %v3641 = vld [vmem:[%s3627 + $0x34] sm:$0xf]
      %v3642 = vld [vmem:[%s3627 + $0x38] sm:$0xf]
      %v3643 = vld [vmem:[%s3627 + $0x3c] sm:$0xf]
      %v3644 = vld [vmem:[%s3627 + $0x40] sm:$0xf]
      %v3645 = vld [vmem:[%s3627 + $0x44] sm:$0xf]
      %v3646 = vld [vmem:[%s3627 + $0x48] sm:$0xf]
      %v3647 = vld [vmem:[%s3627 + $0x4c] sm:$0xf]
      %v3648 = vld [vmem:[%s3627 + $0x50] sm:$0xf]
      %v3649 = vld [vmem:[%s3627 + $0x54] sm:$0xf]
      %v3650 = vld [vmem:[%s3627 + $0x58] sm:$0xf]
      %v3651 = vld [vmem:[%s3627 + $0x5c] sm:$0xf]
      %v3652 = vld [vmem:[%s3627 + $0x60] sm:$0xf]
      %v3653 = vld [vmem:[%s3627 + $0x64] sm:$0xf]
      %v3654 = vld [vmem:[%s3627 + $0x68] sm:$0xf]
      %v3655 = vld [vmem:[%s3627 + $0x6c] sm:$0xf]
      %v3656 = vld [vmem:[%s3627 + $0x70] sm:$0xf]
      %v3657 = vld [vmem:[%s3627 + $0x74] sm:$0xf]
      %v3658 = vld [vmem:[%s3627 + $0x78] sm:$0xf]
      %v3659 = vld [vmem:[%s3627 + $0x7c] sm:$0xf]
      %v3660 = vunpack.c.l.bf16 %v3628
      %v3661 = vunpack.c.l.bf16 %v3629
      %v3662 = vunpack.c.l.bf16 %v3630
      %v3663 = vunpack.c.l.bf16 %v3631
      %v3664 = vunpack.c.l.bf16 %v3632
      %v3665 = vunpack.c.l.bf16 %v3633
      %v3666 = vunpack.c.l.bf16 %v3634
      %v3667 = vunpack.c.l.bf16 %v3635
      %v3668 = vunpack.c.l.bf16 %v3636
      %v3669 = vunpack.c.l.bf16 %v3637
      %v3670 = vunpack.c.l.bf16 %v3638
      %v3671 = vunpack.c.l.bf16 %v3639
      %v3672 = vunpack.c.l.bf16 %v3640
      %v3673 = vunpack.c.l.bf16 %v3641
      %v3674 = vunpack.c.l.bf16 %v3642
      %v3675 = vunpack.c.l.bf16 %v3643
      %v3676 = vunpack.c.l.bf16 %v3644
      %v3677 = vunpack.c.l.bf16 %v3645
      %v3678 = vunpack.c.l.bf16 %v3646
      %v3679 = vunpack.c.l.bf16 %v3647
      %v3680 = vunpack.c.l.bf16 %v3648
      %v3681 = vunpack.c.l.bf16 %v3649
      %v3682 = vunpack.c.l.bf16 %v3650
      %v3683 = vunpack.c.l.bf16 %v3651
      %v3684 = vunpack.c.l.bf16 %v3652
      %v3685 = vunpack.c.l.bf16 %v3653
      %v3686 = vunpack.c.l.bf16 %v3654
      %v3687 = vunpack.c.l.bf16 %v3655
      %v3688 = vunpack.c.l.bf16 %v3656
      %v3689 = vunpack.c.l.bf16 %v3657
      %v3690 = vunpack.c.l.bf16 %v3658
      %v3691 = vunpack.c.l.bf16 %v3659
      %s3692 = scalar_lea.vmem %s179, 7
      %v3693 = vld [vmem:[%s3692] sm:$0x1]
      %v3695 = vlaneseq
      %v3696 = vshrl.u32 %v3695, 7
      %v3697 = vsub.s32 0, %v3696
      %v3698 = vrot.slane %v3693, %v3697
      %v3700 = vmul.f32 %v3660, %v3698
      %v3701 = vmul.f32 %v3661, %v3698
      %v3702 = vmul.f32 %v3662, %v3698
      %v3703 = vmul.f32 %v3663, %v3698
      %v3704 = vmul.f32 %v3664, %v3698
      %v3705 = vmul.f32 %v3665, %v3698
      %v3706 = vmul.f32 %v3666, %v3698
      %v3707 = vmul.f32 %v3667, %v3698
      %v3708 = vmul.f32 %v3668, %v3698
      %v3709 = vmul.f32 %v3669, %v3698
      %v3710 = vmul.f32 %v3670, %v3698
      %v3711 = vmul.f32 %v3671, %v3698
      %v3712 = vmul.f32 %v3672, %v3698
      %v3713 = vmul.f32 %v3673, %v3698
      %v3714 = vmul.f32 %v3674, %v3698
      %v3715 = vmul.f32 %v3675, %v3698
      %v3716 = vmul.f32 %v3676, %v3698
      %v3717 = vmul.f32 %v3677, %v3698
      %v3718 = vmul.f32 %v3678, %v3698
      %v3719 = vmul.f32 %v3679, %v3698
      %v3720 = vmul.f32 %v3680, %v3698
      %v3721 = vmul.f32 %v3681, %v3698
      %v3722 = vmul.f32 %v3682, %v3698
      %v3723 = vmul.f32 %v3683, %v3698
      %v3724 = vmul.f32 %v3684, %v3698
      %v3725 = vmul.f32 %v3685, %v3698
      %v3726 = vmul.f32 %v3686, %v3698
      %v3727 = vmul.f32 %v3687, %v3698
      %v3728 = vmul.f32 %v3688, %v3698
      %v3729 = vmul.f32 %v3689, %v3698
      %v3730 = vmul.f32 %v3690, %v3698
      %v3731 = vmul.f32 %v3691, %v3698
      %v3732 = vadd.f32 %v3595, %v3700
      %v3733 = vadd.f32 %v3596, %v3701
      %v3734 = vadd.f32 %v3597, %v3702
      %v3735 = vadd.f32 %v3598, %v3703
      %v3736 = vadd.f32 %v3599, %v3704
      %v3737 = vadd.f32 %v3600, %v3705
      %v3738 = vadd.f32 %v3601, %v3706
      %v3739 = vadd.f32 %v3602, %v3707
      %v3740 = vadd.f32 %v3603, %v3708
      %v3741 = vadd.f32 %v3604, %v3709
      %v3742 = vadd.f32 %v3605, %v3710
      %v3743 = vadd.f32 %v3606, %v3711
      %v3744 = vadd.f32 %v3607, %v3712
      %v3745 = vadd.f32 %v3608, %v3713
      %v3746 = vadd.f32 %v3609, %v3714
      %v3747 = vadd.f32 %v3610, %v3715
      %v3748 = vadd.f32 %v3611, %v3716
      %v3749 = vadd.f32 %v3612, %v3717
      %v3750 = vadd.f32 %v3613, %v3718
      %v3751 = vadd.f32 %v3614, %v3719
      %v3752 = vadd.f32 %v3615, %v3720
      %v3753 = vadd.f32 %v3616, %v3721
      %v3754 = vadd.f32 %v3617, %v3722
      %v3755 = vadd.f32 %v3618, %v3723
      %v3756 = vadd.f32 %v3619, %v3724
      %v3757 = vadd.f32 %v3620, %v3725
      %v3758 = vadd.f32 %v3621, %v3726
      %v3759 = vadd.f32 %v3622, %v3727
      %v3760 = vadd.f32 %v3623, %v3728
      %v3761 = vadd.f32 %v3624, %v3729
      %v3762 = vadd.f32 %v3625, %v3730
      %v3763 = vadd.f32 %v3626, %v3731
      %vm3764 = vcmp.ge.f32.partialorder %v3732, 0.3
      %vm3765 = vcmp.ge.f32.partialorder %v3733, 0.3
      %vm3766 = vcmp.ge.f32.partialorder %v3734, 0.3
      %vm3767 = vcmp.ge.f32.partialorder %v3735, 0.3
      %vm3768 = vcmp.ge.f32.partialorder %v3736, 0.3
      %vm3769 = vcmp.ge.f32.partialorder %v3737, 0.3
      %vm3770 = vcmp.ge.f32.partialorder %v3738, 0.3
      %vm3771 = vcmp.ge.f32.partialorder %v3739, 0.3
      %vm3772 = vcmp.ge.f32.partialorder %v3740, 0.3
      %vm3773 = vcmp.ge.f32.partialorder %v3741, 0.3
      %vm3774 = vcmp.ge.f32.partialorder %v3742, 0.3
      %vm3775 = vcmp.ge.f32.partialorder %v3743, 0.3
      %vm3776 = vcmp.ge.f32.partialorder %v3744, 0.3
      %vm3777 = vcmp.ge.f32.partialorder %v3745, 0.3
      %vm3778 = vcmp.ge.f32.partialorder %v3746, 0.3
      %vm3779 = vcmp.ge.f32.partialorder %v3747, 0.3
      %vm3780 = vcmp.ge.f32.partialorder %v3748, 0.3
      %vm3781 = vcmp.ge.f32.partialorder %v3749, 0.3
      %vm3782 = vcmp.ge.f32.partialorder %v3750, 0.3
      %vm3783 = vcmp.ge.f32.partialorder %v3751, 0.3
      %vm3784 = vcmp.ge.f32.partialorder %v3752, 0.3
      %vm3785 = vcmp.ge.f32.partialorder %v3753, 0.3
      %vm3786 = vcmp.ge.f32.partialorder %v3754, 0.3
      %vm3787 = vcmp.ge.f32.partialorder %v3755, 0.3
      %vm3788 = vcmp.ge.f32.partialorder %v3756, 0.3
      %vm3789 = vcmp.ge.f32.partialorder %v3757, 0.3
      %vm3790 = vcmp.ge.f32.partialorder %v3758, 0.3
      %vm3791 = vcmp.ge.f32.partialorder %v3759, 0.3
      %vm3792 = vcmp.ge.f32.partialorder %v3760, 0.3
      %vm3793 = vcmp.ge.f32.partialorder %v3761, 0.3
      %vm3794 = vcmp.ge.f32.partialorder %v3762, 0.3
      %vm3795 = vcmp.ge.f32.partialorder %v3763, 0.3
      %v3796 = vsel %vm3764, 1, 0
      %v3797 = vsel %vm3765, 1, 0
      %v3798 = vsel %vm3766, 1, 0
      %v3799 = vsel %vm3767, 1, 0
      %v3800 = vsel %vm3768, 1, 0
      %v3801 = vsel %vm3769, 1, 0
      %v3802 = vsel %vm3770, 1, 0
      %v3803 = vsel %vm3771, 1, 0
      %v3804 = vsel %vm3772, 1, 0
      %v3805 = vsel %vm3773, 1, 0
      %v3806 = vsel %vm3774, 1, 0
      %v3807 = vsel %vm3775, 1, 0
      %v3808 = vsel %vm3776, 1, 0
      %v3809 = vsel %vm3777, 1, 0
      %v3810 = vsel %vm3778, 1, 0
      %v3811 = vsel %vm3779, 1, 0
      %v3812 = vsel %vm3780, 1, 0
      %v3813 = vsel %vm3781, 1, 0
      %v3814 = vsel %vm3782, 1, 0
      %v3815 = vsel %vm3783, 1, 0
      %v3816 = vsel %vm3784, 1, 0
      %v3817 = vsel %vm3785, 1, 0
      %v3818 = vsel %vm3786, 1, 0
      %v3819 = vsel %vm3787, 1, 0
      %v3820 = vsel %vm3788, 1, 0
      %v3821 = vsel %vm3789, 1, 0
      %v3822 = vsel %vm3790, 1, 0
      %v3823 = vsel %vm3791, 1, 0
      %v3824 = vsel %vm3792, 1, 0
      %v3825 = vsel %vm3793, 1, 0
      %v3826 = vsel %vm3794, 1, 0
      %v3827 = vsel %vm3795, 1, 0
      %v3828 = vcvt.s32.f32 %v3796
      %v3829 = vcvt.s32.f32 %v3797
      %v3830 = vcvt.s32.f32 %v3798
      %v3831 = vcvt.s32.f32 %v3799
      %v3832 = vcvt.s32.f32 %v3800
      %v3833 = vcvt.s32.f32 %v3801
      %v3834 = vcvt.s32.f32 %v3802
      %v3835 = vcvt.s32.f32 %v3803
      %v3836 = vcvt.s32.f32 %v3804
      %v3837 = vcvt.s32.f32 %v3805
      %v3838 = vcvt.s32.f32 %v3806
      %v3839 = vcvt.s32.f32 %v3807
      %v3840 = vcvt.s32.f32 %v3808
      %v3841 = vcvt.s32.f32 %v3809
      %v3842 = vcvt.s32.f32 %v3810
      %v3843 = vcvt.s32.f32 %v3811
      %v3844 = vcvt.s32.f32 %v3812
      %v3845 = vcvt.s32.f32 %v3813
      %v3846 = vcvt.s32.f32 %v3814
      %v3847 = vcvt.s32.f32 %v3815
      %v3848 = vcvt.s32.f32 %v3816
      %v3849 = vcvt.s32.f32 %v3817
      %v3850 = vcvt.s32.f32 %v3818
      %v3851 = vcvt.s32.f32 %v3819
      %v3852 = vcvt.s32.f32 %v3820
      %v3853 = vcvt.s32.f32 %v3821
      %v3854 = vcvt.s32.f32 %v3822
      %v3855 = vcvt.s32.f32 %v3823
      %v3856 = vcvt.s32.f32 %v3824
      %v3857 = vcvt.s32.f32 %v3825
      %v3858 = vcvt.s32.f32 %v3826
      %v3859 = vcvt.s32.f32 %v3827
      %v3860 = vpack.c.bf16 %v3829, %v3828
      %v3861 = vpack.c.bf16 %v3831, %v3830
      %v3862 = vpack.c.bf16 %v3833, %v3832
      %v3863 = vpack.c.bf16 %v3835, %v3834
      %v3864 = vpack.c.bf16 %v3837, %v3836
      %v3865 = vpack.c.bf16 %v3839, %v3838
      %v3866 = vpack.c.bf16 %v3841, %v3840
      %v3867 = vpack.c.bf16 %v3843, %v3842
      %v3868 = vpack.c.bf16 %v3845, %v3844
      %v3869 = vpack.c.bf16 %v3847, %v3846
      %v3870 = vpack.c.bf16 %v3849, %v3848
      %v3871 = vpack.c.bf16 %v3851, %v3850
      %v3872 = vpack.c.bf16 %v3853, %v3852
      %v3873 = vpack.c.bf16 %v3855, %v3854
      %v3874 = vpack.c.bf16 %v3857, %v3856
      %v3875 = vpack.c.bf16 %v3859, %v3858
      %v3892 = vunpack.c.l.b16 %v3860
      %v3893 = vunpack.c.h.b16 %v3860
      %v3894 = vunpack.c.l.b16 %v3861
      %v3895 = vunpack.c.h.b16 %v3861
      %v3896 = vunpack.c.l.b16 %v3862
      %v3897 = vunpack.c.h.b16 %v3862
      %v3898 = vunpack.c.l.b16 %v3863
      %v3899 = vunpack.c.h.b16 %v3863
      %v3900 = vunpack.c.l.b16 %v3864
      %v3901 = vunpack.c.h.b16 %v3864
      %v3902 = vunpack.c.l.b16 %v3865
      %v3903 = vunpack.c.h.b16 %v3865
      %v3904 = vunpack.c.l.b16 %v3866
      %v3905 = vunpack.c.h.b16 %v3866
      %v3906 = vunpack.c.l.b16 %v3867
      %v3907 = vunpack.c.h.b16 %v3867
      %v3908 = vunpack.c.l.b16 %v3868
      %v3909 = vunpack.c.h.b16 %v3868
      %v3910 = vunpack.c.l.b16 %v3869
      %v3911 = vunpack.c.h.b16 %v3869
      %v3912 = vunpack.c.l.b16 %v3870
      %v3913 = vunpack.c.h.b16 %v3870
      %v3914 = vunpack.c.l.b16 %v3871
      %v3915 = vunpack.c.h.b16 %v3871
      %v3916 = vunpack.c.l.b16 %v3872
      %v3917 = vunpack.c.h.b16 %v3872
      %v3918 = vunpack.c.l.b16 %v3873
      %v3919 = vunpack.c.h.b16 %v3873
      %v3920 = vunpack.c.l.b16 %v3874
      %v3921 = vunpack.c.h.b16 %v3874
      %v3922 = vunpack.c.l.b16 %v3875
      %v3923 = vunpack.c.h.b16 %v3875
      %v3924 = vpack.c.b16 %v3892, %v3892
      %v3925 = vpack.c.b16 %v3893, %v3893
      %v3926 = vpack.c.b16 %v3894, %v3894
      %v3927 = vpack.c.b16 %v3895, %v3895
      %v3928 = vpack.c.b16 %v3896, %v3896
      %v3929 = vpack.c.b16 %v3897, %v3897
      %v3930 = vpack.c.b16 %v3898, %v3898
      %v3931 = vpack.c.b16 %v3899, %v3899
      %v3932 = vpack.c.b16 %v3900, %v3900
      %v3933 = vpack.c.b16 %v3901, %v3901
      %v3934 = vpack.c.b16 %v3902, %v3902
      %v3935 = vpack.c.b16 %v3903, %v3903
      %v3936 = vpack.c.b16 %v3904, %v3904
      %v3937 = vpack.c.b16 %v3905, %v3905
      %v3938 = vpack.c.b16 %v3906, %v3906
      %v3939 = vpack.c.b16 %v3907, %v3907
      %v3940 = vpack.c.b16 %v3908, %v3908
      %v3941 = vpack.c.b16 %v3909, %v3909
      %v3942 = vpack.c.b16 %v3910, %v3910
      %v3943 = vpack.c.b16 %v3911, %v3911
      %v3944 = vpack.c.b16 %v3912, %v3912
      %v3945 = vpack.c.b16 %v3913, %v3913
      %v3946 = vpack.c.b16 %v3914, %v3914
      %v3947 = vpack.c.b16 %v3915, %v3915
      %v3948 = vpack.c.b16 %v3916, %v3916
      %v3949 = vpack.c.b16 %v3917, %v3917
      %v3950 = vpack.c.b16 %v3918, %v3918
      %v3951 = vpack.c.b16 %v3919, %v3919
      %v3952 = vpack.c.b16 %v3920, %v3920
      %v3953 = vpack.c.b16 %v3921, %v3921
      %v3954 = vpack.c.b16 %v3922, %v3922
      %v3955 = vpack.c.b16 %v3923, %v3923
      %s3988 = scalar_lea.vmem %s198, 896
      %3989 = vst [vmem:[%s3988] sm:$0xf] %v3924
      %3990 = vst [vmem:[%s3988 + $0x4] sm:$0xf] %v3925
      %3991 = vst [vmem:[%s3988 + $0x8] sm:$0xf] %v3926
      %3992 = vst [vmem:[%s3988 + $0xc] sm:$0xf] %v3927
      %3993 = vst [vmem:[%s3988 + $0x10] sm:$0xf] %v3928
      %3994 = vst [vmem:[%s3988 + $0x14] sm:$0xf] %v3929
      %3995 = vst [vmem:[%s3988 + $0x18] sm:$0xf] %v3930
      %3996 = vst [vmem:[%s3988 + $0x1c] sm:$0xf] %v3931
      %3997 = vst [vmem:[%s3988 + $0x20] sm:$0xf] %v3932
      %3998 = vst [vmem:[%s3988 + $0x24] sm:$0xf] %v3933
      %3999 = vst [vmem:[%s3988 + $0x28] sm:$0xf] %v3934
      %4000 = vst [vmem:[%s3988 + $0x2c] sm:$0xf] %v3935
      %4001 = vst [vmem:[%s3988 + $0x30] sm:$0xf] %v3936
      %4002 = vst [vmem:[%s3988 + $0x34] sm:$0xf] %v3937
      %4003 = vst [vmem:[%s3988 + $0x38] sm:$0xf] %v3938
      %4004 = vst [vmem:[%s3988 + $0x3c] sm:$0xf] %v3939
      %4005 = vst [vmem:[%s3988 + $0x40] sm:$0xf] %v3940
      %4006 = vst [vmem:[%s3988 + $0x44] sm:$0xf] %v3941
      %4007 = vst [vmem:[%s3988 + $0x48] sm:$0xf] %v3942
      %4008 = vst [vmem:[%s3988 + $0x4c] sm:$0xf] %v3943
      %4009 = vst [vmem:[%s3988 + $0x50] sm:$0xf] %v3944
      %4010 = vst [vmem:[%s3988 + $0x54] sm:$0xf] %v3945
      %4011 = vst [vmem:[%s3988 + $0x58] sm:$0xf] %v3946
      %4012 = vst [vmem:[%s3988 + $0x5c] sm:$0xf] %v3947
      %4013 = vst [vmem:[%s3988 + $0x60] sm:$0xf] %v3948
      %4014 = vst [vmem:[%s3988 + $0x64] sm:$0xf] %v3949
      %4015 = vst [vmem:[%s3988 + $0x68] sm:$0xf] %v3950
      %4016 = vst [vmem:[%s3988 + $0x6c] sm:$0xf] %v3951
      %4017 = vst [vmem:[%s3988 + $0x70] sm:$0xf] %v3952
      %4018 = vst [vmem:[%s3988 + $0x74] sm:$0xf] %v3953
      %4019 = vst [vmem:[%s3988 + $0x78] sm:$0xf] %v3954
      %4020 = vst [vmem:[%s3988 + $0x7c] sm:$0xf] %v3955
      %s4021 = smul.u32 32, %s18
      %p4022 = scmp.lt.s32.totalorder %s17, 1
      %s4023 = scalar_select %p4022, %s17, 1
      %p4024 = scmp.lt.s32.totalorder %s4021, 31
      %s4025 = scalar_select %p4024, %s4021, 31
      %s4026 = smul.addr %s4023, 256
      %s4027 = sadd.s32 %s4025, %s4026
      %s4028 = smul.addr %s4027, 4
      %s4029 = scalar_lea.vmem %s2, %s4028
      // Predicated region
      $region29: #{conv_att_lif_forward.3} parent=27 // pred_check
        %p4030 = pneg %p99
      $region30: #{conv_att_lif_forward.3} parent=27 // pred_check_branch
        %4032 = sbr.rel (%p4030) target = $region32
      $region31: #{conv_att_lif_forward.3} parent=27 // pred_region
        %s4033 = smul.u32 32, %s18
      $region32: #{conv_att_lif_forward.3} parent=27 // pred_fallthru
        _
    $region28: #{conv_att_lif_forward.3} parent=5 // pred_fallthru
      _
    %p4034 = scmp.le.s32.totalorder 2, %s8
    // Predicated region
    $region33: #{conv_att_lif_forward.3} parent=5 // pred_check
      %p4035 = pneg %p4034
    $region34: #{conv_att_lif_forward.3} parent=5 // pred_check_branch
      %4037 = sbr.rel (%p4035) target = $region36
    $region35: #{conv_att_lif_forward.3} parent=5 // pred_region
      %s4038 = ssub.s32 %s8, 2
      // Predicated region
      $region37: #{conv_att_lif_forward.3} parent=35 // pred_check
        %p4039 = pneg %p105
      $region38: #{conv_att_lif_forward.3} parent=35 // pred_check_branch
        %4041 = sbr.rel (%p4039) target = $region40
      $region39: #{conv_att_lif_forward.3} parent=35 // pred_region
        %s4042 = smul.u32 32, %s20
        %p4043 = scmp.lt.s32.totalorder %s19, 1
        %s4044 = scalar_select %p4043, %s19, 1
        %p4045 = scmp.lt.s32.totalorder %s4042, 31
        %s4046 = scalar_select %p4045, %s4042, 31
        %s4047 = smul.addr %s4044, 256
        %s4048 = sadd.s32 %s4046, %s4047
        %s4049 = smul.addr %s4048, 4
        %s4050 = scalar_lea.vmem %s2, %s4049
      $region40: #{conv_att_lif_forward.3} parent=35 // pred_fallthru
        _
    $region36: #{conv_att_lif_forward.3} parent=5 // pred_fallthru
      _
  $region6: #{conv_att_lif_forward.3} parent=0 // loop_footer
    %s12 = sadd.s32 1, %s8
  $region7: #{conv_att_lif_forward.3} parent=0 // loop_footer_branch
    %7 = sbr.rel target = $region3
  $region8: #{conv_att_lif_forward.3} parent=0 // loop_exit
    _

</llo_original>
